<compile_context>
chip_gen: v6e
topology: v6e:2x2x1
jax: 0.10.0
libtpu: 0.0.40
codegen_flags: <defaults>
</compile_context>

<pallas_src>
import functools

import jax
import jax.numpy as jnp
from jax.experimental import pallas as pl
from jax.experimental.pallas import tpu as pltpu

# DRAM surrogate polynomial coefficients (from the autograd.Function forward).
C_COEF = (0.17393044, 0.15653739, 0.14088365, 0.12679529,
          5.51975209, 4.96777688, 4.4709992, -1.44776001,
          -1.30298401, 46.05483778)
X_MAX = 0.9
OFFSET = 0.45
NONLINEAR_AMP = 19.3
ATT_SCORE_SCALE = 1.0 / 80.0     # att_score_scaler (a=1/80, b=0)
WEIGHT_AVG_SCALE = 1.0 / 40.0    # weight_average_scaler


def _basis_scales():
    # Collapse the (i, j) double loop: sum_j c[idx(i,j)] * x_max**j for each power i.
    max_order = int((2 * len(C_COEF)) ** 0.5 - 1)   # = 3
    s = [0.0] * (max_order + 1)
    idx = 0
    for i in range(max_order + 1):
        for j in range(max_order - i + 1):
            s[i] += C_COEF[idx] * (X_MAX ** j)
            idx += 1
    return tuple(s)


# ---------------------------------------------------------------------------
# Fused DRAMAttention kernel (c_attn + DRAM QK/AV surrogate + c_proj)
# ---------------------------------------------------------------------------
def _dram_attn_fused_kernel(x_ref, wa_ref, ba_ref, cs_ref, wp_ref, bp_ref, o_ref, *,
                            n_head, head_dim, array_len, window, decay, basis):
    T = x_ref.shape[1]
    H, D, L = n_head, head_dim, array_len
    C = H * D
    n_tiles = T // L
    f32, bf16 = jnp.float32, jnp.bfloat16
    s_av = tuple(b * WEIGHT_AVG_SCALE for b in basis)   # fold 1/40 into the V powers

    # ---- fused c_attn (weights resident in VMEM; bf16 MXU operands, f32 accumulate)
    x = x_ref[0]                                                        # (T, C)
    qkv = jnp.dot(x.astype(bf16), wa_ref[...].astype(bf16),
                  preferred_element_type=f32) + ba_ref[...]             # (T, 3C)

    # range_scaler + clamp on full (T, C) slabs; OFFSET folded into k/v bias & bounds.
    cs = cs_ref[...]                                                    # (8, C)
    q = jnp.clip(cs[0:1] * qkv[:, 0:C] + cs[1:2], 0.0, 1.0)
    k = jnp.clip(cs[2:3] * qkv[:, C:2 * C] + cs[3:4], -OFFSET, X_MAX - OFFSET)
    v = jnp.clip(cs[4:5] * qkv[:, 2 * C:3 * C] + cs[5:6], -OFFSET, X_MAX - OFFSET)

    # ---- head-major stacks, built ONCE per batch step; all later per-head work is a
    #      batched einsum over the leading head axis (no per-head slicing in hot loops).
    def to_heads(t):
        return jnp.stack([t[:, h * D:(h + 1) * D] for h in range(H)], axis=0)  # (H,T,D)
    qh, kh, vh = to_heads(q), to_heads(k), to_heads(v)

    # degree stacks (head-invariant w.r.t. the attention loops; hoisted, no head loop).
    k2 = kh * kh
    k_cat = jnp.concatenate([jnp.ones_like(kh), kh, k2, k2 * kh], axis=1)   # (H, 4T, D)
    v2 = vh * vh
    vpows = (jnp.full_like(vh, s_av[0]), s_av[1] * vh,
             s_av[2] * v2, s_av[3] * (v2 * vh))                             # 4 x (H,T,D)

    # ---- window / decay masks generated in-kernel (no O(T^2) HBM inputs).
    ii = jax.lax.broadcasted_iota(jnp.int32, (T, T), 0)
    jj = jax.lax.broadcasted_iota(jnp.int32, (T, T), 1)
    wm = ((jj <= ii) & (jj >= ii - (window - 1))).astype(f32)
    expo = (jnp.clip(ii - jj + 1, 0, window) - 1).astype(f32)   # == cumsum(wm,0) - 1
    dm = jnp.exp(-decay * expo)
    dm2 = dm * dm
    dm3 = dm2 * dm
    wms = wm * ATT_SCORE_SCALE
    w_cat = jnp.concatenate([basis[0] * wms, basis[1] * dm * wms,
                             basis[2] * dm2 * wms, basis[3] * dm3 * wms],
                            axis=1)                                         # (T, 4T)

    # ---- DRAM QK surrogate: ONE batched MXU op over all heads and all 4 degrees.
    qk = jnp.einsum('hqd,hkd->hqk', qh.astype(bf16), k_cat.astype(bf16),
                    preferred_element_type=f32)                             # (H, T, 4T)
    qkw = qk * w_cat[None]
    att = (qkw[:, :, 0:T] + qkw[:, :, T:2 * T] +
           qkw[:, :, 2 * T:3 * T] + qkw[:, :, 3 * T:4 * T])
    att = jnp.clip(att, 0.0, 1.0)                                           # (H, T, T)

    # ---- tiled DRAM AV surrogate (per-array_len-tile clamp is part of the surrogate).
    dpows = (jnp.ones_like(dm), dm, dm2, dm3)
    acc = jnp.zeros((H, T, D), f32)
    for t in range(n_tiles):
        lo = t * L
        a_t = att[:, :, lo:lo + L]                                          # (H, T, L)
        d_cat = jnp.concatenate([p[:, lo:lo + L] for p in dpows], axis=1)   # (T, 4L)
        x_cat = jnp.concatenate([a_t] * 4, axis=2) * d_cat[None]            # (H, T, 4L)
        v_stk = jnp.concatenate([p[:, lo:lo + L, :] for p in vpows],
                                axis=1)                                     # (H, 4L, D)
        ot = jnp.einsum('hqk,hkd->hqd', x_cat.astype(bf16), v_stk.astype(bf16),
                        preferred_element_type=f32)                         # (H, T, D)
        acc = acc + jnp.clip(ot, -1.0, 1.0)

    # ---- merge heads, per-column output scaler, fused c_proj, single (T, C) store.
    y = jnp.concatenate([acc[h] for h in range(H)], axis=1)                 # (T, C)
    y = cs[6:7] * y + cs[7:8]
    out = jnp.dot(y.astype(bf16), wp_ref[...].astype(bf16),
                  preferred_element_type=f32) + bp_ref[...]
    o_ref[0] = out.astype(o_ref.dtype)


def dram_attention_forward(x, params):
    """Full fused forward: x (B, T, C) -> (B, T, C) in a single pallas_call."""
    B, T, C = x.shape
    H = params['n_head']
    D = C // H
    L = params['array_len']
    assert T % L == 0   # avoid the zero-padding branch of the module

    kernel = functools.partial(
        _dram_attn_fused_kernel, n_head=H, head_dim=D, array_len=L,
        window=int(params['sliding_window_size']), decay=float(params['decay_factor']),
        basis=_basis_scales())

    return pl.pallas_call(
        kernel,
        out_shape=jax.ShapeDtypeStruct((B, T, C), jnp.float32),
        grid=(B,),
        in_specs=[
            pl.BlockSpec((1, T, C), lambda b: (b, 0, 0)),        # x (per batch step)
            pl.BlockSpec((C, 3 * C), lambda b: (0, 0)),          # w_attn   (resident)
            pl.BlockSpec((1, 3 * C), lambda b: (0, 0)),          # b_attn   (resident)
            pl.BlockSpec((8, C), lambda b: (0, 0)),              # per-column scalers
            pl.BlockSpec((C, C), lambda b: (0, 0)),              # w_proj   (resident)
            pl.BlockSpec((1, C), lambda b: (0, 0)),              # b_proj   (resident)
        ],
        out_specs=pl.BlockSpec((1, T, C), lambda b: (b, 0, 0)),
        compiler_params=pltpu.CompilerParams(
            dimension_semantics=("parallel",)),
    )(x, params['w_attn'], params['b_attn'].reshape(1, 3 * C), params['col_scales'],
      params['w_proj'], params['b_proj'].reshape(1, C))


# ---------------------------------------------------------------------------
# ReadNoise (eval mode): torchaudio.functional.add_noise at per-sample SNR
# ---------------------------------------------------------------------------
def _read_noise_kernel(x_ref, n_ref, amp_ref, o_ref):
    x = x_ref[...]
    n = n_ref[...]
    es = jnp.sum(x * x, axis=-1, keepdims=True)     # signal energy per last dim
    en = jnp.sum(n * n, axis=-1, keepdims=True)     # noise energy per last dim
    scale = jnp.sqrt(es / en) * amp_ref[...]        # amp = 10**(-snr_db/20)
    o_ref[...] = (x + scale * n).astype(o_ref.dtype)


def read_noise_add(x, noise, snr_db):
    """x, noise: (B, H, T, F); snr_db: (B, H, T).  The torch.randperm sample/feature
    shuffles of the noise buffer are host-side randomness in the module and are done
    by the caller (jax.random.permutation) before this kernel."""
    B, H, T, F = x.shape
    inv_amp = (10.0 ** (-snr_db / 20.0))[..., None].astype(jnp.float32)   # (B, H, T, 1)
    return pl.pallas_call(
        _read_noise_kernel,
        out_shape=jax.ShapeDtypeStruct(x.shape, jnp.float32),
        grid=(B,),
        in_specs=[
            pl.BlockSpec((1, H, T, F), lambda b: (b, 0, 0, 0)),
            pl.BlockSpec((1, H, T, F), lambda b: (b, 0, 0, 0)),
            pl.BlockSpec((1, H, T, 1), lambda b: (b, 0, 0, 0)),
        ],
        out_specs=pl.BlockSpec((1, H, T, F), lambda b: (b, 0, 0, 0)),
        compiler_params=pltpu.CompilerParams(
            dimension_semantics=("parallel",)),
    )(x, noise, inv_amp)


def _read_noise_reference(x, noise, snr_db):
    es = jnp.sum(x * x, axis=-1)
    en = jnp.sum(noise * noise, axis=-1)
    original_snr_db = 10.0 * (jnp.log10(es) - jnp.log10(en))
    scale = 10.0 ** ((original_snr_db - snr_db) / 20.0)
    return x + scale[..., None] * noise


# ---------------------------------------------------------------------------
# Parameter init
# ---------------------------------------------------------------------------
def init_params(key, *, n_embd, n_head, block_size, sliding_window_size,
                decay_factor, array_len):
    C = n_embd
    D = C // n_head
    k1, k2, k3, k4 = jax.random.split(key, 4)
    w_attn = 0.02 * jax.random.normal(k1, (C, 3 * C), jnp.float32)   # c_attn weight
    b_attn = 0.02 * jax.random.normal(k2, (3 * C,), jnp.float32)     # c_attn bias
    w_proj = 0.02 * jax.random.normal(k3, (C, C), jnp.float32)       # c_proj weight
    b_proj = 0.02 * jax.random.normal(k4, (C,), jnp.float32)         # c_proj bias

    # Per-head range_scaler parameters at their deterministic __init__ values, expanded
    # to per-column vectors so the kernel applies them on (T, C) slabs.  The DRAM OFFSET
    # is folded into the k / v bias rows (valid while a_k = a_v = 1, as here).
    ones = jnp.ones((n_head,), jnp.float32)
    zeros = jnp.zeros((n_head,), jnp.float32)
    per_head = jnp.stack([
        ones, zeros,                              # a_q, b_q
        ones, 0.45 * ones - OFFSET,               # a_k, b_k - OFFSET
        ones, 0.45 * ones - OFFSET,               # a_v, b_v - OFFSET
        ones / NONLINEAR_AMP, zeros,              # a_out, b_out
    ], axis=0)                                    # (8, H)
    col_scales = jnp.repeat(per_head, D, axis=1)  # (8, C)

    # Masks kept only for the plain-JAX reference; the kernel generates them from iota.
    T = block_size
    i = jnp.arange(T)[:, None]
    j = jnp.arange(T)[None, :]
    wm = ((j <= i) & (j >= i - sliding_window_size + 1)).astype(jnp.float32)
    dm = jnp.exp(-decay_factor) ** (jnp.cumsum(wm, axis=0) - 1.0)

    return dict(w_attn=w_attn, b_attn=b_attn, w_proj=w_proj, b_proj=b_proj,
                col_scales=col_scales, window_mask=wm, decay_mask=dm,
                n_head=n_head, array_len=array_len,
                sliding_window_size=sliding_window_size, decay_factor=decay_factor)


# ---------------------------------------------------------------------------
# Plain-JAX reference (original, un-fused ordering) for the correctness check
# ---------------------------------------------------------------------------
def _reference_forward(x, params):
    B, T, C = x.shape
    H = params['n_head']; D = C // H; L = params['array_len']
    basis = _basis_scales()
    dm = params['decay_mask']; wm = params['window_mask']

    qkv = x.reshape(B * T, C) @ params['w_attn'] + params['b_attn']
    qkv = qkv.reshape(B, T, 3 * C)
    q, k, v = jnp.split(qkv, 3, axis=2)

    def heads(t):
        return t.reshape(B, T, H, D).transpose(0, 2, 1, 3)   # (B, H, T, D)
    q, k, v = heads(q), heads(k), heads(v)

    outs = []
    for b in range(B):
        per_head = []
        for h in range(H):
            qh = jnp.clip(q[b, h], 0.0, 1.0)
            kh = jnp.clip(k[b, h] + 0.45, 0.0, 0.9) - OFFSET
            vh = jnp.clip(v[b, h] + 0.45, 0.0, 0.9) - OFFSET
            att = jnp.zeros((T, T), jnp.float32)
            for p in range(len(basis)):
                att = att + basis[p] * (qh @ (kh ** p).T) * (dm ** p)
            att = att * wm * ATT_SCORE_SCALE * wm
            att = jnp.clip(att, 0.0, 1.0)
            acc = jnp.zeros((T, D), jnp.float32)
            for t0 in range(T // L):
                lo = t0 * L
                xt, dmt, vt = att[:, lo:lo + L], dm[:, lo:lo + L], vh[lo:lo + L]
                ot = jnp.zeros((T, D), jnp.float32)
                for p in range(len(basis)):
                    ot = ot + basis[p] * ((xt * dmt ** p) @ (vt ** p))
                acc = acc + jnp.clip(ot * WEIGHT_AVG_SCALE, -1.0, 1.0)
            per_head.append(acc / NONLINEAR_AMP)
        outs.append(jnp.stack(per_head, axis=0).transpose(1, 0, 2).reshape(T, C))
    y = jnp.stack(outs, axis=0)
    y = y.reshape(B * T, C) @ params['w_proj'] + params['b_proj']
    return y.reshape(B, T, C)


if __name__ == "__main__":
    B, T, C, H = 2, 64, 64, 4          # block_size = T = 64, head_dim = 16
    key = jax.random.PRNGKey(0)
    key_params, key_x, key_noise, key_scores, key_perm = jax.random.split(key, 5)

    # ---------------- fused DRAMAttention forward ----------------
    params = init_params(key_params, n_embd=C, n_head=H, block_size=T,
                         sliding_window_size=16, decay_factor=0.1, array_len=32)
    x = jax.random.normal(key_x, (B, T, C), jnp.float32)

    y = jax.block_until_ready(dram_attention_forward(x, params))
    assert y.shape == (B, T, C)
    assert bool(jnp.all(jnp.isfinite(y)))

    with jax.default_matmul_precision("float32"):
        y_ref = _reference_forward(x, params)
    max_err = float(jnp.max(jnp.abs(y - y_ref)))
    assert max_err < 2e-3, max_err

    # ---------------- ReadNoise (eval mode) kernel ----------------
    n_buf = 4                                        # noise buffer "n_samples"
    scores = 0.1 * jax.random.normal(key_scores, (B, H, T, T), jnp.float32)
    noise_buf = jax.random.normal(key_noise, (n_buf, H, T, T), jnp.float32)
    snr_db = 10.0 * jnp.log10(1.0 / 0.1) * jnp.ones((n_buf, H, T), jnp.float32)

    kb, kf = jax.random.split(key_perm)
    samp = jax.random.permutation(kb, n_buf)[:B]         # torch.randperm(n_samples)[:B]
    feat = jax.random.permutation(kf, T)                 # torch.randperm(n_features)
    noise = noise_buf[samp][:, :, :, feat]

    z = jax.block_until_ready(read_noise_add(scores, noise, snr_db[:B]))
    z_ref = _read_noise_reference(scores, noise, snr_db[:B])
    noise_err = float(jnp.max(jnp.abs(z - z_ref)))
    assert z.shape == (B, H, T, T)
    assert bool(jnp.all(jnp.isfinite(z)))
    assert noise_err < 1e-4, noise_err

    print("KERNEL_OK")
</pallas_src>

<mosaic_0001>
module attributes {stable_mosaic.version = 11 : i64} {
  func.func @_dram_attn_fused_kernel(%arg0: i32, %arg1: memref<1x64x64xf32, #tpu.memory_space<vmem>>, %arg2: memref<64x192xf32, #tpu.memory_space<vmem>>, %arg3: memref<1x192xf32, #tpu.memory_space<vmem>>, %arg4: memref<8x64xf32, #tpu.memory_space<vmem>>, %arg5: memref<64x64xf32, #tpu.memory_space<vmem>>, %arg6: memref<1x64xf32, #tpu.memory_space<vmem>>, %arg7: memref<1x64x64xf32, #tpu.memory_space<vmem>>) attributes {dimension_semantics = [#tpu.dimension_semantics<parallel>], iteration_bounds = array<i64: 2>, scalar_prefetch = 0 : i64, scratch_operands = 0 : i64, tpu.core_type = #tpu.core_type<tc>, window_params = [{transform_indices = @transform_0, window_bounds = array<i64: 1, 64, 64>}, {pipeline_mode = #tpu.pipeline_mode<synchronous>, transform_indices = @transform_1, window_bounds = array<i64: 64, 192>}, {pipeline_mode = #tpu.pipeline_mode<synchronous>, transform_indices = @transform_2, window_bounds = array<i64: 1, 192>}, {pipeline_mode = #tpu.pipeline_mode<synchronous>, transform_indices = @transform_3, window_bounds = array<i64: 8, 64>}, {pipeline_mode = #tpu.pipeline_mode<synchronous>, transform_indices = @transform_4, window_bounds = array<i64: 64, 64>}, {pipeline_mode = #tpu.pipeline_mode<synchronous>, transform_indices = @transform_5, window_bounds = array<i64: 1, 64>}, {transform_indices = @transform_6, window_bounds = array<i64: 1, 64, 64>}]} {
    %c0 = arith.constant 0 : index
    %c0_0 = arith.constant 0 : index
    %c0_1 = arith.constant 0 : index
    %0 = vector.load %arg1[%c0, %c0_0, %c0_1] : memref<1x64x64xf32, #tpu.memory_space<vmem>>, vector<1x64x64xf32>
    %1 = vector.shape_cast %0 : vector<1x64x64xf32> to vector<64x64xf32>
    %2 = arith.truncf %1 : vector<64x64xf32> to vector<64x64xbf16>
    %c0_2 = arith.constant 0 : index
    %c0_3 = arith.constant 0 : index
    %3 = vector.load %arg2[%c0_2, %c0_3] : memref<64x192xf32, #tpu.memory_space<vmem>>, vector<64x192xf32>
    %4 = arith.truncf %3 : vector<64x192xf32> to vector<64x192xbf16>
    %cst = arith.constant dense<0.000000e+00> : vector<64x192xf32>
    %5 = tpu.matmul %2, %4, %cst {dimension_numbers = #tpu.dot_dimension_numbers<[1], [0], [0], [1], [0, 0, 1, 1], [], []>} : vector<64x64xbf16>, vector<64x192xbf16>, vector<64x192xf32> -> vector<64x192xf32>
    %c0_4 = arith.constant 0 : index
    %c0_5 = arith.constant 0 : index
    %6 = vector.load %arg3[%c0_4, %c0_5] : memref<1x192xf32, #tpu.memory_space<vmem>>, vector<1x192xf32>
    %7 = vector.broadcast %6 : vector<1x192xf32> to vector<64x192xf32>
    %8 = arith.addf %5, %7 : vector<64x192xf32>
    %c0_6 = arith.constant 0 : index
    %c0_7 = arith.constant 0 : index
    %9 = vector.load %arg4[%c0_6, %c0_7] : memref<8x64xf32, #tpu.memory_space<vmem>>, vector<8x64xf32>
    %10 = vector.extract_strided_slice %9 {offsets = [0, 0], sizes = [1, 64], strides = [1, 1]} : vector<8x64xf32> to vector<1x64xf32>
    %11 = vector.extract_strided_slice %8 {offsets = [0, 0], sizes = [64, 64], strides = [1, 1]} : vector<64x192xf32> to vector<64x64xf32>
    %12 = vector.broadcast %10 : vector<1x64xf32> to vector<64x64xf32>
    %13 = arith.mulf %12, %11 : vector<64x64xf32>
    %14 = vector.extract_strided_slice %9 {offsets = [1, 0], sizes = [1, 64], strides = [1, 1]} : vector<8x64xf32> to vector<1x64xf32>
    %15 = vector.broadcast %14 : vector<1x64xf32> to vector<64x64xf32>
    %16 = arith.addf %13, %15 : vector<64x64xf32>
    %cst_8 = arith.constant 0.000000e+00 : f32
    %cst_9 = arith.constant 1.000000e+00 : f32
    %17 = vector.broadcast %cst_8 : f32 to vector<64x64xf32>
    %18 = arith.maximumf %17, %16 : vector<64x64xf32>
    %19 = vector.broadcast %cst_9 : f32 to vector<64x64xf32>
    %20 = arith.minimumf %19, %18 : vector<64x64xf32>
    %21 = vector.extract_strided_slice %9 {offsets = [2, 0], sizes = [1, 64], strides = [1, 1]} : vector<8x64xf32> to vector<1x64xf32>
    %22 = vector.extract_strided_slice %8 {offsets = [0, 64], sizes = [64, 64], strides = [1, 1]} : vector<64x192xf32> to vector<64x64xf32>
    %23 = vector.broadcast %21 : vector<1x64xf32> to vector<64x64xf32>
    %24 = arith.mulf %23, %22 : vector<64x64xf32>
    %25 = vector.extract_strided_slice %9 {offsets = [3, 0], sizes = [1, 64], strides = [1, 1]} : vector<8x64xf32> to vector<1x64xf32>
    %26 = vector.broadcast %25 : vector<1x64xf32> to vector<64x64xf32>
    %27 = arith.addf %24, %26 : vector<64x64xf32>
    %cst_10 = arith.constant -4.500000e-01 : f32
    %cst_11 = arith.constant 4.500000e-01 : f32
    %28 = vector.broadcast %cst_10 : f32 to vector<64x64xf32>
    %29 = arith.maximumf %28, %27 : vector<64x64xf32>
    %30 = vector.broadcast %cst_11 : f32 to vector<64x64xf32>
    %31 = arith.minimumf %30, %29 : vector<64x64xf32>
    %32 = vector.extract_strided_slice %9 {offsets = [4, 0], sizes = [1, 64], strides = [1, 1]} : vector<8x64xf32> to vector<1x64xf32>
    %33 = vector.extract_strided_slice %8 {offsets = [0, 128], sizes = [64, 64], strides = [1, 1]} : vector<64x192xf32> to vector<64x64xf32>
    %34 = vector.broadcast %32 : vector<1x64xf32> to vector<64x64xf32>
    %35 = arith.mulf %34, %33 : vector<64x64xf32>
    %36 = vector.extract_strided_slice %9 {offsets = [5, 0], sizes = [1, 64], strides = [1, 1]} : vector<8x64xf32> to vector<1x64xf32>
    %37 = vector.broadcast %36 : vector<1x64xf32> to vector<64x64xf32>
    %38 = arith.addf %35, %37 : vector<64x64xf32>
    %cst_12 = arith.constant -4.500000e-01 : f32
    %cst_13 = arith.constant 4.500000e-01 : f32
    %39 = vector.broadcast %cst_12 : f32 to vector<64x64xf32>
    %40 = arith.maximumf %39, %38 : vector<64x64xf32>
    %41 = vector.broadcast %cst_13 : f32 to vector<64x64xf32>
    %42 = arith.minimumf %41, %40 : vector<64x64xf32>
    %43 = vector.extract_strided_slice %20 {offsets = [0, 0], sizes = [64, 16], strides = [1, 1]} : vector<64x64xf32> to vector<64x16xf32>
    %44 = vector.extract_strided_slice %20 {offsets = [0, 16], sizes = [64, 16], strides = [1, 1]} : vector<64x64xf32> to vector<64x16xf32>
    %45 = vector.extract_strided_slice %20 {offsets = [0, 32], sizes = [64, 16], strides = [1, 1]} : vector<64x64xf32> to vector<64x16xf32>
    %46 = vector.extract_strided_slice %20 {offsets = [0, 48], sizes = [64, 16], strides = [1, 1]} : vector<64x64xf32> to vector<64x16xf32>
    %47 = vector.shape_cast %43 : vector<64x16xf32> to vector<1x64x16xf32>
    %48 = vector.shape_cast %44 : vector<64x16xf32> to vector<1x64x16xf32>
    %49 = vector.shape_cast %45 : vector<64x16xf32> to vector<1x64x16xf32>
    %50 = vector.shape_cast %46 : vector<64x16xf32> to vector<1x64x16xf32>
    %51 = tpu.concatenate %47, %48, %49, %50 in 0 : vector<1x64x16xf32>, vector<1x64x16xf32>, vector<1x64x16xf32>, vector<1x64x16xf32> -> vector<4x64x16xf32>
    %52 = vector.extract_strided_slice %31 {offsets = [0, 0], sizes = [64, 16], strides = [1, 1]} : vector<64x64xf32> to vector<64x16xf32>
    %53 = vector.extract_strided_slice %31 {offsets = [0, 16], sizes = [64, 16], strides = [1, 1]} : vector<64x64xf32> to vector<64x16xf32>
    %54 = vector.extract_strided_slice %31 {offsets = [0, 32], sizes = [64, 16], strides = [1, 1]} : vector<64x64xf32> to vector<64x16xf32>
    %55 = vector.extract_strided_slice %31 {offsets = [0, 48], sizes = [64, 16], strides = [1, 1]} : vector<64x64xf32> to vector<64x16xf32>
    %56 = vector.shape_cast %52 : vector<64x16xf32> to vector<1x64x16xf32>
    %57 = vector.shape_cast %53 : vector<64x16xf32> to vector<1x64x16xf32>
    %58 = vector.shape_cast %54 : vector<64x16xf32> to vector<1x64x16xf32>
    %59 = vector.shape_cast %55 : vector<64x16xf32> to vector<1x64x16xf32>
    %60 = tpu.concatenate %56, %57, %58, %59 in 0 : vector<1x64x16xf32>, vector<1x64x16xf32>, vector<1x64x16xf32>, vector<1x64x16xf32> -> vector<4x64x16xf32>
    %61 = vector.extract_strided_slice %42 {offsets = [0, 0], sizes = [64, 16], strides = [1, 1]} : vector<64x64xf32> to vector<64x16xf32>
    %62 = vector.extract_strided_slice %42 {offsets = [0, 16], sizes = [64, 16], strides = [1, 1]} : vector<64x64xf32> to vector<64x16xf32>
    %63 = vector.extract_strided_slice %42 {offsets = [0, 32], sizes = [64, 16], strides = [1, 1]} : vector<64x64xf32> to vector<64x16xf32>
    %64 = vector.extract_strided_slice %42 {offsets = [0, 48], sizes = [64, 16], strides = [1, 1]} : vector<64x64xf32> to vector<64x16xf32>
    %65 = vector.shape_cast %61 : vector<64x16xf32> to vector<1x64x16xf32>
    %66 = vector.shape_cast %62 : vector<64x16xf32> to vector<1x64x16xf32>
    %67 = vector.shape_cast %63 : vector<64x16xf32> to vector<1x64x16xf32>
    %68 = vector.shape_cast %64 : vector<64x16xf32> to vector<1x64x16xf32>
    %69 = tpu.concatenate %65, %66, %67, %68 in 0 : vector<1x64x16xf32>, vector<1x64x16xf32>, vector<1x64x16xf32>, vector<1x64x16xf32> -> vector<4x64x16xf32>
    %70 = arith.mulf %60, %60 : vector<4x64x16xf32>
    %cst_14 = arith.constant 1.000000e+00 : f32
    %71 = vector.broadcast %cst_14 : f32 to vector<4x64x16xf32>
    %72 = arith.mulf %70, %60 : vector<4x64x16xf32>
    %73 = tpu.concatenate %71, %60, %70, %72 in 1 : vector<4x64x16xf32>, vector<4x64x16xf32>, vector<4x64x16xf32>, vector<4x64x16xf32> -> vector<4x256x16xf32>
    %74 = arith.mulf %69, %69 : vector<4x64x16xf32>
    %cst_15 = arith.constant 0.0130340904 : f32
    %75 = vector.broadcast %cst_15 : f32 to vector<4x64x16xf32>
    %cst_16 = arith.constant 0.34030652 : f32
    %76 = vector.broadcast %cst_16 : f32 to vector<4x64x16xf32>
    %77 = arith.mulf %76, %69 : vector<4x64x16xf32>
    %cst_17 = arith.constant -0.0655111372 : f32
    %78 = vector.broadcast %cst_17 : f32 to vector<4x64x16xf32>
    %79 = arith.mulf %78, %74 : vector<4x64x16xf32>
    %80 = arith.mulf %74, %69 : vector<4x64x16xf32>
    %cst_18 = arith.constant 1.151371 : f32
    %81 = vector.broadcast %cst_18 : f32 to vector<4x64x16xf32>
    %82 = arith.mulf %81, %80 : vector<4x64x16xf32>
    %83 = tpu.iota {dimensions = array<i32: 0>} : vector<64x64xi32>
    %84 = tpu.iota {dimensions = array<i32: 1>} : vector<64x64xi32>
    %85 = arith.cmpi sle, %84, %83 : vector<64x64xi32>
    %c15_i32 = arith.constant 15 : i32
    %86 = vector.broadcast %c15_i32 : i32 to vector<64x64xi32>
    %87 = arith.subi %83, %86 : vector<64x64xi32>
    %88 = arith.cmpi sge, %84, %87 : vector<64x64xi32>
    %89 = arith.andi %85, %88 : vector<64x64xi1>
    %90 = arith.extui %89 : vector<64x64xi1> to vector<64x64xi32>
    %91 = arith.sitofp %90 : vector<64x64xi32> to vector<64x64xf32>
    %92 = arith.subi %83, %84 : vector<64x64xi32>
    %c1_i32 = arith.constant 1 : i32
    %93 = vector.broadcast %c1_i32 : i32 to vector<64x64xi32>
    %94 = arith.addi %92, %93 : vector<64x64xi32>
    %c0_i32 = arith.constant 0 : i32
    %c16_i32 = arith.constant 16 : i32
    %95 = vector.broadcast %c0_i32 : i32 to vector<64x64xi32>
    %96 = arith.maxsi %95, %94 : vector<64x64xi32>
    %97 = vector.broadcast %c16_i32 : i32 to vector<64x64xi32>
    %98 = arith.minsi %97, %96 : vector<64x64xi32>
    %c1_i32_19 = arith.constant 1 : i32
    %99 = vector.broadcast %c1_i32_19 : i32 to vector<64x64xi32>
    %100 = arith.subi %98, %99 : vector<64x64xi32>
    %101 = arith.sitofp %100 : vector<64x64xi32> to vector<64x64xf32>
    %cst_20 = arith.constant -1.000000e-01 : f32
    %102 = vector.broadcast %cst_20 : f32 to vector<64x64xf32>
    %103 = arith.mulf %102, %101 : vector<64x64xf32>
    %104 = math.exp %103 : vector<64x64xf32>
    %105 = arith.mulf %104, %104 : vector<64x64xf32>
    %106 = arith.mulf %105, %104 : vector<64x64xf32>
    %cst_21 = arith.constant 1.250000e-02 : f32
    %107 = vector.broadcast %cst_21 : f32 to vector<64x64xf32>
    %108 = arith.mulf %91, %107 : vector<64x64xf32>
    %cst_22 = arith.constant 0.521363616 : f32
    %109 = vector.broadcast %cst_22 : f32 to vector<64x64xf32>
    %110 = arith.mulf %109, %108 : vector<64x64xf32>
    %cst_23 = arith.constant 13.6122608 : f32
    %111 = vector.broadcast %cst_23 : f32 to vector<64x64xf32>
    %112 = arith.mulf %111, %104 : vector<64x64xf32>
    %113 = arith.mulf %112, %108 : vector<64x64xf32>
    %cst_24 = arith.constant -2.62044573 : f32
    %114 = vector.broadcast %cst_24 : f32 to vector<64x64xf32>
    %115 = arith.mulf %114, %105 : vector<64x64xf32>
    %116 = arith.mulf %115, %108 : vector<64x64xf32>
    %cst_25 = arith.constant 46.0548363 : f32
    %117 = vector.broadcast %cst_25 : f32 to vector<64x64xf32>
    %118 = arith.mulf %117, %106 : vector<64x64xf32>
    %119 = arith.mulf %118, %108 : vector<64x64xf32>
    %120 = tpu.concatenate %110, %113, %116, %119 in 1 : vector<64x64xf32>, vector<64x64xf32>, vector<64x64xf32>, vector<64x64xf32> -> vector<64x256xf32>
    %121 = arith.truncf %51 : vector<4x64x16xf32> to vector<4x64x16xbf16>
    %122 = arith.truncf %73 : vector<4x256x16xf32> to vector<4x256x16xbf16>
    "tpu.trace_start"() <{level = 10 : i32, message = "hqd,hkd->hqk"}> : () -> ()
    %cst_26 = arith.constant dense<0.000000e+00> : vector<4x64x256xf32>
    %123 = tpu.matmul %121, %122, %cst_26 {dimension_numbers = #tpu.dot_dimension_numbers<[2], [2], [1], [1], [0, 0, 0, 1, 1, 1], [0], [0]>} : vector<4x64x16xbf16>, vector<4x256x16xbf16>, vector<4x64x256xf32> -> vector<4x64x256xf32>
    "tpu.trace_stop"() : () -> ()
    %124 = vector.shape_cast %120 : vector<64x256xf32> to vector<1x64x256xf32>
    %125 = vector.broadcast %124 : vector<1x64x256xf32> to vector<4x64x256xf32>
    %126 = arith.mulf %123, %125 : vector<4x64x256xf32>
    %127 = vector.extract_strided_slice %126 {offsets = [0, 0, 0], sizes = [4, 64, 64], strides = [1, 1, 1]} : vector<4x64x256xf32> to vector<4x64x64xf32>
    %128 = vector.extract_strided_slice %126 {offsets = [0, 0, 64], sizes = [4, 64, 64], strides = [1, 1, 1]} : vector<4x64x256xf32> to vector<4x64x64xf32>
    %129 = arith.addf %127, %128 : vector<4x64x64xf32>
    %130 = vector.extract_strided_slice %126 {offsets = [0, 0, 128], sizes = [4, 64, 64], strides = [1, 1, 1]} : vector<4x64x256xf32> to vector<4x64x64xf32>
    %131 = arith.addf %129, %130 : vector<4x64x64xf32>
    %132 = vector.extract_strided_slice %126 {offsets = [0, 0, 192], sizes = [4, 64, 64], strides = [1, 1, 1]} : vector<4x64x256xf32> to vector<4x64x64xf32>
    %133 = arith.addf %131, %132 : vector<4x64x64xf32>
    %cst_27 = arith.constant 0.000000e+00 : f32
    %cst_28 = arith.constant 1.000000e+00 : f32
    %134 = vector.broadcast %cst_27 : f32 to vector<4x64x64xf32>
    %135 = arith.maximumf %134, %133 : vector<4x64x64xf32>
    %136 = vector.broadcast %cst_28 : f32 to vector<4x64x64xf32>
    %137 = arith.minimumf %136, %135 : vector<4x64x64xf32>
    %cst_29 = arith.constant 1.000000e+00 : f32
    %138 = vector.broadcast %cst_29 : f32 to vector<64x64xf32>
    %cst_30 = arith.constant 0.000000e+00 : f32
    %139 = vector.broadcast %cst_30 : f32 to vector<4x64x16xf32>
    %140 = vector.extract_strided_slice %137 {offsets = [0, 0, 0], sizes = [4, 64, 32], strides = [1, 1, 1]} : vector<4x64x64xf32> to vector<4x64x32xf32>
    %141 = vector.extract_strided_slice %138 {offsets = [0, 0], sizes = [64, 32], strides = [1, 1]} : vector<64x64xf32> to vector<64x32xf32>
    %142 = vector.extract_strided_slice %104 {offsets = [0, 0], sizes = [64, 32], strides = [1, 1]} : vector<64x64xf32> to vector<64x32xf32>
    %143 = vector.extract_strided_slice %105 {offsets = [0, 0], sizes = [64, 32], strides = [1, 1]} : vector<64x64xf32> to vector<64x32xf32>
    %144 = vector.extract_strided_slice %106 {offsets = [0, 0], sizes = [64, 32], strides = [1, 1]} : vector<64x64xf32> to vector<64x32xf32>
    %145 = tpu.concatenate %141, %142, %143, %144 in 1 : vector<64x32xf32>, vector<64x32xf32>, vector<64x32xf32>, vector<64x32xf32> -> vector<64x128xf32>
    %146 = tpu.concatenate %140, %140, %140, %140 in 2 : vector<4x64x32xf32>, vector<4x64x32xf32>, vector<4x64x32xf32>, vector<4x64x32xf32> -> vector<4x64x128xf32>
    %147 = vector.shape_cast %145 : vector<64x128xf32> to vector<1x64x128xf32>
    %148 = vector.broadcast %147 : vector<1x64x128xf32> to vector<4x64x128xf32>
    %149 = arith.mulf %146, %148 : vector<4x64x128xf32>
    %150 = vector.extract_strided_slice %75 {offsets = [0, 0, 0], sizes = [4, 32, 16], strides = [1, 1, 1]} : vector<4x64x16xf32> to vector<4x32x16xf32>
    %151 = vector.extract_strided_slice %77 {offsets = [0, 0, 0], sizes = [4, 32, 16], strides = [1, 1, 1]} : vector<4x64x16xf32> to vector<4x32x16xf32>
    %152 = vector.extract_strided_slice %79 {offsets = [0, 0, 0], sizes = [4, 32, 16], strides = [1, 1, 1]} : vector<4x64x16xf32> to vector<4x32x16xf32>
    %153 = vector.extract_strided_slice %82 {offsets = [0, 0, 0], sizes = [4, 32, 16], strides = [1, 1, 1]} : vector<4x64x16xf32> to vector<4x32x16xf32>
    %154 = tpu.concatenate %150, %151, %152, %153 in 1 : vector<4x32x16xf32>, vector<4x32x16xf32>, vector<4x32x16xf32>, vector<4x32x16xf32> -> vector<4x128x16xf32>
    %155 = arith.truncf %149 : vector<4x64x128xf32> to vector<4x64x128xbf16>
    %156 = arith.truncf %154 : vector<4x128x16xf32> to vector<4x128x16xbf16>
    "tpu.trace_start"() <{level = 10 : i32, message = "hqk,hkd->hqd"}> : () -> ()
    %cst_31 = arith.constant dense<0.000000e+00> : vector<4x64x16xf32>
    %157 = tpu.matmul %155, %156, %cst_31 {dimension_numbers = #tpu.dot_dimension_numbers<[2], [1], [1], [2], [0, 0, 0, 1, 1, 2], [0], [0]>} : vector<4x64x128xbf16>, vector<4x128x16xbf16>, vector<4x64x16xf32> -> vector<4x64x16xf32>
    %cst_32 = arith.constant -1.000000e+00 : f32
    %cst_33 = arith.constant 1.000000e+00 : f32
    "tpu.trace_stop"() : () -> ()
    %158 = vector.broadcast %cst_32 : f32 to vector<4x64x16xf32>
    %159 = arith.maximumf %158, %157 : vector<4x64x16xf32>
    %160 = vector.broadcast %cst_33 : f32 to vector<4x64x16xf32>
    %161 = arith.minimumf %160, %159 : vector<4x64x16xf32>
    %162 = arith.addf %139, %161 : vector<4x64x16xf32>
    %163 = vector.extract_strided_slice %137 {offsets = [0, 0, 32], sizes = [4, 64, 32], strides = [1, 1, 1]} : vector<4x64x64xf32> to vector<4x64x32xf32>
    %164 = vector.extract_strided_slice %138 {offsets = [0, 32], sizes = [64, 32], strides = [1, 1]} : vector<64x64xf32> to vector<64x32xf32>
    %165 = vector.extract_strided_slice %104 {offsets = [0, 32], sizes = [64, 32], strides = [1, 1]} : vector<64x64xf32> to vector<64x32xf32>
    %166 = vector.extract_strided_slice %105 {offsets = [0, 32], sizes = [64, 32], strides = [1, 1]} : vector<64x64xf32> to vector<64x32xf32>
    %167 = vector.extract_strided_slice %106 {offsets = [0, 32], sizes = [64, 32], strides = [1, 1]} : vector<64x64xf32> to vector<64x32xf32>
    %168 = tpu.concatenate %164, %165, %166, %167 in 1 : vector<64x32xf32>, vector<64x32xf32>, vector<64x32xf32>, vector<64x32xf32> -> vector<64x128xf32>
    %169 = tpu.concatenate %163, %163, %163, %163 in 2 : vector<4x64x32xf32>, vector<4x64x32xf32>, vector<4x64x32xf32>, vector<4x64x32xf32> -> vector<4x64x128xf32>
    %170 = vector.shape_cast %168 : vector<64x128xf32> to vector<1x64x128xf32>
    %171 = vector.broadcast %170 : vector<1x64x128xf32> to vector<4x64x128xf32>
    %172 = arith.mulf %169, %171 : vector<4x64x128xf32>
    %173 = vector.extract_strided_slice %75 {offsets = [0, 32, 0], sizes = [4, 32, 16], strides = [1, 1, 1]} : vector<4x64x16xf32> to vector<4x32x16xf32>
    %174 = vector.extract_strided_slice %77 {offsets = [0, 32, 0], sizes = [4, 32, 16], strides = [1, 1, 1]} : vector<4x64x16xf32> to vector<4x32x16xf32>
    %175 = vector.extract_strided_slice %79 {offsets = [0, 32, 0], sizes = [4, 32, 16], strides = [1, 1, 1]} : vector<4x64x16xf32> to vector<4x32x16xf32>
    %176 = vector.extract_strided_slice %82 {offsets = [0, 32, 0], sizes = [4, 32, 16], strides = [1, 1, 1]} : vector<4x64x16xf32> to vector<4x32x16xf32>
    %177 = tpu.concatenate %173, %174, %175, %176 in 1 : vector<4x32x16xf32>, vector<4x32x16xf32>, vector<4x32x16xf32>, vector<4x32x16xf32> -> vector<4x128x16xf32>
    %178 = arith.truncf %172 : vector<4x64x128xf32> to vector<4x64x128xbf16>
    %179 = arith.truncf %177 : vector<4x128x16xf32> to vector<4x128x16xbf16>
    "tpu.trace_start"() <{level = 10 : i32, message = "hqk,hkd->hqd"}> : () -> ()
    %cst_34 = arith.constant dense<0.000000e+00> : vector<4x64x16xf32>
    %180 = tpu.matmul %178, %179, %cst_34 {dimension_numbers = #tpu.dot_dimension_numbers<[2], [1], [1], [2], [0, 0, 0, 1, 1, 2], [0], [0]>} : vector<4x64x128xbf16>, vector<4x128x16xbf16>, vector<4x64x16xf32> -> vector<4x64x16xf32>
    %cst_35 = arith.constant -1.000000e+00 : f32
    %cst_36 = arith.constant 1.000000e+00 : f32
    "tpu.trace_stop"() : () -> ()
    %181 = vector.broadcast %cst_35 : f32 to vector<4x64x16xf32>
    %182 = arith.maximumf %181, %180 : vector<4x64x16xf32>
    %183 = vector.broadcast %cst_36 : f32 to vector<4x64x16xf32>
    %184 = arith.minimumf %183, %182 : vector<4x64x16xf32>
    %185 = arith.addf %162, %184 : vector<4x64x16xf32>
    %186 = vector.extract_strided_slice %185 {offsets = [0, 0, 0], sizes = [1, 64, 16], strides = [1, 1, 1]} : vector<4x64x16xf32> to vector<1x64x16xf32>
    %187 = vector.shape_cast %186 : vector<1x64x16xf32> to vector<64x16xf32>
    %188 = vector.extract_strided_slice %185 {offsets = [1, 0, 0], sizes = [1, 64, 16], strides = [1, 1, 1]} : vector<4x64x16xf32> to vector<1x64x16xf32>
    %189 = vector.shape_cast %188 : vector<1x64x16xf32> to vector<64x16xf32>
    %190 = vector.extract_strided_slice %185 {offsets = [2, 0, 0], sizes = [1, 64, 16], strides = [1, 1, 1]} : vector<4x64x16xf32> to vector<1x64x16xf32>
    %191 = vector.shape_cast %190 : vector<1x64x16xf32> to vector<64x16xf32>
    %192 = vector.extract_strided_slice %185 {offsets = [3, 0, 0], sizes = [1, 64, 16], strides = [1, 1, 1]} : vector<4x64x16xf32> to vector<1x64x16xf32>
    %193 = vector.shape_cast %192 : vector<1x64x16xf32> to vector<64x16xf32>
    %194 = tpu.concatenate %187, %189, %191, %193 in 1 : vector<64x16xf32>, vector<64x16xf32>, vector<64x16xf32>, vector<64x16xf32> -> vector<64x64xf32>
    %195 = vector.extract_strided_slice %9 {offsets = [6, 0], sizes = [1, 64], strides = [1, 1]} : vector<8x64xf32> to vector<1x64xf32>
    %196 = vector.broadcast %195 : vector<1x64xf32> to vector<64x64xf32>
    %197 = arith.mulf %196, %194 : vector<64x64xf32>
    %198 = vector.extract_strided_slice %9 {offsets = [7, 0], sizes = [1, 64], strides = [1, 1]} : vector<8x64xf32> to vector<1x64xf32>
    %199 = vector.broadcast %198 : vector<1x64xf32> to vector<64x64xf32>
    %200 = arith.addf %197, %199 : vector<64x64xf32>
    %201 = arith.truncf %200 : vector<64x64xf32> to vector<64x64xbf16>
    %c0_37 = arith.constant 0 : index
    %c0_38 = arith.constant 0 : index
    %202 = vector.load %arg5[%c0_37, %c0_38] : memref<64x64xf32, #tpu.memory_space<vmem>>, vector<64x64xf32>
    %203 = arith.truncf %202 : vector<64x64xf32> to vector<64x64xbf16>
    %cst_39 = arith.constant dense<0.000000e+00> : vector<64x64xf32>
    %204 = tpu.matmul %201, %203, %cst_39 {dimension_numbers = #tpu.dot_dimension_numbers<[1], [0], [0], [1], [0, 0, 1, 1], [], []>} : vector<64x64xbf16>, vector<64x64xbf16>, vector<64x64xf32> -> vector<64x64xf32>
    %c0_40 = arith.constant 0 : index
    %c0_41 = arith.constant 0 : index
    %205 = vector.load %arg6[%c0_40, %c0_41] : memref<1x64xf32, #tpu.memory_space<vmem>>, vector<1x64xf32>
    %206 = vector.broadcast %205 : vector<1x64xf32> to vector<64x64xf32>
    %207 = arith.addf %204, %206 : vector<64x64xf32>
    %c0_42 = arith.constant 0 : index
    %c0_43 = arith.constant 0 : index
    %c0_44 = arith.constant 0 : index
    %208 = vector.load %arg7[%c0_42, %c0_43, %c0_44] : memref<1x64x64xf32, #tpu.memory_space<vmem>>, vector<1x64x64xf32>
    %209 = vector.shape_cast %208 : vector<1x64x64xf32> to vector<64x64xf32>
    %210 = vector.shape_cast %207 : vector<64x64xf32> to vector<1x64x64xf32>
    tpu.vector_store %arg7[%c0_42, %c0_43, %c0_44], %210 {strides = array<i32>} : memref<1x64x64xf32, #tpu.memory_space<vmem>>, vector<1x64x64xf32>,
    return
  }
  func.func @transform_0(%arg0: i32) -> (i32, i32, i32) {
    %c0_i32 = arith.constant 0 : i32
    %c0_i32_0 = arith.constant 0 : i32
    %c0_i32_1 = arith.constant 0 : i32
    return %arg0, %c0_i32, %c0_i32_0 : i32, i32, i32
  }
  func.func @transform_1(%arg0: i32) -> (i32, i32) {
    %c0_i32 = arith.constant 0 : i32
    %c0_i32_0 = arith.constant 0 : i32
    %c0_i32_1 = arith.constant 0 : i32
    return %c0_i32, %c0_i32_0 : i32, i32
  }
  func.func @transform_2(%arg0: i32) -> (i32, i32) {
    %c0_i32 = arith.constant 0 : i32
    %c0_i32_0 = arith.constant 0 : i32
    %c0_i32_1 = arith.constant 0 : i32
    return %c0_i32, %c0_i32_0 : i32, i32
  }
  func.func @transform_3(%arg0: i32) -> (i32, i32) {
    %c0_i32 = arith.constant 0 : i32
    %c0_i32_0 = arith.constant 0 : i32
    %c0_i32_1 = arith.constant 0 : i32
    return %c0_i32, %c0_i32_0 : i32, i32
  }
  func.func @transform_4(%arg0: i32) -> (i32, i32) {
    %c0_i32 = arith.constant 0 : i32
    %c0_i32_0 = arith.constant 0 : i32
    %c0_i32_1 = arith.constant 0 : i32
    return %c0_i32, %c0_i32_0 : i32, i32
  }
  func.func @transform_5(%arg0: i32) -> (i32, i32) {
    %c0_i32 = arith.constant 0 : i32
    %c0_i32_0 = arith.constant 0 : i32
    %c0_i32_1 = arith.constant 0 : i32
    return %c0_i32, %c0_i32_0 : i32, i32
  }
  func.func @transform_6(%arg0: i32) -> (i32, i32, i32) {
    %c0_i32 = arith.constant 0 : i32
    %c0_i32_0 = arith.constant 0 : i32
    %c0_i32_1 = arith.constant 0 : i32
    return %arg0, %c0_i32, %c0_i32_0 : i32, i32, i32
  }
}

</mosaic_0001>

<llo_original>
// kernel: tpu_custom_call.1
$region0: #{tpu_custom_call.1}
  #allocation0 [shape = 'u32[]', space=smem, size = 0x4, offset = 0x4, fixed_abs, tag = 'smem constant byte address 0x4 - core index']
  #allocation1 [shape = 'u32[144,128]{1,0:T(1,128)}', space=vmem, size = 0x12000, scoped, tag = 'internal scratch']
  %s0 = inlined_call_operand.hbm [shape: f32[2,64,64], index: 0, kind: input, shape index: {}]
  %s1 = inlined_call_operand.hbm [shape: f32[64,192], index: 1, kind: input, shape index: {}]
  %s2 = inlined_call_operand.vmem [shape: f32[1,192], index: 2, kind: input, shape index: {}]
  %s3 = inlined_call_operand.hbm [shape: f32[8,64], index: 3, kind: input, shape index: {}]
  %s4 = inlined_call_operand.hbm [shape: f32[64,64], index: 4, kind: input, shape index: {}]
  %s5 = inlined_call_operand.vmem [shape: f32[1,64], index: 5, kind: input, shape index: {}]
  %s6 = inlined_call_operand.hbm [shape: f32[2,64,64], index: 6, kind: output, shape index: {}]
  %s7 = sld [smem:[#allocation0]]
  $region73: #{tpu_custom_call.1} parent=0
    _
  %s9 = ssub.s32 1, %s7
  %s10 = scalar_select 0, %s9, %s7
  $region1: #{tpu_custom_call.1} parent=0
    #allocation2 [shape = 'u8[65536]{0}', space=vmem, size = 0x10000, scoped, tag = 'input window, operand 0']
    #allocation3 [shape = 's32[2]{0}', space=sflag, size = 0x8, scoped, tag = 'scoped memory for tpu_custom_call.1']
    #allocation4 [shape = 's32[2]{0}', space=sflag, size = 0x8, scoped, tag = 'scoped memory for tpu_custom_call.1']
    #allocation5 [shape = 'u8[65536]{0}', space=vmem, size = 0x10000, scoped, tag = 'input window, operand 1, single buffered']
    #allocation6 [shape = 's32[1]{0}', space=sflag, size = 0x4, scoped, tag = 'scoped memory for tpu_custom_call.1']
    #allocation7 [shape = 'u8[4096]{0}', space=vmem, size = 0x1000, scoped, tag = 'input window, operand 3, single buffered']
    #allocation8 [shape = 'u8[32768]{0}', space=vmem, size = 0x8000, scoped, tag = 'input window, operand 4, single buffered']
    #allocation9 [shape = 's32[1]{0}', space=sflag, size = 0x4, scoped, tag = 'scoped memory for tpu_custom_call.1']
    #allocation10 [shape = 'u8[65536]{0}', space=vmem, size = 0x10000, scoped, tag = 'output window, operand 0']
    %11 = vsyncpa [#allocation3], 0
    %s12 = scalar_lea.sflag [#allocation3], 1
    %13 = vsyncpa %s12, 0
    %14 = vsyncpa [#allocation6], 0
    %15 = vsyncpa [#allocation9], 0
    %16 = vsyncpa [#allocation4], 0
    %s17 = scalar_lea.sflag [#allocation4], 1
    %18 = vsyncpa %s17, 0
    loop: start=0, step=1, limit=4
    $region2: #{tpu_custom_call.1} parent=1 // loop_pre_header
      _
    $region3: #{tpu_custom_call.1} parent=1 // loop_header
      %s20 = sphi 0, %s24
      %p21 = scmp.ge.s32.totalorder %s20, 4
      %s30 = sphi 0, %s32
      %s33 = sphi 0, %s30
      %s34 = sphi 0, %s33
      %s50 = sphi 0, %s34
      %s54 = sphi 0, %s54
      %s56 = sphi 0, %s54
      %s57 = sphi 0, %s56
      %s71 = sphi 0, %s57
      %s75 = sphi 0, %s75
      %s77 = sphi 0, %s75
      %s78 = sphi 0, %s77
      %s92 = sphi 0, %s78
      %s96 = sphi 0, %s96
      %s98 = sphi 0, %s96
      %s99 = sphi 0, %s98
      %s113 = sphi 0, %s99
      %s117 = sphi 0, %s117
      %s119 = sphi 0, %s117
      %s120 = sphi 0, %s119
      %s134 = sphi 0, %s120
      %s138 = sphi 0, %s138
      %s140 = sphi 0, %s138
      %s141 = sphi 0, %s140
      %s155 = sphi 0, %s141
      %s161 = sphi 0, %s163
      %s164 = sphi 0, %s161
      %s165 = sphi 0, %s164
      %s181 = sphi 0, %s165
    $region4: #{tpu_custom_call.1} parent=1 // loop_header_branch
      %23 = sbr.rel (%p21) target = $region8
    $region5: #{tpu_custom_call.1} parent=1 // loop_body
      %s25 = ssub.s32 %s20, 1
      %s26 = ssub.s32 %s20, 2
      %s27 = sadd.s32 %s20, 1
      %s28 = ssub.s32 %s20, %s27
      %p29 = scmp.eq.s32.totalorder %s28, 0
      %s31 = sadd.s32 %s30, 1
      %s32 = scalar_select %p29, %s30, %s31
      %p35 = pneg %p29
      %p36 = scmp.eq.s32.totalorder %s20, 1
      %p37 = por %p35, %p36
      %p38 = scmp.ne.s32.totalorder %s30, %s33
      %p39 = scmp.eq.s32.totalorder %s20, 0
      %p40 = por %p38, %p39
      %p41 = scmp.ne.s32.totalorder %s30, %s33
      %p42 = scmp.eq.s32.totalorder %s25, 1
      %p43 = por %p41, %p42
      %p44 = scmp.ne.s32.totalorder %s33, %s34
      %p45 = scmp.eq.s32.totalorder %s25, 0
      %p46 = por %p44, %p45
      %p47 = scmp.ne.s32.totalorder %s33, %s34
      %p48 = scmp.eq.s32.totalorder %s26, 1
      %p49 = por %p47, %p48
      %p51 = scmp.ne.s32.totalorder %s34, %s50
      %p52 = scmp.eq.s32.totalorder %s26, 0
      %p53 = por %p51, %p52
      %s55 = sadd.s32 %s54, 1
      %p58 = scmp.eq.s32.totalorder %s20, 1
      %p59 = scmp.ne.s32.totalorder %s54, %s56
      %p60 = scmp.eq.s32.totalorder %s20, 0
      %p61 = por %p59, %p60
      %p62 = scmp.ne.s32.totalorder %s54, %s56
      %p63 = scmp.eq.s32.totalorder %s25, 1
      %p64 = por %p62, %p63
      %p65 = scmp.ne.s32.totalorder %s56, %s57
      %p66 = scmp.eq.s32.totalorder %s25, 0
      %p67 = por %p65, %p66
      %p68 = scmp.ne.s32.totalorder %s56, %s57
      %p69 = scmp.eq.s32.totalorder %s26, 1
      %p70 = por %p68, %p69
      %p72 = scmp.ne.s32.totalorder %s57, %s71
      %p73 = scmp.eq.s32.totalorder %s26, 0
      %p74 = por %p72, %p73
      %s76 = sadd.s32 %s75, 1
      %p79 = scmp.eq.s32.totalorder %s20, 1
      %p80 = scmp.ne.s32.totalorder %s75, %s77
      %p81 = scmp.eq.s32.totalorder %s20, 0
      %p82 = por %p80, %p81
      %p83 = scmp.ne.s32.totalorder %s75, %s77
      %p84 = scmp.eq.s32.totalorder %s25, 1
      %p85 = por %p83, %p84
      %p86 = scmp.ne.s32.totalorder %s77, %s78
      %p87 = scmp.eq.s32.totalorder %s25, 0
      %p88 = por %p86, %p87
      %p89 = scmp.ne.s32.totalorder %s77, %s78
      %p90 = scmp.eq.s32.totalorder %s26, 1
      %p91 = por %p89, %p90
      %p93 = scmp.ne.s32.totalorder %s78, %s92
      %p94 = scmp.eq.s32.totalorder %s26, 0
      %p95 = por %p93, %p94
      %s97 = sadd.s32 %s96, 1
      %p100 = scmp.eq.s32.totalorder %s20, 1
      %p101 = scmp.ne.s32.totalorder %s96, %s98
      %p102 = scmp.eq.s32.totalorder %s20, 0
      %p103 = por %p101, %p102
      %p104 = scmp.ne.s32.totalorder %s96, %s98
      %p105 = scmp.eq.s32.totalorder %s25, 1
      %p106 = por %p104, %p105
      %p107 = scmp.ne.s32.totalorder %s98, %s99
      %p108 = scmp.eq.s32.totalorder %s25, 0
      %p109 = por %p107, %p108
      %p110 = scmp.ne.s32.totalorder %s98, %s99
      %p111 = scmp.eq.s32.totalorder %s26, 1
      %p112 = por %p110, %p111
      %p114 = scmp.ne.s32.totalorder %s99, %s113
      %p115 = scmp.eq.s32.totalorder %s26, 0
      %p116 = por %p114, %p115
      %s118 = sadd.s32 %s117, 1
      %p121 = scmp.eq.s32.totalorder %s20, 1
      %p122 = scmp.ne.s32.totalorder %s117, %s119
      %p123 = scmp.eq.s32.totalorder %s20, 0
      %p124 = por %p122, %p123
      %p125 = scmp.ne.s32.totalorder %s117, %s119
      %p126 = scmp.eq.s32.totalorder %s25, 1
      %p127 = por %p125, %p126
      %p128 = scmp.ne.s32.totalorder %s119, %s120
      %p129 = scmp.eq.s32.totalorder %s25, 0
      %p130 = por %p128, %p129
      %p131 = scmp.ne.s32.totalorder %s119, %s120
      %p132 = scmp.eq.s32.totalorder %s26, 1
      %p133 = por %p131, %p132
      %p135 = scmp.ne.s32.totalorder %s120, %s134
      %p136 = scmp.eq.s32.totalorder %s26, 0
      %p137 = por %p135, %p136
      %s139 = sadd.s32 %s138, 1
      %p142 = scmp.eq.s32.totalorder %s20, 1
      %p143 = scmp.ne.s32.totalorder %s138, %s140
      %p144 = scmp.eq.s32.totalorder %s20, 0
      %p145 = por %p143, %p144
      %p146 = scmp.ne.s32.totalorder %s138, %s140
      %p147 = scmp.eq.s32.totalorder %s25, 1
      %p148 = por %p146, %p147
      %p149 = scmp.ne.s32.totalorder %s140, %s141
      %p150 = scmp.eq.s32.totalorder %s25, 0
      %p151 = por %p149, %p150
      %p152 = scmp.ne.s32.totalorder %s140, %s141
      %p153 = scmp.eq.s32.totalorder %s26, 1
      %p154 = por %p152, %p153
      %p156 = scmp.ne.s32.totalorder %s141, %s155
      %p157 = scmp.eq.s32.totalorder %s26, 0
      %p158 = por %p156, %p157
      %s159 = ssub.s32 %s20, %s27
      %p160 = scmp.eq.s32.totalorder %s159, 0
      %s162 = sadd.s32 %s161, 1
      %s163 = scalar_select %p160, %s161, %s162
      %p166 = pneg %p160
      %p167 = scmp.eq.s32.totalorder %s20, 1
      %p168 = por %p166, %p167
      %p169 = scmp.ne.s32.totalorder %s161, %s164
      %p170 = scmp.eq.s32.totalorder %s20, 0
      %p171 = por %p169, %p170
      %p172 = scmp.ne.s32.totalorder %s161, %s164
      %p173 = scmp.eq.s32.totalorder %s25, 1
      %p174 = por %p172, %p173
      %p175 = scmp.ne.s32.totalorder %s164, %s165
      %p176 = scmp.eq.s32.totalorder %s25, 0
      %p177 = por %p175, %p176
      %p178 = scmp.ne.s32.totalorder %s164, %s165
      %p179 = scmp.eq.s32.totalorder %s26, 1
      %p180 = por %p178, %p179
      %p182 = scmp.ne.s32.totalorder %s165, %s181
      %p183 = scmp.eq.s32.totalorder %s26, 0
      %p184 = por %p182, %p183
      %p185 = scmp.le.s32.totalorder 1, %s20
      %p186 = scmp.lt.s32.totalorder %s20, 3
      %p187 = pnand %p185, %p186
      %p188 = pneg %p187
      // Predicated region
      $region9: #{tpu_custom_call.1} parent=5 // pred_check
        _
      $region10: #{tpu_custom_call.1} parent=5 // pred_check_branch
        %190 = sbr.rel (%p187) target = $region12
      $region11: #{tpu_custom_call.1} parent=5 // pred_region
        %s191 = ssub.s32 %s20, 1
        // Predicated region
        $region13: #{tpu_custom_call.1} parent=11 // pred_check
          %p192 = pneg %p67
        $region14: #{tpu_custom_call.1} parent=11 // pred_check_branch
          %194 = sbr.rel (%p192) target = $region16
        $region15: #{tpu_custom_call.1} parent=11 // pred_region
          %s196 = ssub.s32 2048, 2048
          %197 = vsyncadd [#allocation6], %s196
          %s198 = sshll.u32 [#allocation5], 4
          %s199 = int_to_ptr.vmem [resolvable:$true] %s198
          %204 = dma.hbm_to_vmem [thread:$0]  %s1, 2048, %s199, [#allocation6], 256, 256, 16
        $region16: #{tpu_custom_call.1} parent=11 // pred_fallthru
          _
        // Predicated region
        $region17: #{tpu_custom_call.1} parent=11 // pred_check
          %p205 = pneg %p88
        $region18: #{tpu_custom_call.1} parent=11 // pred_check_branch
          %207 = sbr.rel (%p205) target = $region20
        $region19: #{tpu_custom_call.1} parent=11 // pred_region
          _
        $region20: #{tpu_custom_call.1} parent=11 // pred_fallthru
          _
        // Predicated region
        $region21: #{tpu_custom_call.1} parent=11 // pred_check
          %p208 = pneg %p109
        $region22: #{tpu_custom_call.1} parent=11 // pred_check_branch
          %210 = sbr.rel (%p208) target = $region24
        $region23: #{tpu_custom_call.1} parent=11 // pred_region
          %s212 = ssub.s32 128, 128
          %213 = vsyncadd [#allocation6], %s212
          %s215 = sshll.u32 [#allocation7], 4
          %s216 = int_to_ptr.vmem [resolvable:$true] %s215
          %218 = dma.hbm_to_vmem [thread:$0]  %s3, 128, %s216, [#allocation6]
        $region24: #{tpu_custom_call.1} parent=11 // pred_fallthru
          _
        // Predicated region
        $region25: #{tpu_custom_call.1} parent=11 // pred_check
          %p219 = pneg %p130
        $region26: #{tpu_custom_call.1} parent=11 // pred_check_branch
          %221 = sbr.rel (%p219) target = $region28
        $region27: #{tpu_custom_call.1} parent=11 // pred_region
          %s223 = ssub.s32 1024, 1024
          %224 = vsyncadd [#allocation9], %s223
          %s225 = sshll.u32 [#allocation8], 4
          %s226 = int_to_ptr.vmem [resolvable:$true] %s225
          %231 = dma.hbm_to_vmem [thread:$0]  %s4, 1024, %s226, [#allocation9], 128, 128, 8
        $region28: #{tpu_custom_call.1} parent=11 // pred_fallthru
          _
        // Predicated region
        $region29: #{tpu_custom_call.1} parent=11 // pred_check
          %p232 = pneg %p151
        $region30: #{tpu_custom_call.1} parent=11 // pred_check_branch
          %234 = sbr.rel (%p232) target = $region32
        $region31: #{tpu_custom_call.1} parent=11 // pred_region
          _
        $region32: #{tpu_custom_call.1} parent=11 // pred_fallthru
          _
      $region12: #{tpu_custom_call.1} parent=5 // pred_fallthru
        _
      %p235 = scmp.lt.s32.totalorder %s20, 2
      // Predicated region
      $region33: #{tpu_custom_call.1} parent=5 // pred_check
        %p236 = pneg %p235
      $region34: #{tpu_custom_call.1} parent=5 // pred_check_branch
        %238 = sbr.rel (%p236) target = $region36
      $region35: #{tpu_custom_call.1} parent=5 // pred_region
        // Predicated region
        $region37: #{tpu_custom_call.1} parent=35 // pred_check
          %p239 = pneg %p40
        $region38: #{tpu_custom_call.1} parent=35 // pred_check_branch
          %241 = sbr.rel (%p239) target = $region40
        $region39: #{tpu_custom_call.1} parent=35 // pred_region
          %s242 = sand.u32 %s30, 1
          %s243 = scalar_lea.sflag [#allocation3], %s242
          %s244 = sand.u32 %s30, 1
          %s245 = smul.addr %s244, 64
          %s246 = scalar_lea.vmem [#allocation2], %s245
          %s248 = ssub.s32 1024, 1024
          %249 = vsyncadd %s243, %s248
          %s250 = smul.addr %s20, 8
          %s251 = smul.addr %s250, 128
          %s252 = scalar_lea.hbm %s0, %s251
          %s253 = sshll.u32 %s246, 4
          %s254 = int_to_ptr.vmem [resolvable:$true] %s253
          %259 = dma.hbm_to_vmem [thread:$0]  %s252, 1024, %s254, %s243, 128, 128, 8
        $region40: #{tpu_custom_call.1} parent=35 // pred_fallthru
          _
      $region36: #{tpu_custom_call.1} parent=5 // pred_fallthru
        _
      %p260 = scmp.le.s32.totalorder 1, %s20
      %p261 = scmp.lt.s32.totalorder %s20, 3
      %p262 = pnand %p260, %p261
      %p263 = pneg %p262
      // Predicated region
      $region41: #{tpu_custom_call.1} parent=5 // pred_check
        _
      $region42: #{tpu_custom_call.1} parent=5 // pred_check_branch
        %265 = sbr.rel (%p262) target = $region44
      $region43: #{tpu_custom_call.1} parent=5 // pred_region
        %s266 = ssub.s32 %s20, 1
        %s267 = sand.u32 %s33, 1
        %s268 = scalar_lea.sflag [#allocation3], %s267
        %s269 = sand.u32 %s33, 1
        %s270 = smul.addr %s269, 64
        %s271 = scalar_lea.vmem [#allocation2], %s270
        // Predicated region
        $region45: #{tpu_custom_call.1} parent=43 // pred_check
          %p272 = pneg %p46
        $region46: #{tpu_custom_call.1} parent=43 // pred_check_branch
          %274 = sbr.rel (%p272) target = $region48
        $region47: #{tpu_custom_call.1} parent=43 // pred_region
          %275 = dma.done %s268, 1024
        $region48: #{tpu_custom_call.1} parent=43 // pred_fallthru
          _
        // Predicated region
        $region49: #{tpu_custom_call.1} parent=43 // pred_check
          %p276 = pneg %p67
        $region50: #{tpu_custom_call.1} parent=43 // pred_check_branch
          %278 = sbr.rel (%p276) target = $region52
        $region51: #{tpu_custom_call.1} parent=43 // pred_region
          %279 = dma.done [#allocation6], 2048
        $region52: #{tpu_custom_call.1} parent=43 // pred_fallthru
          _
        // Predicated region
        $region53: #{tpu_custom_call.1} parent=43 // pred_check
          %p280 = pneg %p109
        $region54: #{tpu_custom_call.1} parent=43 // pred_check_branch
          %282 = sbr.rel (%p280) target = $region56
        $region55: #{tpu_custom_call.1} parent=43 // pred_region
          %283 = dma.done [#allocation6], 128
        $region56: #{tpu_custom_call.1} parent=43 // pred_fallthru
          _
        // Predicated region
        $region57: #{tpu_custom_call.1} parent=43 // pred_check
          %p284 = pneg %p130
        $region58: #{tpu_custom_call.1} parent=43 // pred_check_branch
          %286 = sbr.rel (%p284) target = $region60
        $region59: #{tpu_custom_call.1} parent=43 // pred_region
          %287 = dma.done [#allocation9], 1024
        $region60: #{tpu_custom_call.1} parent=43 // pred_fallthru
          _
        %s288 = sand.u32 %s33, 1
        %s289 = scalar_lea.sflag [#allocation3], %s288
        %s290 = sand.u32 %s33, 1
        %s291 = smul.addr %s290, 64
        %s292 = scalar_lea.vmem [#allocation2], %s291
        %p293 = pneg %p46
        %p294 = pneg %p43
        %p295 = pneg %p67
        %p296 = pneg %p64
        %p297 = pneg %p88
        %p298 = pneg %p85
        %p299 = pneg %p109
        %p300 = pneg %p106
        %p301 = pneg %p130
        %p302 = pneg %p127
        %p303 = pneg %p151
        %p304 = pneg %p148
        %p305 = pneg %p177
        %p306 = pneg %p174
        %s307 = sand.u32 %s164, 1
        %s308 = scalar_lea.sflag [#allocation4], %s307
        %s309 = sand.u32 %s164, 1
        %s310 = smul.addr %s309, 64
        %s311 = scalar_lea.vmem [#allocation10], %s310
        %v313 = vld [vmem:[%s271] sm:$0xff]
        %v314 = vld [vmem:[%s271 + $0x8] sm:$0xff]
        %v315 = vld [vmem:[%s271 + $0x10] sm:$0xff]
        %v316 = vld [vmem:[%s271 + $0x18] sm:$0xff]
        %v317 = vld [vmem:[%s271 + $0x20] sm:$0xff]
        %v318 = vld [vmem:[%s271 + $0x28] sm:$0xff]
        %v319 = vld [vmem:[%s271 + $0x30] sm:$0xff]
        %v320 = vld [vmem:[%s271 + $0x38] sm:$0xff]
        %v321 = vpack.c.bf16 %v314, %v313
        %v322 = vpack.c.bf16 %v316, %v315
        %v323 = vpack.c.bf16 %v318, %v317
        %v324 = vpack.c.bf16 %v320, %v319
        %v325 = vld [vmem:[#allocation5] sm:$0xff]
        %v326 = vld [vmem:[#allocation5 + $0x8] sm:$0xff]
        %v327 = vld [vmem:[#allocation5 + $0x10] sm:$0xff]
        %v328 = vld [vmem:[#allocation5 + $0x18] sm:$0xff]
        %v329 = vld [vmem:[#allocation5 + $0x20] sm:$0xff]
        %v330 = vld [vmem:[#allocation5 + $0x28] sm:$0xff]
        %v331 = vld [vmem:[#allocation5 + $0x30] sm:$0xff]
        %v332 = vld [vmem:[#allocation5 + $0x38] sm:$0xff]
        %v333 = vld [vmem:[#allocation5 + $0x40] sm:$0xff]
        %v334 = vld [vmem:[#allocation5 + $0x48] sm:$0xff]
        %v335 = vld [vmem:[#allocation5 + $0x50] sm:$0xff]
        %v336 = vld [vmem:[#allocation5 + $0x58] sm:$0xff]
        %v337 = vld [vmem:[#allocation5 + $0x60] sm:$0xff]
        %v338 = vld [vmem:[#allocation5 + $0x68] sm:$0xff]
        %v339 = vld [vmem:[#allocation5 + $0x70] sm:$0xff]
        %v340 = vld [vmem:[#allocation5 + $0x78] sm:$0xff]
        %v341 = vpack.c.bf16 %v327, %v325
        %v342 = vpack.c.bf16 %v328, %v326
        %v343 = vpack.c.bf16 %v331, %v329
        %v344 = vpack.c.bf16 %v332, %v330
        %v345 = vpack.c.bf16 %v335, %v333
        %v346 = vpack.c.bf16 %v336, %v334
        %v347 = vpack.c.bf16 %v339, %v337
        %v348 = vpack.c.bf16 %v340, %v338
        %v349 = vld [vmem:[%s2] sm:$0x3]
        %v351 = vlaneseq
        %v352 = vshrl.u32 %v351, 7
        %v353 = vsub.s32 0, %v352
        %v354 = vrot.slane %v349, %v353
        %v355 = vlaneseq
        %v356 = vshrl.u32 %v355, 7
        %v357 = vsub.s32 1, %v356
        %v358 = vrot.slane %v349, %v357
        %vm361 = vcmask 523264
        %v363 = vsel %vm361, %v321, 0
        %v366 = vsel %vm361, %v322, 0
        %v369 = vsel %vm361, %v323, 0
        %v372 = vsel %vm361, %v324, 0
        %374 = vmatprep.subr.bf16.mxu0 0
        %375 = vmatpush1.bf16.msra.mxu0 0
        %376 = vmatprep.subr.bf16.mxu0 0
        %377 = vmatpush1.bf16.msra.mxu0 0
        %378 = vmatprep.subr.bf16.mxu0 0
        %379 = vmatpush1.bf16.msra.mxu0 0
        %380 = vmatprep.subr.bf16.mxu0 0
        %381 = vmatpush1.bf16.msra.mxu0 0
        %382 = vmatprep.subr.bf16.mxu0 %v348
        %383 = vmatpush1.bf16.msra.mxu0 %v347
        %384 = vmatprep.subr.bf16.mxu0 %v346
        %385 = vmatpush1.bf16.msra.mxu0 %v345
        %386 = vmatprep.subr.bf16.mxu0 %v344
        %387 = vmatpush1.bf16.msra.mxu0 %v343
        %388 = vmatprep.subr.bf16.mxu0 %v342
        %389 = vmatpush1.bf16.msra.mxu0 %v341
        %390 = vmatprep.subr.bf16.mxu0 0
        %391 = vmatpush2.bf16.msra.mxu0 0
        %392 = vmatprep.subr.bf16.mxu0 0
        %393 = vmatpush2.bf16.msra.mxu0 0
        %394 = vmatprep.subr.bf16.mxu0 0
        %395 = vmatpush2.bf16.msra.mxu0 0
        %396 = vmatprep.subr.bf16.mxu0 0
        %397 = vmatpush2.bf16.msra.mxu0 0
        %398 = vmatprep.subr.bf16.mxu0 0
        %399 = vmatpush2.bf16.msra.mxu0 0
        %400 = vmatprep.subr.bf16.mxu0 0
        %401 = vmatpush2.bf16.msra.mxu0 0
        %402 = vmatprep.subr.bf16.mxu0 0
        %403 = vmatpush2.bf16.msra.mxu0 0
        %404 = vmatprep.subr.bf16.mxu0 0
        %405 = vmatpush2.bf16.msra.mxu0 0
        %406 = vmatprep.mubr.bf16.mxu0 0
        %407 = vmatmul.mubr.bf16.gmra.mxu0 %v363
        %v408 = vpop.f32.mrf.mxu0
        %v409 = vadd.f32 %v354, %v408
        %v410 = vpop.f32.mrf.mxu0
        %v411 = vadd.f32 %v358, %v410
        %v412 = vpop.f32.mrf.mxu0
        %v413 = vadd.f32 %v354, %v412
        %v414 = vpop.f32.mrf.mxu0
        %v415 = vadd.f32 %v358, %v414
        %416 = vmatprep.mubr.bf16.mxu0 0
        %417 = vmatmul.mubr.bf16.gmra.mxu0 %v366
        %v418 = vpop.f32.mrf.mxu0
        %v419 = vadd.f32 %v354, %v418
        %v420 = vpop.f32.mrf.mxu0
        %v421 = vadd.f32 %v358, %v420
        %v422 = vpop.f32.mrf.mxu0
        %v423 = vadd.f32 %v354, %v422
        %v424 = vpop.f32.mrf.mxu0
        %v425 = vadd.f32 %v358, %v424
        %426 = vmatprep.mubr.bf16.mxu0 0
        %427 = vmatmul.mubr.bf16.gmra.mxu0 %v369
        %v428 = vpop.f32.mrf.mxu0
        %v429 = vadd.f32 %v354, %v428
        %v430 = vpop.f32.mrf.mxu0
        %v431 = vadd.f32 %v358, %v430
        %v432 = vpop.f32.mrf.mxu0
        %v433 = vadd.f32 %v354, %v432
        %v434 = vpop.f32.mrf.mxu0
        %v435 = vadd.f32 %v358, %v434
        %436 = vmatprep.mubr.bf16.mxu0 0
        %437 = vmatmul.mubr.bf16.gmra.mxu0 %v372
        %v438 = vpop.f32.mrf.mxu0
        %v439 = vadd.f32 %v354, %v438
        %v440 = vpop.f32.mrf.mxu0
        %v441 = vadd.f32 %v358, %v440
        %v442 = vpop.f32.mrf.mxu0
        %v443 = vadd.f32 %v354, %v442
        %v444 = vpop.f32.mrf.mxu0
        %v445 = vadd.f32 %v358, %v444
        %446 = vdwg.mxu0
        %v447 = vld [vmem:[#allocation7] sm:$0xff]
        %v448 = vlaneseq
        %v449 = vshrl.u32 %v448, 7
        %v450 = vsub.s32 0, %v449
        %v451 = vrot.slane %v447, %v450
        %v452 = vmul.f32 %v451, %v409
        %v453 = vmul.f32 %v451, %v413
        %v454 = vmul.f32 %v451, %v419
        %v455 = vmul.f32 %v451, %v423
        %v456 = vmul.f32 %v451, %v429
        %v457 = vmul.f32 %v451, %v433
        %v458 = vmul.f32 %v451, %v439
        %v459 = vmul.f32 %v451, %v443
        %v460 = vlaneseq
        %v461 = vshrl.u32 %v460, 7
        %v462 = vsub.s32 1, %v461
        %v463 = vrot.slane %v447, %v462
        %v464 = vadd.f32 %v452, %v463
        %v465 = vadd.f32 %v453, %v463
        %v466 = vadd.f32 %v454, %v463
        %v467 = vadd.f32 %v455, %v463
        %v468 = vadd.f32 %v456, %v463
        %v469 = vadd.f32 %v457, %v463
        %v470 = vadd.f32 %v458, %v463
        %v471 = vadd.f32 %v459, %v463
        %v472 = vmax.f32 %v464, 0.0
        %v473 = vmax.f32 %v465, 0.0
        %v474 = vmax.f32 %v466, 0.0
        %v475 = vmax.f32 %v467, 0.0
        %v476 = vmax.f32 %v468, 0.0
        %v477 = vmax.f32 %v469, 0.0
        %v478 = vmax.f32 %v470, 0.0
        %v479 = vmax.f32 %v471, 0.0
        %v480 = vmin.f32 %v472, 1.0
        %v481 = vmin.f32 %v473, 1.0
        %v482 = vmin.f32 %v474, 1.0
        %v483 = vmin.f32 %v475, 1.0
        %v484 = vmin.f32 %v476, 1.0
        %v485 = vmin.f32 %v477, 1.0
        %v486 = vmin.f32 %v478, 1.0
        %v487 = vmin.f32 %v479, 1.0
        %v488 = vlaneseq
        %v489 = vshrl.u32 %v488, 7
        %v490 = vsub.s32 2, %v489
        %v491 = vrot.slane %v447, %v490
        %500 = vrot.lane.b32.xlu0 %v409, 64
        %v501 = vpop.permute.xlu0 %500
        %502 = vrot.lane.b32.xlu0 %v413, 64
        %v503 = vpop.permute.xlu0 %502
        %504 = vrot.lane.b32.xlu0 %v419, 64
        %v505 = vpop.permute.xlu0 %504
        %506 = vrot.lane.b32.xlu0 %v423, 64
        %v507 = vpop.permute.xlu0 %506
        %508 = vrot.lane.b32.xlu0 %v429, 64
        %v509 = vpop.permute.xlu0 %508
        %510 = vrot.lane.b32.xlu0 %v433, 64
        %v511 = vpop.permute.xlu0 %510
        %512 = vrot.lane.b32.xlu0 %v439, 64
        %v513 = vpop.permute.xlu0 %512
        %514 = vrot.lane.b32.xlu0 %v443, 64
        %v515 = vpop.permute.xlu0 %514
        %v524 = vmul.f32 %v491, %v501
        %v525 = vmul.f32 %v491, %v503
        %v526 = vmul.f32 %v491, %v505
        %v527 = vmul.f32 %v491, %v507
        %v528 = vmul.f32 %v491, %v509
        %v529 = vmul.f32 %v491, %v511
        %v530 = vmul.f32 %v491, %v513
        %v531 = vmul.f32 %v491, %v515
        %v532 = vlaneseq
        %v533 = vshrl.u32 %v532, 7
        %v534 = vsub.s32 3, %v533
        %v535 = vrot.slane %v447, %v534
        %v536 = vadd.f32 %v524, %v535
        %v537 = vadd.f32 %v525, %v535
        %v538 = vadd.f32 %v526, %v535
        %v539 = vadd.f32 %v527, %v535
        %v540 = vadd.f32 %v528, %v535
        %v541 = vadd.f32 %v529, %v535
        %v542 = vadd.f32 %v530, %v535
        %v543 = vadd.f32 %v531, %v535
        %v544 = vmax.f32 %v536, -0.45
        %v545 = vmax.f32 %v537, -0.45
        %v546 = vmax.f32 %v538, -0.45
        %v547 = vmax.f32 %v539, -0.45
        %v548 = vmax.f32 %v540, -0.45
        %v549 = vmax.f32 %v541, -0.45
        %v550 = vmax.f32 %v542, -0.45
        %v551 = vmax.f32 %v543, -0.45
        %v552 = vmin.f32 %v544, 0.45
        %v553 = vmin.f32 %v545, 0.45
        %v554 = vmin.f32 %v546, 0.45
        %v555 = vmin.f32 %v547, 0.45
        %v556 = vmin.f32 %v548, 0.45
        %v557 = vmin.f32 %v549, 0.45
        %v558 = vmin.f32 %v550, 0.45
        %v559 = vmin.f32 %v551, 0.45
        %v560 = vlaneseq
        %v561 = vshrl.u32 %v560, 7
        %v562 = vsub.s32 4, %v561
        %v563 = vrot.slane %v447, %v562
        %v564 = vmul.f32 %v563, %v411
        %v565 = vmul.f32 %v563, %v415
        %v566 = vmul.f32 %v563, %v421
        %v567 = vmul.f32 %v563, %v425
        %v568 = vmul.f32 %v563, %v431
        %v569 = vmul.f32 %v563, %v435
        %v570 = vmul.f32 %v563, %v441
        %v571 = vmul.f32 %v563, %v445
        %v572 = vlaneseq
        %v573 = vshrl.u32 %v572, 7
        %v574 = vsub.s32 5, %v573
        %v575 = vrot.slane %v447, %v574
        %v576 = vadd.f32 %v564, %v575
        %v577 = vadd.f32 %v565, %v575
        %v578 = vadd.f32 %v566, %v575
        %v579 = vadd.f32 %v567, %v575
        %v580 = vadd.f32 %v568, %v575
        %v581 = vadd.f32 %v569, %v575
        %v582 = vadd.f32 %v570, %v575
        %v583 = vadd.f32 %v571, %v575
        %v584 = vmax.f32 %v576, -0.45
        %v585 = vmax.f32 %v577, -0.45
        %v586 = vmax.f32 %v578, -0.45
        %v587 = vmax.f32 %v579, -0.45
        %v588 = vmax.f32 %v580, -0.45
        %v589 = vmax.f32 %v581, -0.45
        %v590 = vmax.f32 %v582, -0.45
        %v591 = vmax.f32 %v583, -0.45
        %v592 = vmin.f32 %v584, 0.45
        %v593 = vmin.f32 %v585, 0.45
        %v594 = vmin.f32 %v586, 0.45
        %v595 = vmin.f32 %v587, 0.45
        %v596 = vmin.f32 %v588, 0.45
        %v597 = vmin.f32 %v589, 0.45
        %v598 = vmin.f32 %v590, 0.45
        %v599 = vmin.f32 %v591, 0.45
        %608 = vrot.lane.b32.xlu0 %v480, 112
        %v609 = vpop.permute.xlu0 %608
        %610 = vrot.lane.b32.xlu0 %v481, 112
        %v611 = vpop.permute.xlu0 %610
        %612 = vrot.lane.b32.xlu0 %v482, 112
        %v613 = vpop.permute.xlu0 %612
        %614 = vrot.lane.b32.xlu0 %v483, 112
        %v615 = vpop.permute.xlu0 %614
        %616 = vrot.lane.b32.xlu0 %v484, 112
        %v617 = vpop.permute.xlu0 %616
        %618 = vrot.lane.b32.xlu0 %v485, 112
        %v619 = vpop.permute.xlu0 %618
        %620 = vrot.lane.b32.xlu0 %v486, 112
        %v621 = vpop.permute.xlu0 %620
        %622 = vrot.lane.b32.xlu0 %v487, 112
        %v623 = vpop.permute.xlu0 %622
        %632 = vrot.lane.b32.xlu0 %v480, 96
        %v633 = vpop.permute.xlu0 %632
        %634 = vrot.lane.b32.xlu0 %v481, 96
        %v635 = vpop.permute.xlu0 %634
        %636 = vrot.lane.b32.xlu0 %v482, 96
        %v637 = vpop.permute.xlu0 %636
        %638 = vrot.lane.b32.xlu0 %v483, 96
        %v639 = vpop.permute.xlu0 %638
        %640 = vrot.lane.b32.xlu0 %v484, 96
        %v641 = vpop.permute.xlu0 %640
        %642 = vrot.lane.b32.xlu0 %v485, 96
        %v643 = vpop.permute.xlu0 %642
        %644 = vrot.lane.b32.xlu0 %v486, 96
        %v645 = vpop.permute.xlu0 %644
        %646 = vrot.lane.b32.xlu0 %v487, 96
        %v647 = vpop.permute.xlu0 %646
        %656 = vrot.lane.b32.xlu0 %v480, 80
        %v657 = vpop.permute.xlu0 %656
        %658 = vrot.lane.b32.xlu0 %v481, 80
        %v659 = vpop.permute.xlu0 %658
        %660 = vrot.lane.b32.xlu0 %v482, 80
        %v661 = vpop.permute.xlu0 %660
        %662 = vrot.lane.b32.xlu0 %v483, 80
        %v663 = vpop.permute.xlu0 %662
        %664 = vrot.lane.b32.xlu0 %v484, 80
        %v665 = vpop.permute.xlu0 %664
        %666 = vrot.lane.b32.xlu0 %v485, 80
        %v667 = vpop.permute.xlu0 %666
        %668 = vrot.lane.b32.xlu0 %v486, 80
        %v669 = vpop.permute.xlu0 %668
        %670 = vrot.lane.b32.xlu0 %v487, 80
        %v671 = vpop.permute.xlu0 %670
        %688 = vrot.lane.b32.xlu0 %v552, 112
        %v689 = vpop.permute.xlu0 %688
        %690 = vrot.lane.b32.xlu0 %v553, 112
        %v691 = vpop.permute.xlu0 %690
        %692 = vrot.lane.b32.xlu0 %v554, 112
        %v693 = vpop.permute.xlu0 %692
        %694 = vrot.lane.b32.xlu0 %v555, 112
        %v695 = vpop.permute.xlu0 %694
        %696 = vrot.lane.b32.xlu0 %v556, 112
        %v697 = vpop.permute.xlu0 %696
        %698 = vrot.lane.b32.xlu0 %v557, 112
        %v699 = vpop.permute.xlu0 %698
        %700 = vrot.lane.b32.xlu0 %v558, 112
        %v701 = vpop.permute.xlu0 %700
        %702 = vrot.lane.b32.xlu0 %v559, 112
        %v703 = vpop.permute.xlu0 %702
        %712 = vrot.lane.b32.xlu0 %v552, 96
        %v713 = vpop.permute.xlu0 %712
        %714 = vrot.lane.b32.xlu0 %v553, 96
        %v715 = vpop.permute.xlu0 %714
        %716 = vrot.lane.b32.xlu0 %v554, 96
        %v717 = vpop.permute.xlu0 %716
        %718 = vrot.lane.b32.xlu0 %v555, 96
        %v719 = vpop.permute.xlu0 %718
        %720 = vrot.lane.b32.xlu0 %v556, 96
        %v721 = vpop.permute.xlu0 %720
        %722 = vrot.lane.b32.xlu0 %v557, 96
        %v723 = vpop.permute.xlu0 %722
        %724 = vrot.lane.b32.xlu0 %v558, 96
        %v725 = vpop.permute.xlu0 %724
        %726 = vrot.lane.b32.xlu0 %v559, 96
        %v727 = vpop.permute.xlu0 %726
        %736 = vrot.lane.b32.xlu0 %v552, 80
        %v737 = vpop.permute.xlu0 %736
        %738 = vrot.lane.b32.xlu0 %v553, 80
        %v739 = vpop.permute.xlu0 %738
        %740 = vrot.lane.b32.xlu0 %v554, 80
        %v741 = vpop.permute.xlu0 %740
        %742 = vrot.lane.b32.xlu0 %v555, 80
        %v743 = vpop.permute.xlu0 %742
        %744 = vrot.lane.b32.xlu0 %v556, 80
        %v745 = vpop.permute.xlu0 %744
        %746 = vrot.lane.b32.xlu0 %v557, 80
        %v747 = vpop.permute.xlu0 %746
        %748 = vrot.lane.b32.xlu0 %v558, 80
        %v749 = vpop.permute.xlu0 %748
        %750 = vrot.lane.b32.xlu0 %v559, 80
        %v751 = vpop.permute.xlu0 %750
        %768 = vrot.lane.b32.xlu0 %v592, 112
        %v769 = vpop.permute.xlu0 %768
        %770 = vrot.lane.b32.xlu0 %v593, 112
        %v771 = vpop.permute.xlu0 %770
        %772 = vrot.lane.b32.xlu0 %v594, 112
        %v773 = vpop.permute.xlu0 %772
        %774 = vrot.lane.b32.xlu0 %v595, 112
        %v775 = vpop.permute.xlu0 %774
        %776 = vrot.lane.b32.xlu0 %v596, 112
        %v777 = vpop.permute.xlu0 %776
        %778 = vrot.lane.b32.xlu0 %v597, 112
        %v779 = vpop.permute.xlu0 %778
        %780 = vrot.lane.b32.xlu0 %v598, 112
        %v781 = vpop.permute.xlu0 %780
        %782 = vrot.lane.b32.xlu0 %v599, 112
        %v783 = vpop.permute.xlu0 %782
        %792 = vrot.lane.b32.xlu0 %v592, 96
        %v793 = vpop.permute.xlu0 %792
        %794 = vrot.lane.b32.xlu0 %v593, 96
        %v795 = vpop.permute.xlu0 %794
        %796 = vrot.lane.b32.xlu0 %v594, 96
        %v797 = vpop.permute.xlu0 %796
        %798 = vrot.lane.b32.xlu0 %v595, 96
        %v799 = vpop.permute.xlu0 %798
        %800 = vrot.lane.b32.xlu0 %v596, 96
        %v801 = vpop.permute.xlu0 %800
        %802 = vrot.lane.b32.xlu0 %v597, 96
        %v803 = vpop.permute.xlu0 %802
        %804 = vrot.lane.b32.xlu0 %v598, 96
        %v805 = vpop.permute.xlu0 %804
        %806 = vrot.lane.b32.xlu0 %v599, 96
        %v807 = vpop.permute.xlu0 %806
        %816 = vrot.lane.b32.xlu0 %v592, 80
        %v817 = vpop.permute.xlu0 %816
        %818 = vrot.lane.b32.xlu0 %v593, 80
        %v819 = vpop.permute.xlu0 %818
        %820 = vrot.lane.b32.xlu0 %v594, 80
        %v821 = vpop.permute.xlu0 %820
        %822 = vrot.lane.b32.xlu0 %v595, 80
        %v823 = vpop.permute.xlu0 %822
        %824 = vrot.lane.b32.xlu0 %v596, 80
        %v825 = vpop.permute.xlu0 %824
        %826 = vrot.lane.b32.xlu0 %v597, 80
        %v827 = vpop.permute.xlu0 %826
        %828 = vrot.lane.b32.xlu0 %v598, 80
        %v829 = vpop.permute.xlu0 %828
        %830 = vrot.lane.b32.xlu0 %v599, 80
        %v831 = vpop.permute.xlu0 %830
        %v840 = vmul.f32 %v552, %v552
        %v841 = vmul.f32 %v553, %v553
        %v842 = vmul.f32 %v554, %v554
        %v843 = vmul.f32 %v555, %v555
        %v844 = vmul.f32 %v556, %v556
        %v845 = vmul.f32 %v557, %v557
        %v846 = vmul.f32 %v558, %v558
        %v847 = vmul.f32 %v559, %v559
        %v848 = vmul.f32 %v689, %v689
        %v849 = vmul.f32 %v691, %v691
        %v850 = vmul.f32 %v693, %v693
        %v851 = vmul.f32 %v695, %v695
        %v852 = vmul.f32 %v697, %v697
        %v853 = vmul.f32 %v699, %v699
        %v854 = vmul.f32 %v701, %v701
        %v855 = vmul.f32 %v703, %v703
        %v856 = vmul.f32 %v713, %v713
        %v857 = vmul.f32 %v715, %v715
        %v858 = vmul.f32 %v717, %v717
        %v859 = vmul.f32 %v719, %v719
        %v860 = vmul.f32 %v721, %v721
        %v861 = vmul.f32 %v723, %v723
        %v862 = vmul.f32 %v725, %v725
        %v863 = vmul.f32 %v727, %v727
        %v864 = vmul.f32 %v737, %v737
        %v865 = vmul.f32 %v739, %v739
        %v866 = vmul.f32 %v741, %v741
        %v867 = vmul.f32 %v743, %v743
        %v868 = vmul.f32 %v745, %v745
        %v869 = vmul.f32 %v747, %v747
        %v870 = vmul.f32 %v749, %v749
        %v871 = vmul.f32 %v751, %v751
        %v872 = vmul.f32 %v840, %v552
        %v873 = vmul.f32 %v841, %v553
        %v874 = vmul.f32 %v842, %v554
        %v875 = vmul.f32 %v843, %v555
        %v876 = vmul.f32 %v844, %v556
        %v877 = vmul.f32 %v845, %v557
        %v878 = vmul.f32 %v846, %v558
        %v879 = vmul.f32 %v847, %v559
        %v880 = vmul.f32 %v848, %v689
        %v881 = vmul.f32 %v849, %v691
        %v882 = vmul.f32 %v850, %v693
        %v883 = vmul.f32 %v851, %v695
        %v884 = vmul.f32 %v852, %v697
        %v885 = vmul.f32 %v853, %v699
        %v886 = vmul.f32 %v854, %v701
        %v887 = vmul.f32 %v855, %v703
        %v888 = vmul.f32 %v856, %v713
        %v889 = vmul.f32 %v857, %v715
        %v890 = vmul.f32 %v858, %v717
        %v891 = vmul.f32 %v859, %v719
        %v892 = vmul.f32 %v860, %v721
        %v893 = vmul.f32 %v861, %v723
        %v894 = vmul.f32 %v862, %v725
        %v895 = vmul.f32 %v863, %v727
        %v896 = vmul.f32 %v864, %v737
        %v897 = vmul.f32 %v865, %v739
        %v898 = vmul.f32 %v866, %v741
        %v899 = vmul.f32 %v867, %v743
        %v900 = vmul.f32 %v868, %v745
        %v901 = vmul.f32 %v869, %v747
        %v902 = vmul.f32 %v870, %v749
        %v903 = vmul.f32 %v871, %v751
        %v904 = vmul.f32 %v592, %v592
        %v905 = vmul.f32 %v593, %v593
        %v906 = vmul.f32 %v594, %v594
        %v907 = vmul.f32 %v595, %v595
        %v908 = vmul.f32 %v596, %v596
        %v909 = vmul.f32 %v597, %v597
        %v910 = vmul.f32 %v598, %v598
        %v911 = vmul.f32 %v599, %v599
        %v912 = vmul.f32 %v769, %v769
        %v913 = vmul.f32 %v771, %v771
        %v914 = vmul.f32 %v773, %v773
        %v915 = vmul.f32 %v775, %v775
        %v916 = vmul.f32 %v777, %v777
        %v917 = vmul.f32 %v779, %v779
        %v918 = vmul.f32 %v781, %v781
        %v919 = vmul.f32 %v783, %v783
        %v920 = vmul.f32 %v793, %v793
        %v921 = vmul.f32 %v795, %v795
        %v922 = vmul.f32 %v797, %v797
        %v923 = vmul.f32 %v799, %v799
        %v924 = vmul.f32 %v801, %v801
        %v925 = vmul.f32 %v803, %v803
        %v926 = vmul.f32 %v805, %v805
        %v927 = vmul.f32 %v807, %v807
        %v928 = vmul.f32 %v817, %v817
        %v929 = vmul.f32 %v819, %v819
        %v930 = vmul.f32 %v821, %v821
        %v931 = vmul.f32 %v823, %v823
        %v932 = vmul.f32 %v825, %v825
        %v933 = vmul.f32 %v827, %v827
        %v934 = vmul.f32 %v829, %v829
        %v935 = vmul.f32 %v831, %v831
        %v936 = vmul.f32 %v592, 0.34030652
        %v937 = vmul.f32 %v593, 0.34030652
        %v938 = vmul.f32 %v594, 0.34030652
        %v939 = vmul.f32 %v595, 0.34030652
        %v940 = vmul.f32 %v596, 0.34030652
        %v941 = vmul.f32 %v597, 0.34030652
        %v942 = vmul.f32 %v598, 0.34030652
        %v943 = vmul.f32 %v599, 0.34030652
        %v944 = vmul.f32 %v769, 0.34030652
        %v945 = vmul.f32 %v771, 0.34030652
        %v946 = vmul.f32 %v773, 0.34030652
        %v947 = vmul.f32 %v775, 0.34030652
        %v948 = vmul.f32 %v777, 0.34030652
        %v949 = vmul.f32 %v779, 0.34030652
        %v950 = vmul.f32 %v781, 0.34030652
        %v951 = vmul.f32 %v783, 0.34030652
        %v952 = vmul.f32 %v793, 0.34030652
        %v953 = vmul.f32 %v795, 0.34030652
        %v954 = vmul.f32 %v797, 0.34030652
        %v955 = vmul.f32 %v799, 0.34030652
        %v956 = vmul.f32 %v801, 0.34030652
        %v957 = vmul.f32 %v803, 0.34030652
        %v958 = vmul.f32 %v805, 0.34030652
        %v959 = vmul.f32 %v807, 0.34030652
        %v960 = vmul.f32 %v817, 0.34030652
        %v961 = vmul.f32 %v819, 0.34030652
        %v962 = vmul.f32 %v821, 0.34030652
        %v963 = vmul.f32 %v823, 0.34030652
        %v964 = vmul.f32 %v825, 0.34030652
        %v965 = vmul.f32 %v827, 0.34030652
        %v966 = vmul.f32 %v829, 0.34030652
        %v967 = vmul.f32 %v831, 0.34030652
        %v968 = vmul.f32 %v904, -0.06551114
        %v969 = vmul.f32 %v905, -0.06551114
        %v970 = vmul.f32 %v906, -0.06551114
        %v971 = vmul.f32 %v907, -0.06551114
        %v972 = vmul.f32 %v908, -0.06551114
        %v973 = vmul.f32 %v909, -0.06551114
        %v974 = vmul.f32 %v910, -0.06551114
        %v975 = vmul.f32 %v911, -0.06551114
        %v976 = vmul.f32 %v912, -0.06551114
        %v977 = vmul.f32 %v913, -0.06551114
        %v978 = vmul.f32 %v914, -0.06551114
        %v979 = vmul.f32 %v915, -0.06551114
        %v980 = vmul.f32 %v916, -0.06551114
        %v981 = vmul.f32 %v917, -0.06551114
        %v982 = vmul.f32 %v918, -0.06551114
        %v983 = vmul.f32 %v919, -0.06551114
        %v984 = vmul.f32 %v920, -0.06551114
        %v985 = vmul.f32 %v921, -0.06551114
        %v986 = vmul.f32 %v922, -0.06551114
        %v987 = vmul.f32 %v923, -0.06551114
        %v988 = vmul.f32 %v924, -0.06551114
        %v989 = vmul.f32 %v925, -0.06551114
        %v990 = vmul.f32 %v926, -0.06551114
        %v991 = vmul.f32 %v927, -0.06551114
        %v992 = vmul.f32 %v928, -0.06551114
        %v993 = vmul.f32 %v929, -0.06551114
        %v994 = vmul.f32 %v930, -0.06551114
        %v995 = vmul.f32 %v931, -0.06551114
        %v996 = vmul.f32 %v932, -0.06551114
        %v997 = vmul.f32 %v933, -0.06551114
        %v998 = vmul.f32 %v934, -0.06551114
        %v999 = vmul.f32 %v935, -0.06551114
        %v1000 = vmul.f32 %v904, %v592
        %v1001 = vmul.f32 %v905, %v593
        %v1002 = vmul.f32 %v906, %v594
        %v1003 = vmul.f32 %v907, %v595
        %v1004 = vmul.f32 %v908, %v596
        %v1005 = vmul.f32 %v909, %v597
        %v1006 = vmul.f32 %v910, %v598
        %v1007 = vmul.f32 %v911, %v599
        %v1008 = vmul.f32 %v912, %v769
        %v1009 = vmul.f32 %v913, %v771
        %v1010 = vmul.f32 %v914, %v773
        %v1011 = vmul.f32 %v915, %v775
        %v1012 = vmul.f32 %v916, %v777
        %v1013 = vmul.f32 %v917, %v779
        %v1014 = vmul.f32 %v918, %v781
        %v1015 = vmul.f32 %v919, %v783
        %v1016 = vmul.f32 %v920, %v793
        %v1017 = vmul.f32 %v921, %v795
        %v1018 = vmul.f32 %v922, %v797
        %v1019 = vmul.f32 %v923, %v799
        %v1020 = vmul.f32 %v924, %v801
        %v1021 = vmul.f32 %v925, %v803
        %v1022 = vmul.f32 %v926, %v805
        %v1023 = vmul.f32 %v927, %v807
        %v1024 = vmul.f32 %v928, %v817
        %v1025 = vmul.f32 %v929, %v819
        %v1026 = vmul.f32 %v930, %v821
        %v1027 = vmul.f32 %v931, %v823
        %v1028 = vmul.f32 %v932, %v825
        %v1029 = vmul.f32 %v933, %v827
        %v1030 = vmul.f32 %v934, %v829
        %v1031 = vmul.f32 %v935, %v831
        %v1032 = vmul.f32 %v1000, 1.151371
        %v1033 = vmul.f32 %v1001, 1.151371
        %v1034 = vmul.f32 %v1002, 1.151371
        %v1035 = vmul.f32 %v1003, 1.151371
        %v1036 = vmul.f32 %v1004, 1.151371
        %v1037 = vmul.f32 %v1005, 1.151371
        %v1038 = vmul.f32 %v1006, 1.151371
        %v1039 = vmul.f32 %v1007, 1.151371
        %v1040 = vmul.f32 %v1008, 1.151371
        %v1041 = vmul.f32 %v1009, 1.151371
        %v1042 = vmul.f32 %v1010, 1.151371
        %v1043 = vmul.f32 %v1011, 1.151371
        %v1044 = vmul.f32 %v1012, 1.151371
        %v1045 = vmul.f32 %v1013, 1.151371
        %v1046 = vmul.f32 %v1014, 1.151371
        %v1047 = vmul.f32 %v1015, 1.151371
        %v1048 = vmul.f32 %v1016, 1.151371
        %v1049 = vmul.f32 %v1017, 1.151371
        %v1050 = vmul.f32 %v1018, 1.151371
        %v1051 = vmul.f32 %v1019, 1.151371
        %v1052 = vmul.f32 %v1020, 1.151371
        %v1053 = vmul.f32 %v1021, 1.151371
        %v1054 = vmul.f32 %v1022, 1.151371
        %v1055 = vmul.f32 %v1023, 1.151371
        %v1056 = vmul.f32 %v1024, 1.151371
        %v1057 = vmul.f32 %v1025, 1.151371
        %v1058 = vmul.f32 %v1026, 1.151371
        %v1059 = vmul.f32 %v1027, 1.151371
        %v1060 = vmul.f32 %v1028, 1.151371
        %v1061 = vmul.f32 %v1029, 1.151371
        %v1062 = vmul.f32 %v1030, 1.151371
        %v1063 = vmul.f32 %v1031, 1.151371
        %v1064 = vlaneseq
        %v1065 = vshrl.u32 %v1064, 7
        %v1066 = vadd.s32 %v1065, 8
        %v1067 = vadd.s32 %v1065, 16
        %v1068 = vadd.s32 %v1065, 24
        %v1069 = vadd.s32 %v1065, 32
        %v1070 = vadd.s32 %v1065, 40
        %v1071 = vadd.s32 %v1065, 48
        %v1072 = vadd.s32 %v1065, 56
        %v1073 = vlaneseq
        %v1074 = vand.u32 %v1073, 127
        %vm1075 = vcmp.le.s32.totalorder %v1074, %v1065
        %vm1076 = vcmp.le.s32.totalorder %v1074, %v1066
        %vm1077 = vcmp.le.s32.totalorder %v1074, %v1067
        %vm1078 = vcmp.le.s32.totalorder %v1074, %v1068
        %vm1079 = vcmp.le.s32.totalorder %v1074, %v1069
        %vm1080 = vcmp.le.s32.totalorder %v1074, %v1070
        %vm1081 = vcmp.le.s32.totalorder %v1074, %v1071
        %vm1082 = vcmp.le.s32.totalorder %v1074, %v1072
        %v1083 = vsub.s32 %v1065, 15
        %v1084 = vsub.s32 %v1066, 15
        %v1085 = vsub.s32 %v1067, 15
        %v1086 = vsub.s32 %v1068, 15
        %v1087 = vsub.s32 %v1069, 15
        %v1088 = vsub.s32 %v1070, 15
        %v1089 = vsub.s32 %v1071, 15
        %v1090 = vsub.s32 %v1072, 15
        %vm1091 = vcmp.ge.s32.totalorder %v1074, %v1083
        %vm1092 = vcmp.ge.s32.totalorder %v1074, %v1084
        %vm1093 = vcmp.ge.s32.totalorder %v1074, %v1085
        %vm1094 = vcmp.ge.s32.totalorder %v1074, %v1086
        %vm1095 = vcmp.ge.s32.totalorder %v1074, %v1087
        %vm1096 = vcmp.ge.s32.totalorder %v1074, %v1088
        %vm1097 = vcmp.ge.s32.totalorder %v1074, %v1089
        %vm1098 = vcmp.ge.s32.totalorder %v1074, %v1090
        %vm1099 = vmand %vm1075, %vm1091
        %vm1100 = vmand %vm1076, %vm1092
        %vm1101 = vmand %vm1077, %vm1093
        %vm1102 = vmand %vm1078, %vm1094
        %vm1103 = vmand %vm1079, %vm1095
        %vm1104 = vmand %vm1080, %vm1096
        %vm1105 = vmand %vm1081, %vm1097
        %vm1106 = vmand %vm1082, %vm1098
        %v1107 = vsel %vm1099, 1, 0
        %v1108 = vsel %vm1100, 1, 0
        %v1109 = vsel %vm1101, 1, 0
        %v1110 = vsel %vm1102, 1, 0
        %v1111 = vsel %vm1103, 1, 0
        %v1112 = vsel %vm1104, 1, 0
        %v1113 = vsel %vm1105, 1, 0
        %v1114 = vsel %vm1106, 1, 0
        %v1115 = vcvt.s32.f32 %v1107
        %v1116 = vcvt.s32.f32 %v1108
        %v1117 = vcvt.s32.f32 %v1109
        %v1118 = vcvt.s32.f32 %v1110
        %v1119 = vcvt.s32.f32 %v1111
        %v1120 = vcvt.s32.f32 %v1112
        %v1121 = vcvt.s32.f32 %v1113
        %v1122 = vcvt.s32.f32 %v1114
        %v1123 = vsub.s32 %v1065, %v1074
        %v1124 = vsub.s32 %v1066, %v1074
        %v1125 = vsub.s32 %v1067, %v1074
        %v1126 = vsub.s32 %v1068, %v1074
        %v1127 = vsub.s32 %v1069, %v1074
        %v1128 = vsub.s32 %v1070, %v1074
        %v1129 = vsub.s32 %v1071, %v1074
        %v1130 = vsub.s32 %v1072, %v1074
        %v1131 = vadd.s32 %v1123, 1
        %v1132 = vadd.s32 %v1124, 1
        %v1133 = vadd.s32 %v1125, 1
        %v1134 = vadd.s32 %v1126, 1
        %v1135 = vadd.s32 %v1127, 1
        %v1136 = vadd.s32 %v1128, 1
        %v1137 = vadd.s32 %v1129, 1
        %v1138 = vadd.s32 %v1130, 1
        %vm1139 = vcmp.gt.s32.totalorder %v1131, 0
        %v1140 = vsel %vm1139, %v1131, 0
        %vm1141 = vcmp.gt.s32.totalorder %v1132, 0
        %v1142 = vsel %vm1141, %v1132, 0
        %vm1143 = vcmp.gt.s32.totalorder %v1133, 0
        %v1144 = vsel %vm1143, %v1133, 0
        %vm1145 = vcmp.gt.s32.totalorder %v1134, 0
        %v1146 = vsel %vm1145, %v1134, 0
        %vm1147 = vcmp.gt.s32.totalorder %v1135, 0
        %v1148 = vsel %vm1147, %v1135, 0
        %vm1149 = vcmp.gt.s32.totalorder %v1136, 0
        %v1150 = vsel %vm1149, %v1136, 0
        %vm1151 = vcmp.gt.s32.totalorder %v1137, 0
        %v1152 = vsel %vm1151, %v1137, 0
        %vm1153 = vcmp.gt.s32.totalorder %v1138, 0
        %v1154 = vsel %vm1153, %v1138, 0
        %vm1155 = vcmp.lt.s32.totalorder %v1140, 16
        %v1156 = vsel %vm1155, %v1140, 16
        %vm1157 = vcmp.lt.s32.totalorder %v1142, 16
        %v1158 = vsel %vm1157, %v1142, 16
        %vm1159 = vcmp.lt.s32.totalorder %v1144, 16
        %v1160 = vsel %vm1159, %v1144, 16
        %vm1161 = vcmp.lt.s32.totalorder %v1146, 16
        %v1162 = vsel %vm1161, %v1146, 16
        %vm1163 = vcmp.lt.s32.totalorder %v1148, 16
        %v1164 = vsel %vm1163, %v1148, 16
        %vm1165 = vcmp.lt.s32.totalorder %v1150, 16
        %v1166 = vsel %vm1165, %v1150, 16
        %vm1167 = vcmp.lt.s32.totalorder %v1152, 16
        %v1168 = vsel %vm1167, %v1152, 16
        %vm1169 = vcmp.lt.s32.totalorder %v1154, 16
        %v1170 = vsel %vm1169, %v1154, 16
        %v1171 = vsub.s32 %v1156, 1
        %v1172 = vsub.s32 %v1158, 1
        %v1173 = vsub.s32 %v1160, 1
        %v1174 = vsub.s32 %v1162, 1
        %v1175 = vsub.s32 %v1164, 1
        %v1176 = vsub.s32 %v1166, 1
        %v1177 = vsub.s32 %v1168, 1
        %v1178 = vsub.s32 %v1170, 1
        %v1179 = vcvt.s32.f32 %v1171
        %v1180 = vcvt.s32.f32 %v1172
        %v1181 = vcvt.s32.f32 %v1173
        %v1182 = vcvt.s32.f32 %v1174
        %v1183 = vcvt.s32.f32 %v1175
        %v1184 = vcvt.s32.f32 %v1176
        %v1185 = vcvt.s32.f32 %v1177
        %v1186 = vcvt.s32.f32 %v1178
        %v1187 = vmul.f32 %v1179, -0.1
        %v1188 = vmul.f32 %v1180, -0.1
        %v1189 = vmul.f32 %v1181, -0.1
        %v1190 = vmul.f32 %v1182, -0.1
        %v1191 = vmul.f32 %v1183, -0.1
        %v1192 = vmul.f32 %v1184, -0.1
        %v1193 = vmul.f32 %v1185, -0.1
        %v1194 = vmul.f32 %v1186, -0.1
        %v1195 = vmul.f32 %v1187, 1.442695
        %v1196 = vpow.pop %v1195
        %v1197 = vmul.f32 %v1188, 1.442695
        %v1198 = vpow.pop %v1197
        %v1199 = vmul.f32 %v1189, 1.442695
        %v1200 = vpow.pop %v1199
        %v1201 = vmul.f32 %v1190, 1.442695
        %v1202 = vpow.pop %v1201
        %v1203 = vmul.f32 %v1191, 1.442695
        %v1204 = vpow.pop %v1203
        %v1205 = vmul.f32 %v1192, 1.442695
        %v1206 = vpow.pop %v1205
        %v1207 = vmul.f32 %v1193, 1.442695
        %v1208 = vpow.pop %v1207
        %v1209 = vmul.f32 %v1194, 1.442695
        %v1210 = vpow.pop %v1209
        %v1211 = vmul.f32 %v1196, %v1196
        %v1212 = vmul.f32 %v1198, %v1198
        %v1213 = vmul.f32 %v1200, %v1200
        %v1214 = vmul.f32 %v1202, %v1202
        %v1215 = vmul.f32 %v1204, %v1204
        %v1216 = vmul.f32 %v1206, %v1206
        %v1217 = vmul.f32 %v1208, %v1208
        %v1218 = vmul.f32 %v1210, %v1210
        %v1219 = vmul.f32 %v1211, %v1196
        %v1220 = vmul.f32 %v1212, %v1198
        %v1221 = vmul.f32 %v1213, %v1200
        %v1222 = vmul.f32 %v1214, %v1202
        %v1223 = vmul.f32 %v1215, %v1204
        %v1224 = vmul.f32 %v1216, %v1206
        %v1225 = vmul.f32 %v1217, %v1208
        %v1226 = vmul.f32 %v1218, %v1210
        %v1227 = vmul.f32 %v1115, 0.0125
        %v1228 = vmul.f32 %v1116, 0.0125
        %v1229 = vmul.f32 %v1117, 0.0125
        %v1230 = vmul.f32 %v1118, 0.0125
        %v1231 = vmul.f32 %v1119, 0.0125
        %v1232 = vmul.f32 %v1120, 0.0125
        %v1233 = vmul.f32 %v1121, 0.0125
        %v1234 = vmul.f32 %v1122, 0.0125
        %v1235 = vmul.f32 %v1227, 0.5213636
        %v1236 = vmul.f32 %v1228, 0.5213636
        %v1237 = vmul.f32 %v1229, 0.5213636
        %v1238 = vmul.f32 %v1230, 0.5213636
        %v1239 = vmul.f32 %v1231, 0.5213636
        %v1240 = vmul.f32 %v1232, 0.5213636
        %v1241 = vmul.f32 %v1233, 0.5213636
        %v1242 = vmul.f32 %v1234, 0.5213636
        %v1243 = vmul.f32 %v1196, 13.612261
        %v1244 = vmul.f32 %v1198, 13.612261
        %v1245 = vmul.f32 %v1200, 13.612261
        %v1246 = vmul.f32 %v1202, 13.612261
        %v1247 = vmul.f32 %v1204, 13.612261
        %v1248 = vmul.f32 %v1206, 13.612261
        %v1249 = vmul.f32 %v1208, 13.612261
        %v1250 = vmul.f32 %v1210, 13.612261
        %v1251 = vmul.f32 %v1243, %v1227
        %v1252 = vmul.f32 %v1244, %v1228
        %v1253 = vmul.f32 %v1245, %v1229
        %v1254 = vmul.f32 %v1246, %v1230
        %v1255 = vmul.f32 %v1247, %v1231
        %v1256 = vmul.f32 %v1248, %v1232
        %v1257 = vmul.f32 %v1249, %v1233
        %v1258 = vmul.f32 %v1250, %v1234
        %v1259 = vmul.f32 %v1211, -2.6204457
        %v1260 = vmul.f32 %v1212, -2.6204457
        %v1261 = vmul.f32 %v1213, -2.6204457
        %v1262 = vmul.f32 %v1214, -2.6204457
        %v1263 = vmul.f32 %v1215, -2.6204457
        %v1264 = vmul.f32 %v1216, -2.6204457
        %v1265 = vmul.f32 %v1217, -2.6204457
        %v1266 = vmul.f32 %v1218, -2.6204457
        %v1267 = vmul.f32 %v1259, %v1227
        %v1268 = vmul.f32 %v1260, %v1228
        %v1269 = vmul.f32 %v1261, %v1229
        %v1270 = vmul.f32 %v1262, %v1230
        %v1271 = vmul.f32 %v1263, %v1231
        %v1272 = vmul.f32 %v1264, %v1232
        %v1273 = vmul.f32 %v1265, %v1233
        %v1274 = vmul.f32 %v1266, %v1234
        %v1275 = vmul.f32 %v1219, 46.054836
        %v1276 = vmul.f32 %v1220, 46.054836
        %v1277 = vmul.f32 %v1221, 46.054836
        %v1278 = vmul.f32 %v1222, 46.054836
        %v1279 = vmul.f32 %v1223, 46.054836
        %v1280 = vmul.f32 %v1224, 46.054836
        %v1281 = vmul.f32 %v1225, 46.054836
        %v1282 = vmul.f32 %v1226, 46.054836
        %v1283 = vmul.f32 %v1275, %v1227
        %v1284 = vmul.f32 %v1276, %v1228
        %v1285 = vmul.f32 %v1277, %v1229
        %v1286 = vmul.f32 %v1278, %v1230
        %v1287 = vmul.f32 %v1279, %v1231
        %v1288 = vmul.f32 %v1280, %v1232
        %v1289 = vmul.f32 %v1281, %v1233
        %v1290 = vmul.f32 %v1282, %v1234
        %1299 = vrot.lane.b32.xlu0 %v1251, 64
        %v1300 = vpop.permute.xlu0 %1299
        %1301 = vrot.lane.b32.xlu0 %v1252, 64
        %v1302 = vpop.permute.xlu0 %1301
        %1303 = vrot.lane.b32.xlu0 %v1253, 64
        %v1304 = vpop.permute.xlu0 %1303
        %1305 = vrot.lane.b32.xlu0 %v1254, 64
        %v1306 = vpop.permute.xlu0 %1305
        %1307 = vrot.lane.b32.xlu0 %v1255, 64
        %v1308 = vpop.permute.xlu0 %1307
        %1309 = vrot.lane.b32.xlu0 %v1256, 64
        %v1310 = vpop.permute.xlu0 %1309
        %1311 = vrot.lane.b32.xlu0 %v1257, 64
        %v1312 = vpop.permute.xlu0 %1311
        %1313 = vrot.lane.b32.xlu0 %v1258, 64
        %v1314 = vpop.permute.xlu0 %1313
        %1331 = vrot.lane.b32.xlu0 %v1283, 64
        %v1332 = vpop.permute.xlu0 %1331
        %1333 = vrot.lane.b32.xlu0 %v1284, 64
        %v1334 = vpop.permute.xlu0 %1333
        %1335 = vrot.lane.b32.xlu0 %v1285, 64
        %v1336 = vpop.permute.xlu0 %1335
        %1337 = vrot.lane.b32.xlu0 %v1286, 64
        %v1338 = vpop.permute.xlu0 %1337
        %1339 = vrot.lane.b32.xlu0 %v1287, 64
        %v1340 = vpop.permute.xlu0 %1339
        %1341 = vrot.lane.b32.xlu0 %v1288, 64
        %v1342 = vpop.permute.xlu0 %1341
        %1343 = vrot.lane.b32.xlu0 %v1289, 64
        %v1344 = vpop.permute.xlu0 %1343
        %1345 = vrot.lane.b32.xlu0 %v1290, 64
        %v1346 = vpop.permute.xlu0 %1345
        %v1355 = vsel %vm361, %v1235, %v1300
        %v1356 = vsel %vm361, %v1236, %v1302
        %v1357 = vsel %vm361, %v1237, %v1304
        %v1358 = vsel %vm361, %v1238, %v1306
        %v1359 = vsel %vm361, %v1239, %v1308
        %v1360 = vsel %vm361, %v1240, %v1310
        %v1361 = vsel %vm361, %v1241, %v1312
        %v1362 = vsel %vm361, %v1242, %v1314
        %v1363 = vsel %vm361, %v1267, %v1332
        %v1364 = vsel %vm361, %v1268, %v1334
        %v1365 = vsel %vm361, %v1269, %v1336
        %v1366 = vsel %vm361, %v1270, %v1338
        %v1367 = vsel %vm361, %v1271, %v1340
        %v1368 = vsel %vm361, %v1272, %v1342
        %v1369 = vsel %vm361, %v1273, %v1344
        %v1370 = vsel %vm361, %v1274, %v1346
        %v1371 = vpack.c.bf16 %v481, %v480
        %v1372 = vpack.c.bf16 %v483, %v482
        %v1373 = vpack.c.bf16 %v485, %v484
        %v1374 = vpack.c.bf16 %v487, %v486
        %v1375 = vpack.c.bf16 %v611, %v609
        %v1376 = vpack.c.bf16 %v615, %v613
        %v1377 = vpack.c.bf16 %v619, %v617
        %v1378 = vpack.c.bf16 %v623, %v621
        %v1379 = vpack.c.bf16 %v635, %v633
        %v1380 = vpack.c.bf16 %v639, %v637
        %v1381 = vpack.c.bf16 %v643, %v641
        %v1382 = vpack.c.bf16 %v647, %v645
        %v1383 = vpack.c.bf16 %v659, %v657
        %v1384 = vpack.c.bf16 %v663, %v661
        %v1385 = vpack.c.bf16 %v667, %v665
        %v1386 = vpack.c.bf16 %v671, %v669
        %v1387 = vpack.c.bf16 1.0, 1.0
        %v1388 = vpack.c.bf16 %v553, %v552
        %v1389 = vpack.c.bf16 %v555, %v554
        %v1390 = vpack.c.bf16 %v557, %v556
        %v1391 = vpack.c.bf16 %v559, %v558
        %v1392 = vpack.c.bf16 %v841, %v840
        %v1393 = vpack.c.bf16 %v843, %v842
        %v1394 = vpack.c.bf16 %v845, %v844
        %v1395 = vpack.c.bf16 %v847, %v846
        %v1396 = vpack.c.bf16 %v873, %v872
        %v1397 = vpack.c.bf16 %v875, %v874
        %v1398 = vpack.c.bf16 %v877, %v876
        %v1399 = vpack.c.bf16 %v879, %v878
        %v1400 = vpack.c.bf16 %v691, %v689
        %v1401 = vpack.c.bf16 %v695, %v693
        %v1402 = vpack.c.bf16 %v699, %v697
        %v1403 = vpack.c.bf16 %v703, %v701
        %v1404 = vpack.c.bf16 %v849, %v848
        %v1405 = vpack.c.bf16 %v851, %v850
        %v1406 = vpack.c.bf16 %v853, %v852
        %v1407 = vpack.c.bf16 %v855, %v854
        %v1408 = vpack.c.bf16 %v881, %v880
        %v1409 = vpack.c.bf16 %v883, %v882
        %v1410 = vpack.c.bf16 %v885, %v884
        %v1411 = vpack.c.bf16 %v887, %v886
        %v1412 = vpack.c.bf16 %v715, %v713
        %v1413 = vpack.c.bf16 %v719, %v717
        %v1414 = vpack.c.bf16 %v723, %v721
        %v1415 = vpack.c.bf16 %v727, %v725
        %v1416 = vpack.c.bf16 %v857, %v856
        %v1417 = vpack.c.bf16 %v859, %v858
        %v1418 = vpack.c.bf16 %v861, %v860
        %v1419 = vpack.c.bf16 %v863, %v862
        %v1420 = vpack.c.bf16 %v889, %v888
        %v1421 = vpack.c.bf16 %v891, %v890
        %v1422 = vpack.c.bf16 %v893, %v892
        %v1423 = vpack.c.bf16 %v895, %v894
        %v1424 = vpack.c.bf16 %v739, %v737
        %v1425 = vpack.c.bf16 %v743, %v741
        %v1426 = vpack.c.bf16 %v747, %v745
        %v1427 = vpack.c.bf16 %v751, %v749
        %v1428 = vpack.c.bf16 %v865, %v864
        %v1429 = vpack.c.bf16 %v867, %v866
        %v1430 = vpack.c.bf16 %v869, %v868
        %v1431 = vpack.c.bf16 %v871, %v870
        %v1432 = vpack.c.bf16 %v897, %v896
        %v1433 = vpack.c.bf16 %v899, %v898
        %v1434 = vpack.c.bf16 %v901, %v900
        %v1435 = vpack.c.bf16 %v903, %v902
        %vm1436 = vcmask 130048
        %v1438 = vsel %vm1436, %v1371, 0
        %v1441 = vsel %vm1436, %v1372, 0
        %v1444 = vsel %vm1436, %v1373, 0
        %v1447 = vsel %vm1436, %v1374, 0
        %v1450 = vsel %vm1436, %v1387, 0
        %v1453 = vsel %vm1436, %v1388, 0
        %v1456 = vsel %vm1436, %v1389, 0
        %v1459 = vsel %vm1436, %v1390, 0
        %v1462 = vsel %vm1436, %v1391, 0
        %v1465 = vsel %vm1436, %v1392, 0
        %v1468 = vsel %vm1436, %v1393, 0
        %v1471 = vsel %vm1436, %v1394, 0
        %v1474 = vsel %vm1436, %v1395, 0
        %v1477 = vsel %vm1436, %v1396, 0
        %v1480 = vsel %vm1436, %v1397, 0
        %v1483 = vsel %vm1436, %v1398, 0
        %v1486 = vsel %vm1436, %v1399, 0
        %1488 = vmatprep.subr.bf16.mxu0 0
        %1489 = vmatpush1.bf16.xpose.msra.mxu0 %v1462
        %1490 = vmatprep.subr.bf16.mxu0 0
        %1491 = vmatpush1.bf16.xpose.msra.mxu0 %v1459
        %1492 = vmatprep.subr.bf16.mxu0 0
        %1493 = vmatpush1.bf16.xpose.msra.mxu0 %v1456
        %1494 = vmatprep.subr.bf16.mxu0 0
        %1495 = vmatpush1.bf16.xpose.msra.mxu0 %v1453
        %1496 = vmatprep.subr.bf16.mxu0 0
        %1497 = vmatpush1.bf16.xpose.msra.mxu0 %v1450
        %1498 = vmatprep.subr.bf16.mxu0 0
        %1499 = vmatpush1.bf16.xpose.msra.mxu0 %v1450
        %1500 = vmatprep.subr.bf16.mxu0 0
        %1501 = vmatpush1.bf16.xpose.msra.mxu0 %v1450
        %1502 = vmatprep.subr.bf16.mxu0 0
        %1503 = vmatpush1.bf16.xpose.msra.mxu0 %v1450
        %1504 = vmatprep.subr.bf16.mxu0 0
        %1505 = vmatpush2.bf16.xpose.msra.mxu0 %v1486
        %1506 = vmatprep.subr.bf16.mxu0 0
        %1507 = vmatpush2.bf16.xpose.msra.mxu0 %v1483
        %1508 = vmatprep.subr.bf16.mxu0 0
        %1509 = vmatpush2.bf16.xpose.msra.mxu0 %v1480
        %1510 = vmatprep.subr.bf16.mxu0 0
        %1511 = vmatpush2.bf16.xpose.msra.mxu0 %v1477
        %1512 = vmatprep.subr.bf16.mxu0 0
        %1513 = vmatpush2.bf16.xpose.msra.mxu0 %v1474
        %1514 = vmatprep.subr.bf16.mxu0 0
        %1515 = vmatpush2.bf16.xpose.msra.mxu0 %v1471
        %1516 = vmatprep.subr.bf16.mxu0 0
        %1517 = vmatpush2.bf16.xpose.msra.mxu0 %v1468
        %1518 = vmatprep.subr.bf16.mxu0 0
        %1519 = vmatpush2.bf16.xpose.msra.mxu0 %v1465
        %1520 = vmatprep.mubr.bf16.mxu0 0
        %1521 = vmatmul.mubr.bf16.gmra.mxu0 %v1438
        %v1522 = vpop.f32.mrf.mxu0
        %v1523 = vadd.f32 0.0, %v1522
        %v1524 = vpop.f32.mrf.mxu0
        %v1525 = vadd.f32 0.0, %v1524
        %v1526 = vpop.f32.mrf.mxu0
        %v1527 = vadd.f32 0.0, %v1526
        %v1528 = vpop.f32.mrf.mxu0
        %v1529 = vadd.f32 0.0, %v1528
        %1530 = vmatprep.mubr.bf16.mxu0 0
        %1531 = vmatmul.mubr.bf16.gmra.mxu0 %v1441
        %v1532 = vpop.f32.mrf.mxu0
        %v1533 = vadd.f32 0.0, %v1532
        %v1534 = vpop.f32.mrf.mxu0
        %v1535 = vadd.f32 0.0, %v1534
        %v1536 = vpop.f32.mrf.mxu0
        %v1537 = vadd.f32 0.0, %v1536
        %v1538 = vpop.f32.mrf.mxu0
        %v1539 = vadd.f32 0.0, %v1538
        %1540 = vmatprep.mubr.bf16.mxu0 0
        %1541 = vmatmul.mubr.bf16.gmra.mxu0 %v1444
        %v1542 = vpop.f32.mrf.mxu0
        %v1543 = vadd.f32 0.0, %v1542
        %v1544 = vpop.f32.mrf.mxu0
        %v1545 = vadd.f32 0.0, %v1544
        %v1546 = vpop.f32.mrf.mxu0
        %v1547 = vadd.f32 0.0, %v1546
        %v1548 = vpop.f32.mrf.mxu0
        %v1549 = vadd.f32 0.0, %v1548
        %1550 = vmatprep.mubr.bf16.mxu0 0
        %1551 = vmatmul.mubr.bf16.gmra.mxu0 %v1447
        %v1552 = vpop.f32.mrf.mxu0
        %v1553 = vadd.f32 0.0, %v1552
        %v1554 = vpop.f32.mrf.mxu0
        %v1555 = vadd.f32 0.0, %v1554
        %v1556 = vpop.f32.mrf.mxu0
        %v1557 = vadd.f32 0.0, %v1556
        %v1558 = vpop.f32.mrf.mxu0
        %v1559 = vadd.f32 0.0, %v1558
        %1560 = vdwg.mxu0
        %v1562 = vsel %vm1436, %v1375, 0
        %v1565 = vsel %vm1436, %v1376, 0
        %v1568 = vsel %vm1436, %v1377, 0
        %v1571 = vsel %vm1436, %v1378, 0
        %v1574 = vsel %vm1436, %v1400, 0
        %v1577 = vsel %vm1436, %v1401, 0
        %v1580 = vsel %vm1436, %v1402, 0
        %v1583 = vsel %vm1436, %v1403, 0
        %v1586 = vsel %vm1436, %v1404, 0
        %v1589 = vsel %vm1436, %v1405, 0
        %v1592 = vsel %vm1436, %v1406, 0
        %v1595 = vsel %vm1436, %v1407, 0
        %v1598 = vsel %vm1436, %v1408, 0
        %v1601 = vsel %vm1436, %v1409, 0
        %v1604 = vsel %vm1436, %v1410, 0
        %v1607 = vsel %vm1436, %v1411, 0
        %1609 = vmatprep.subr.bf16.mxu0 0
        %1610 = vmatpush1.bf16.xpose.msra.mxu0 %v1583
        %1611 = vmatprep.subr.bf16.mxu0 0
        %1612 = vmatpush1.bf16.xpose.msra.mxu0 %v1580
        %1613 = vmatprep.subr.bf16.mxu0 0
        %1614 = vmatpush1.bf16.xpose.msra.mxu0 %v1577
        %1615 = vmatprep.subr.bf16.mxu0 0
        %1616 = vmatpush1.bf16.xpose.msra.mxu0 %v1574
        %1617 = vmatprep.subr.bf16.mxu0 0
        %1618 = vmatpush1.bf16.xpose.msra.mxu0 %v1450
        %1619 = vmatprep.subr.bf16.mxu0 0
        %1620 = vmatpush1.bf16.xpose.msra.mxu0 %v1450
        %1621 = vmatprep.subr.bf16.mxu0 0
        %1622 = vmatpush1.bf16.xpose.msra.mxu0 %v1450
        %1623 = vmatprep.subr.bf16.mxu0 0
        %1624 = vmatpush1.bf16.xpose.msra.mxu0 %v1450
        %1625 = vmatprep.subr.bf16.mxu0 0
        %1626 = vmatpush2.bf16.xpose.msra.mxu0 %v1607
        %1627 = vmatprep.subr.bf16.mxu0 0
        %1628 = vmatpush2.bf16.xpose.msra.mxu0 %v1604
        %1629 = vmatprep.subr.bf16.mxu0 0
        %1630 = vmatpush2.bf16.xpose.msra.mxu0 %v1601
        %1631 = vmatprep.subr.bf16.mxu0 0
        %1632 = vmatpush2.bf16.xpose.msra.mxu0 %v1598
        %1633 = vmatprep.subr.bf16.mxu0 0
        %1634 = vmatpush2.bf16.xpose.msra.mxu0 %v1595
        %1635 = vmatprep.subr.bf16.mxu0 0
        %1636 = vmatpush2.bf16.xpose.msra.mxu0 %v1592
        %1637 = vmatprep.subr.bf16.mxu0 0
        %1638 = vmatpush2.bf16.xpose.msra.mxu0 %v1589
        %1639 = vmatprep.subr.bf16.mxu0 0
        %1640 = vmatpush2.bf16.xpose.msra.mxu0 %v1586
        %1641 = vmatprep.mubr.bf16.mxu0 0
        %1642 = vmatmul.mubr.bf16.gmra.mxu0 %v1562
        %v1643 = vpop.f32.mrf.mxu0
        %v1644 = vadd.f32 0.0, %v1643
        %v1645 = vpop.f32.mrf.mxu0
        %v1646 = vadd.f32 0.0, %v1645
        %v1647 = vpop.f32.mrf.mxu0
        %v1648 = vadd.f32 0.0, %v1647
        %v1649 = vpop.f32.mrf.mxu0
        %v1650 = vadd.f32 0.0, %v1649
        %1651 = vmatprep.mubr.bf16.mxu0 0
        %1652 = vmatmul.mubr.bf16.gmra.mxu0 %v1565
        %v1653 = vpop.f32.mrf.mxu0
        %v1654 = vadd.f32 0.0, %v1653
        %v1655 = vpop.f32.mrf.mxu0
        %v1656 = vadd.f32 0.0, %v1655
        %v1657 = vpop.f32.mrf.mxu0
        %v1658 = vadd.f32 0.0, %v1657
        %v1659 = vpop.f32.mrf.mxu0
        %v1660 = vadd.f32 0.0, %v1659
        %1661 = vmatprep.mubr.bf16.mxu0 0
        %1662 = vmatmul.mubr.bf16.gmra.mxu0 %v1568
        %v1663 = vpop.f32.mrf.mxu0
        %v1664 = vadd.f32 0.0, %v1663
        %v1665 = vpop.f32.mrf.mxu0
        %v1666 = vadd.f32 0.0, %v1665
        %v1667 = vpop.f32.mrf.mxu0
        %v1668 = vadd.f32 0.0, %v1667
        %v1669 = vpop.f32.mrf.mxu0
        %v1670 = vadd.f32 0.0, %v1669
        %1671 = vmatprep.mubr.bf16.mxu0 0
        %1672 = vmatmul.mubr.bf16.gmra.mxu0 %v1571
        %v1673 = vpop.f32.mrf.mxu0
        %v1674 = vadd.f32 0.0, %v1673
        %v1675 = vpop.f32.mrf.mxu0
        %v1676 = vadd.f32 0.0, %v1675
        %v1677 = vpop.f32.mrf.mxu0
        %v1678 = vadd.f32 0.0, %v1677
        %v1679 = vpop.f32.mrf.mxu0
        %v1680 = vadd.f32 0.0, %v1679
        %1681 = vdwg.mxu0
        %v1683 = vsel %vm1436, %v1379, 0
        %v1686 = vsel %vm1436, %v1380, 0
        %v1689 = vsel %vm1436, %v1381, 0
        %v1692 = vsel %vm1436, %v1382, 0
        %v1695 = vsel %vm1436, %v1412, 0
        %v1698 = vsel %vm1436, %v1413, 0
        %v1701 = vsel %vm1436, %v1414, 0
        %v1704 = vsel %vm1436, %v1415, 0
        %v1707 = vsel %vm1436, %v1416, 0
        %v1710 = vsel %vm1436, %v1417, 0
        %v1713 = vsel %vm1436, %v1418, 0
        %v1716 = vsel %vm1436, %v1419, 0
        %v1719 = vsel %vm1436, %v1420, 0
        %v1722 = vsel %vm1436, %v1421, 0
        %v1725 = vsel %vm1436, %v1422, 0
        %v1728 = vsel %vm1436, %v1423, 0
        %1730 = vmatprep.subr.bf16.mxu0 0
        %1731 = vmatpush1.bf16.xpose.msra.mxu0 %v1704
        %1732 = vmatprep.subr.bf16.mxu0 0
        %1733 = vmatpush1.bf16.xpose.msra.mxu0 %v1701
        %1734 = vmatprep.subr.bf16.mxu0 0
        %1735 = vmatpush1.bf16.xpose.msra.mxu0 %v1698
        %1736 = vmatprep.subr.bf16.mxu0 0
        %1737 = vmatpush1.bf16.xpose.msra.mxu0 %v1695
        %1738 = vmatprep.subr.bf16.mxu0 0
        %1739 = vmatpush1.bf16.xpose.msra.mxu0 %v1450
        %1740 = vmatprep.subr.bf16.mxu0 0
        %1741 = vmatpush1.bf16.xpose.msra.mxu0 %v1450
        %1742 = vmatprep.subr.bf16.mxu0 0
        %1743 = vmatpush1.bf16.xpose.msra.mxu0 %v1450
        %1744 = vmatprep.subr.bf16.mxu0 0
        %1745 = vmatpush1.bf16.xpose.msra.mxu0 %v1450
        %1746 = vmatprep.subr.bf16.mxu0 0
        %1747 = vmatpush2.bf16.xpose.msra.mxu0 %v1728
        %1748 = vmatprep.subr.bf16.mxu0 0
        %1749 = vmatpush2.bf16.xpose.msra.mxu0 %v1725
        %1750 = vmatprep.subr.bf16.mxu0 0
        %1751 = vmatpush2.bf16.xpose.msra.mxu0 %v1722
        %1752 = vmatprep.subr.bf16.mxu0 0
        %1753 = vmatpush2.bf16.xpose.msra.mxu0 %v1719
        %1754 = vmatprep.subr.bf16.mxu0 0
        %1755 = vmatpush2.bf16.xpose.msra.mxu0 %v1716
        %1756 = vmatprep.subr.bf16.mxu0 0
        %1757 = vmatpush2.bf16.xpose.msra.mxu0 %v1713
        %1758 = vmatprep.subr.bf16.mxu0 0
        %1759 = vmatpush2.bf16.xpose.msra.mxu0 %v1710
        %1760 = vmatprep.subr.bf16.mxu0 0
        %1761 = vmatpush2.bf16.xpose.msra.mxu0 %v1707
        %1762 = vmatprep.mubr.bf16.mxu0 0
        %1763 = vmatmul.mubr.bf16.gmra.mxu0 %v1683
        %v1764 = vpop.f32.mrf.mxu0
        %v1765 = vadd.f32 0.0, %v1764
        %v1766 = vpop.f32.mrf.mxu0
        %v1767 = vadd.f32 0.0, %v1766
        %v1768 = vpop.f32.mrf.mxu0
        %v1769 = vadd.f32 0.0, %v1768
        %v1770 = vpop.f32.mrf.mxu0
        %v1771 = vadd.f32 0.0, %v1770
        %1772 = vmatprep.mubr.bf16.mxu0 0
        %1773 = vmatmul.mubr.bf16.gmra.mxu0 %v1686
        %v1774 = vpop.f32.mrf.mxu0
        %v1775 = vadd.f32 0.0, %v1774
        %v1776 = vpop.f32.mrf.mxu0
        %v1777 = vadd.f32 0.0, %v1776
        %v1778 = vpop.f32.mrf.mxu0
        %v1779 = vadd.f32 0.0, %v1778
        %v1780 = vpop.f32.mrf.mxu0
        %v1781 = vadd.f32 0.0, %v1780
        %1782 = vmatprep.mubr.bf16.mxu0 0
        %1783 = vmatmul.mubr.bf16.gmra.mxu0 %v1689
        %v1784 = vpop.f32.mrf.mxu0
        %v1785 = vadd.f32 0.0, %v1784
        %v1786 = vpop.f32.mrf.mxu0
        %v1787 = vadd.f32 0.0, %v1786
        %v1788 = vpop.f32.mrf.mxu0
        %v1789 = vadd.f32 0.0, %v1788
        %v1790 = vpop.f32.mrf.mxu0
        %v1791 = vadd.f32 0.0, %v1790
        %1792 = vmatprep.mubr.bf16.mxu0 0
        %1793 = vmatmul.mubr.bf16.gmra.mxu0 %v1692
        %v1794 = vpop.f32.mrf.mxu0
        %v1795 = vadd.f32 0.0, %v1794
        %v1796 = vpop.f32.mrf.mxu0
        %v1797 = vadd.f32 0.0, %v1796
        %v1798 = vpop.f32.mrf.mxu0
        %v1799 = vadd.f32 0.0, %v1798
        %v1800 = vpop.f32.mrf.mxu0
        %v1801 = vadd.f32 0.0, %v1800
        %1802 = vdwg.mxu0
        %v1804 = vsel %vm1436, %v1383, 0
        %v1807 = vsel %vm1436, %v1384, 0
        %v1810 = vsel %vm1436, %v1385, 0
        %v1813 = vsel %vm1436, %v1386, 0
        %v1816 = vsel %vm1436, %v1424, 0
        %v1819 = vsel %vm1436, %v1425, 0
        %v1822 = vsel %vm1436, %v1426, 0
        %v1825 = vsel %vm1436, %v1427, 0
        %v1828 = vsel %vm1436, %v1428, 0
        %v1831 = vsel %vm1436, %v1429, 0
        %v1834 = vsel %vm1436, %v1430, 0
        %v1837 = vsel %vm1436, %v1431, 0
        %v1840 = vsel %vm1436, %v1432, 0
        %v1843 = vsel %vm1436, %v1433, 0
        %v1846 = vsel %vm1436, %v1434, 0
        %v1849 = vsel %vm1436, %v1435, 0
        %1851 = vmatprep.subr.bf16.mxu0 0
        %1852 = vmatpush1.bf16.xpose.msra.mxu0 %v1825
        %1853 = vmatprep.subr.bf16.mxu0 0
        %1854 = vmatpush1.bf16.xpose.msra.mxu0 %v1822
        %1855 = vmatprep.subr.bf16.mxu0 0
        %1856 = vmatpush1.bf16.xpose.msra.mxu0 %v1819
        %1857 = vmatprep.subr.bf16.mxu0 0
        %1858 = vmatpush1.bf16.xpose.msra.mxu0 %v1816
        %1859 = vmatprep.subr.bf16.mxu0 0
        %1860 = vmatpush1.bf16.xpose.msra.mxu0 %v1450
        %1861 = vmatprep.subr.bf16.mxu0 0
        %1862 = vmatpush1.bf16.xpose.msra.mxu0 %v1450
        %1863 = vmatprep.subr.bf16.mxu0 0
        %1864 = vmatpush1.bf16.xpose.msra.mxu0 %v1450
        %1865 = vmatprep.subr.bf16.mxu0 0
        %1866 = vmatpush1.bf16.xpose.msra.mxu0 %v1450
        %1867 = vmatprep.subr.bf16.mxu0 0
        %1868 = vmatpush2.bf16.xpose.msra.mxu0 %v1849
        %1869 = vmatprep.subr.bf16.mxu0 0
        %1870 = vmatpush2.bf16.xpose.msra.mxu0 %v1846
        %1871 = vmatprep.subr.bf16.mxu0 0
        %1872 = vmatpush2.bf16.xpose.msra.mxu0 %v1843
        %1873 = vmatprep.subr.bf16.mxu0 0
        %1874 = vmatpush2.bf16.xpose.msra.mxu0 %v1840
        %1875 = vmatprep.subr.bf16.mxu0 0
        %1876 = vmatpush2.bf16.xpose.msra.mxu0 %v1837
        %1877 = vmatprep.subr.bf16.mxu0 0
        %1878 = vmatpush2.bf16.xpose.msra.mxu0 %v1834
        %1879 = vmatprep.subr.bf16.mxu0 0
        %1880 = vmatpush2.bf16.xpose.msra.mxu0 %v1831
        %1881 = vmatprep.subr.bf16.mxu0 0
        %1882 = vmatpush2.bf16.xpose.msra.mxu0 %v1828
        %1883 = vmatprep.mubr.bf16.mxu0 0
        %1884 = vmatmul.mubr.bf16.gmra.mxu0 %v1804
        %v1885 = vpop.f32.mrf.mxu0
        %v1886 = vadd.f32 0.0, %v1885
        %v1887 = vpop.f32.mrf.mxu0
        %v1888 = vadd.f32 0.0, %v1887
        %v1889 = vpop.f32.mrf.mxu0
        %v1890 = vadd.f32 0.0, %v1889
        %v1891 = vpop.f32.mrf.mxu0
        %v1892 = vadd.f32 0.0, %v1891
        %1893 = vmatprep.mubr.bf16.mxu0 0
        %1894 = vmatmul.mubr.bf16.gmra.mxu0 %v1807
        %v1895 = vpop.f32.mrf.mxu0
        %v1896 = vadd.f32 0.0, %v1895
        %v1897 = vpop.f32.mrf.mxu0
        %v1898 = vadd.f32 0.0, %v1897
        %v1899 = vpop.f32.mrf.mxu0
        %v1900 = vadd.f32 0.0, %v1899
        %v1901 = vpop.f32.mrf.mxu0
        %v1902 = vadd.f32 0.0, %v1901
        %1903 = vmatprep.mubr.bf16.mxu0 0
        %1904 = vmatmul.mubr.bf16.gmra.mxu0 %v1810
        %v1905 = vpop.f32.mrf.mxu0
        %v1906 = vadd.f32 0.0, %v1905
        %v1907 = vpop.f32.mrf.mxu0
        %v1908 = vadd.f32 0.0, %v1907
        %v1909 = vpop.f32.mrf.mxu0
        %v1910 = vadd.f32 0.0, %v1909
        %v1911 = vpop.f32.mrf.mxu0
        %v1912 = vadd.f32 0.0, %v1911
        %1913 = vmatprep.mubr.bf16.mxu0 0
        %1914 = vmatmul.mubr.bf16.gmra.mxu0 %v1813
        %v1915 = vpop.f32.mrf.mxu0
        %v1916 = vadd.f32 0.0, %v1915
        %v1917 = vpop.f32.mrf.mxu0
        %v1918 = vadd.f32 0.0, %v1917
        %v1919 = vpop.f32.mrf.mxu0
        %v1920 = vadd.f32 0.0, %v1919
        %v1921 = vpop.f32.mrf.mxu0
        %v1922 = vadd.f32 0.0, %v1921
        %1923 = vdwg.mxu0
        %v1924 = vmul.f32 %v1523, %v1355
        %v1925 = vmul.f32 %v1525, %v1363
        %v1926 = vmul.f32 %v1527, %v1356
        %v1927 = vmul.f32 %v1529, %v1364
        %v1928 = vmul.f32 %v1533, %v1357
        %v1929 = vmul.f32 %v1535, %v1365
        %v1930 = vmul.f32 %v1537, %v1358
        %v1931 = vmul.f32 %v1539, %v1366
        %v1932 = vmul.f32 %v1543, %v1359
        %v1933 = vmul.f32 %v1545, %v1367
        %v1934 = vmul.f32 %v1547, %v1360
        %v1935 = vmul.f32 %v1549, %v1368
        %v1936 = vmul.f32 %v1553, %v1361
        %v1937 = vmul.f32 %v1555, %v1369
        %v1938 = vmul.f32 %v1557, %v1362
        %v1939 = vmul.f32 %v1559, %v1370
        %v1940 = vmul.f32 %v1644, %v1355
        %v1941 = vmul.f32 %v1646, %v1363
        %v1942 = vmul.f32 %v1648, %v1356
        %v1943 = vmul.f32 %v1650, %v1364
        %v1944 = vmul.f32 %v1654, %v1357
        %v1945 = vmul.f32 %v1656, %v1365
        %v1946 = vmul.f32 %v1658, %v1358
        %v1947 = vmul.f32 %v1660, %v1366
        %v1948 = vmul.f32 %v1664, %v1359
        %v1949 = vmul.f32 %v1666, %v1367
        %v1950 = vmul.f32 %v1668, %v1360
        %v1951 = vmul.f32 %v1670, %v1368
        %v1952 = vmul.f32 %v1674, %v1361
        %v1953 = vmul.f32 %v1676, %v1369
        %v1954 = vmul.f32 %v1678, %v1362
        %v1955 = vmul.f32 %v1680, %v1370
        %v1956 = vmul.f32 %v1765, %v1355
        %v1957 = vmul.f32 %v1767, %v1363
        %v1958 = vmul.f32 %v1769, %v1356
        %v1959 = vmul.f32 %v1771, %v1364
        %v1960 = vmul.f32 %v1775, %v1357
        %v1961 = vmul.f32 %v1777, %v1365
        %v1962 = vmul.f32 %v1779, %v1358
        %v1963 = vmul.f32 %v1781, %v1366
        %v1964 = vmul.f32 %v1785, %v1359
        %v1965 = vmul.f32 %v1787, %v1367
        %v1966 = vmul.f32 %v1789, %v1360
        %v1967 = vmul.f32 %v1791, %v1368
        %v1968 = vmul.f32 %v1795, %v1361
        %v1969 = vmul.f32 %v1797, %v1369
        %v1970 = vmul.f32 %v1799, %v1362
        %v1971 = vmul.f32 %v1801, %v1370
        %v1972 = vmul.f32 %v1886, %v1355
        %v1973 = vmul.f32 %v1888, %v1363
        %v1974 = vmul.f32 %v1890, %v1356
        %v1975 = vmul.f32 %v1892, %v1364
        %v1976 = vmul.f32 %v1896, %v1357
        %v1977 = vmul.f32 %v1898, %v1365
        %v1978 = vmul.f32 %v1900, %v1358
        %v1979 = vmul.f32 %v1902, %v1366
        %v1980 = vmul.f32 %v1906, %v1359
        %v1981 = vmul.f32 %v1908, %v1367
        %v1982 = vmul.f32 %v1910, %v1360
        %v1983 = vmul.f32 %v1912, %v1368
        %v1984 = vmul.f32 %v1916, %v1361
        %v1985 = vmul.f32 %v1918, %v1369
        %v1986 = vmul.f32 %v1920, %v1362
        %v1987 = vmul.f32 %v1922, %v1370
        %2020 = vrot.lane.b32.xlu0 %v1924, 64
        %v2021 = vpop.permute.xlu0 %2020
        %2022 = vrot.lane.b32.xlu0 %v1926, 64
        %v2023 = vpop.permute.xlu0 %2022
        %2024 = vrot.lane.b32.xlu0 %v1928, 64
        %v2025 = vpop.permute.xlu0 %2024
        %2026 = vrot.lane.b32.xlu0 %v1930, 64
        %v2027 = vpop.permute.xlu0 %2026
        %2028 = vrot.lane.b32.xlu0 %v1932, 64
        %v2029 = vpop.permute.xlu0 %2028
        %2030 = vrot.lane.b32.xlu0 %v1934, 64
        %v2031 = vpop.permute.xlu0 %2030
        %2032 = vrot.lane.b32.xlu0 %v1936, 64
        %v2033 = vpop.permute.xlu0 %2032
        %2034 = vrot.lane.b32.xlu0 %v1938, 64
        %v2035 = vpop.permute.xlu0 %2034
        %2036 = vrot.lane.b32.xlu0 %v1940, 64
        %v2037 = vpop.permute.xlu0 %2036
        %2038 = vrot.lane.b32.xlu0 %v1942, 64
        %v2039 = vpop.permute.xlu0 %2038
        %2040 = vrot.lane.b32.xlu0 %v1944, 64
        %v2041 = vpop.permute.xlu0 %2040
        %2042 = vrot.lane.b32.xlu0 %v1946, 64
        %v2043 = vpop.permute.xlu0 %2042
        %2044 = vrot.lane.b32.xlu0 %v1948, 64
        %v2045 = vpop.permute.xlu0 %2044
        %2046 = vrot.lane.b32.xlu0 %v1950, 64
        %v2047 = vpop.permute.xlu0 %2046
        %2048 = vrot.lane.b32.xlu0 %v1952, 64
        %v2049 = vpop.permute.xlu0 %2048
        %2050 = vrot.lane.b32.xlu0 %v1954, 64
        %v2051 = vpop.permute.xlu0 %2050
        %2052 = vrot.lane.b32.xlu0 %v1956, 64
        %v2053 = vpop.permute.xlu0 %2052
        %2054 = vrot.lane.b32.xlu0 %v1958, 64
        %v2055 = vpop.permute.xlu0 %2054
        %2056 = vrot.lane.b32.xlu0 %v1960, 64
        %v2057 = vpop.permute.xlu0 %2056
        %2058 = vrot.lane.b32.xlu0 %v1962, 64
        %v2059 = vpop.permute.xlu0 %2058
        %2060 = vrot.lane.b32.xlu0 %v1964, 64
        %v2061 = vpop.permute.xlu0 %2060
        %2062 = vrot.lane.b32.xlu0 %v1966, 64
        %v2063 = vpop.permute.xlu0 %2062
        %2064 = vrot.lane.b32.xlu0 %v1968, 64
        %v2065 = vpop.permute.xlu0 %2064
        %2066 = vrot.lane.b32.xlu0 %v1970, 64
        %v2067 = vpop.permute.xlu0 %2066
        %2068 = vrot.lane.b32.xlu0 %v1972, 64
        %v2069 = vpop.permute.xlu0 %2068
        %2070 = vrot.lane.b32.xlu0 %v1974, 64
        %v2071 = vpop.permute.xlu0 %2070
        %2072 = vrot.lane.b32.xlu0 %v1976, 64
        %v2073 = vpop.permute.xlu0 %2072
        %2074 = vrot.lane.b32.xlu0 %v1978, 64
        %v2075 = vpop.permute.xlu0 %2074
        %2076 = vrot.lane.b32.xlu0 %v1980, 64
        %v2077 = vpop.permute.xlu0 %2076
        %2078 = vrot.lane.b32.xlu0 %v1982, 64
        %v2079 = vpop.permute.xlu0 %2078
        %2080 = vrot.lane.b32.xlu0 %v1984, 64
        %v2081 = vpop.permute.xlu0 %2080
        %2082 = vrot.lane.b32.xlu0 %v1986, 64
        %v2083 = vpop.permute.xlu0 %2082
        %v2116 = vadd.f32 %v1924, %v2021
        %v2117 = vadd.f32 %v1926, %v2023
        %v2118 = vadd.f32 %v1928, %v2025
        %v2119 = vadd.f32 %v1930, %v2027
        %v2120 = vadd.f32 %v1932, %v2029
        %v2121 = vadd.f32 %v1934, %v2031
        %v2122 = vadd.f32 %v1936, %v2033
        %v2123 = vadd.f32 %v1938, %v2035
        %v2124 = vadd.f32 %v1940, %v2037
        %v2125 = vadd.f32 %v1942, %v2039
        %v2126 = vadd.f32 %v1944, %v2041
        %v2127 = vadd.f32 %v1946, %v2043
        %v2128 = vadd.f32 %v1948, %v2045
        %v2129 = vadd.f32 %v1950, %v2047
        %v2130 = vadd.f32 %v1952, %v2049
        %v2131 = vadd.f32 %v1954, %v2051
        %v2132 = vadd.f32 %v1956, %v2053
        %v2133 = vadd.f32 %v1958, %v2055
        %v2134 = vadd.f32 %v1960, %v2057
        %v2135 = vadd.f32 %v1962, %v2059
        %v2136 = vadd.f32 %v1964, %v2061
        %v2137 = vadd.f32 %v1966, %v2063
        %v2138 = vadd.f32 %v1968, %v2065
        %v2139 = vadd.f32 %v1970, %v2067
        %v2140 = vadd.f32 %v1972, %v2069
        %v2141 = vadd.f32 %v1974, %v2071
        %v2142 = vadd.f32 %v1976, %v2073
        %v2143 = vadd.f32 %v1978, %v2075
        %v2144 = vadd.f32 %v1980, %v2077
        %v2145 = vadd.f32 %v1982, %v2079
        %v2146 = vadd.f32 %v1984, %v2081
        %v2147 = vadd.f32 %v1986, %v2083
        %v2148 = vadd.f32 %v2116, %v1925
        %v2149 = vadd.f32 %v2117, %v1927
        %v2150 = vadd.f32 %v2118, %v1929
        %v2151 = vadd.f32 %v2119, %v1931
        %v2152 = vadd.f32 %v2120, %v1933
        %v2153 = vadd.f32 %v2121, %v1935
        %v2154 = vadd.f32 %v2122, %v1937
        %v2155 = vadd.f32 %v2123, %v1939
        %v2156 = vadd.f32 %v2124, %v1941
        %v2157 = vadd.f32 %v2125, %v1943
        %v2158 = vadd.f32 %v2126, %v1945
        %v2159 = vadd.f32 %v2127, %v1947
        %v2160 = vadd.f32 %v2128, %v1949
        %v2161 = vadd.f32 %v2129, %v1951
        %v2162 = vadd.f32 %v2130, %v1953
        %v2163 = vadd.f32 %v2131, %v1955
        %v2164 = vadd.f32 %v2132, %v1957
        %v2165 = vadd.f32 %v2133, %v1959
        %v2166 = vadd.f32 %v2134, %v1961
        %v2167 = vadd.f32 %v2135, %v1963
        %v2168 = vadd.f32 %v2136, %v1965
        %v2169 = vadd.f32 %v2137, %v1967
        %v2170 = vadd.f32 %v2138, %v1969
        %v2171 = vadd.f32 %v2139, %v1971
        %v2172 = vadd.f32 %v2140, %v1973
        %v2173 = vadd.f32 %v2141, %v1975
        %v2174 = vadd.f32 %v2142, %v1977
        %v2175 = vadd.f32 %v2143, %v1979
        %v2176 = vadd.f32 %v2144, %v1981
        %v2177 = vadd.f32 %v2145, %v1983
        %v2178 = vadd.f32 %v2146, %v1985
        %v2179 = vadd.f32 %v2147, %v1987
        %2212 = vrot.lane.b32.xlu0 %v1925, 64
        %v2213 = vpop.permute.xlu0 %2212
        %2214 = vrot.lane.b32.xlu0 %v1927, 64
        %v2215 = vpop.permute.xlu0 %2214
        %2216 = vrot.lane.b32.xlu0 %v1929, 64
        %v2217 = vpop.permute.xlu0 %2216
        %2218 = vrot.lane.b32.xlu0 %v1931, 64
        %v2219 = vpop.permute.xlu0 %2218
        %2220 = vrot.lane.b32.xlu0 %v1933, 64
        %v2221 = vpop.permute.xlu0 %2220
        %2222 = vrot.lane.b32.xlu0 %v1935, 64
        %v2223 = vpop.permute.xlu0 %2222
        %2224 = vrot.lane.b32.xlu0 %v1937, 64
        %v2225 = vpop.permute.xlu0 %2224
        %2226 = vrot.lane.b32.xlu0 %v1939, 64
        %v2227 = vpop.permute.xlu0 %2226
        %2228 = vrot.lane.b32.xlu0 %v1941, 64
        %v2229 = vpop.permute.xlu0 %2228
        %2230 = vrot.lane.b32.xlu0 %v1943, 64
        %v2231 = vpop.permute.xlu0 %2230
        %2232 = vrot.lane.b32.xlu0 %v1945, 64
        %v2233 = vpop.permute.xlu0 %2232
        %2234 = vrot.lane.b32.xlu0 %v1947, 64
        %v2235 = vpop.permute.xlu0 %2234
        %2236 = vrot.lane.b32.xlu0 %v1949, 64
        %v2237 = vpop.permute.xlu0 %2236
        %2238 = vrot.lane.b32.xlu0 %v1951, 64
        %v2239 = vpop.permute.xlu0 %2238
        %2240 = vrot.lane.b32.xlu0 %v1953, 64
        %v2241 = vpop.permute.xlu0 %2240
        %2242 = vrot.lane.b32.xlu0 %v1955, 64
        %v2243 = vpop.permute.xlu0 %2242
        %2244 = vrot.lane.b32.xlu0 %v1957, 64
        %v2245 = vpop.permute.xlu0 %2244
        %2246 = vrot.lane.b32.xlu0 %v1959, 64
        %v2247 = vpop.permute.xlu0 %2246
        %2248 = vrot.lane.b32.xlu0 %v1961, 64
        %v2249 = vpop.permute.xlu0 %2248
        %2250 = vrot.lane.b32.xlu0 %v1963, 64
        %v2251 = vpop.permute.xlu0 %2250
        %2252 = vrot.lane.b32.xlu0 %v1965, 64
        %v2253 = vpop.permute.xlu0 %2252
        %2254 = vrot.lane.b32.xlu0 %v1967, 64
        %v2255 = vpop.permute.xlu0 %2254
        %2256 = vrot.lane.b32.xlu0 %v1969, 64
        %v2257 = vpop.permute.xlu0 %2256
        %2258 = vrot.lane.b32.xlu0 %v1971, 64
        %v2259 = vpop.permute.xlu0 %2258
        %2260 = vrot.lane.b32.xlu0 %v1973, 64
        %v2261 = vpop.permute.xlu0 %2260
        %2262 = vrot.lane.b32.xlu0 %v1975, 64
        %v2263 = vpop.permute.xlu0 %2262
        %2264 = vrot.lane.b32.xlu0 %v1977, 64
        %v2265 = vpop.permute.xlu0 %2264
        %2266 = vrot.lane.b32.xlu0 %v1979, 64
        %v2267 = vpop.permute.xlu0 %2266
        %2268 = vrot.lane.b32.xlu0 %v1981, 64
        %v2269 = vpop.permute.xlu0 %2268
        %2270 = vrot.lane.b32.xlu0 %v1983, 64
        %v2271 = vpop.permute.xlu0 %2270
        %2272 = vrot.lane.b32.xlu0 %v1985, 64
        %v2273 = vpop.permute.xlu0 %2272
        %2274 = vrot.lane.b32.xlu0 %v1987, 64
        %v2275 = vpop.permute.xlu0 %2274
        %v2308 = vadd.f32 %v2148, %v2213
        %v2309 = vadd.f32 %v2149, %v2215
        %v2310 = vadd.f32 %v2150, %v2217
        %v2311 = vadd.f32 %v2151, %v2219
        %v2312 = vadd.f32 %v2152, %v2221
        %v2313 = vadd.f32 %v2153, %v2223
        %v2314 = vadd.f32 %v2154, %v2225
        %v2315 = vadd.f32 %v2155, %v2227
        %v2316 = vadd.f32 %v2156, %v2229
        %v2317 = vadd.f32 %v2157, %v2231
        %v2318 = vadd.f32 %v2158, %v2233
        %v2319 = vadd.f32 %v2159, %v2235
        %v2320 = vadd.f32 %v2160, %v2237
        %v2321 = vadd.f32 %v2161, %v2239
        %v2322 = vadd.f32 %v2162, %v2241
        %v2323 = vadd.f32 %v2163, %v2243
        %v2324 = vadd.f32 %v2164, %v2245
        %v2325 = vadd.f32 %v2165, %v2247
        %v2326 = vadd.f32 %v2166, %v2249
        %v2327 = vadd.f32 %v2167, %v2251
        %v2328 = vadd.f32 %v2168, %v2253
        %v2329 = vadd.f32 %v2169, %v2255
        %v2330 = vadd.f32 %v2170, %v2257
        %v2331 = vadd.f32 %v2171, %v2259
        %v2332 = vadd.f32 %v2172, %v2261
        %v2333 = vadd.f32 %v2173, %v2263
        %v2334 = vadd.f32 %v2174, %v2265
        %v2335 = vadd.f32 %v2175, %v2267
        %v2336 = vadd.f32 %v2176, %v2269
        %v2337 = vadd.f32 %v2177, %v2271
        %v2338 = vadd.f32 %v2178, %v2273
        %v2339 = vadd.f32 %v2179, %v2275
        %v2340 = vmax.f32 %v2308, 0.0
        %v2341 = vmax.f32 %v2309, 0.0
        %v2342 = vmax.f32 %v2310, 0.0
        %v2343 = vmax.f32 %v2311, 0.0
        %v2344 = vmax.f32 %v2312, 0.0
        %v2345 = vmax.f32 %v2313, 0.0
        %v2346 = vmax.f32 %v2314, 0.0
        %v2347 = vmax.f32 %v2315, 0.0
        %v2348 = vmax.f32 %v2316, 0.0
        %v2349 = vmax.f32 %v2317, 0.0
        %v2350 = vmax.f32 %v2318, 0.0
        %v2351 = vmax.f32 %v2319, 0.0
        %v2352 = vmax.f32 %v2320, 0.0
        %v2353 = vmax.f32 %v2321, 0.0
        %v2354 = vmax.f32 %v2322, 0.0
        %v2355 = vmax.f32 %v2323, 0.0
        %v2356 = vmax.f32 %v2324, 0.0
        %v2357 = vmax.f32 %v2325, 0.0
        %v2358 = vmax.f32 %v2326, 0.0
        %v2359 = vmax.f32 %v2327, 0.0
        %v2360 = vmax.f32 %v2328, 0.0
        %v2361 = vmax.f32 %v2329, 0.0
        %v2362 = vmax.f32 %v2330, 0.0
        %v2363 = vmax.f32 %v2331, 0.0
        %v2364 = vmax.f32 %v2332, 0.0
        %v2365 = vmax.f32 %v2333, 0.0
        %v2366 = vmax.f32 %v2334, 0.0
        %v2367 = vmax.f32 %v2335, 0.0
        %v2368 = vmax.f32 %v2336, 0.0
        %v2369 = vmax.f32 %v2337, 0.0
        %v2370 = vmax.f32 %v2338, 0.0
        %v2371 = vmax.f32 %v2339, 0.0
        %v2372 = vmin.f32 %v2340, 1.0
        %v2373 = vmin.f32 %v2341, 1.0
        %v2374 = vmin.f32 %v2342, 1.0
        %v2375 = vmin.f32 %v2343, 1.0
        %v2376 = vmin.f32 %v2344, 1.0
        %v2377 = vmin.f32 %v2345, 1.0
        %v2378 = vmin.f32 %v2346, 1.0
        %v2379 = vmin.f32 %v2347, 1.0
        %v2380 = vmin.f32 %v2348, 1.0
        %v2381 = vmin.f32 %v2349, 1.0
        %v2382 = vmin.f32 %v2350, 1.0
        %v2383 = vmin.f32 %v2351, 1.0
        %v2384 = vmin.f32 %v2352, 1.0
        %v2385 = vmin.f32 %v2353, 1.0
        %v2386 = vmin.f32 %v2354, 1.0
        %v2387 = vmin.f32 %v2355, 1.0
        %v2388 = vmin.f32 %v2356, 1.0
        %v2389 = vmin.f32 %v2357, 1.0
        %v2390 = vmin.f32 %v2358, 1.0
        %v2391 = vmin.f32 %v2359, 1.0
        %v2392 = vmin.f32 %v2360, 1.0
        %v2393 = vmin.f32 %v2361, 1.0
        %v2394 = vmin.f32 %v2362, 1.0
        %v2395 = vmin.f32 %v2363, 1.0
        %v2396 = vmin.f32 %v2364, 1.0
        %v2397 = vmin.f32 %v2365, 1.0
        %v2398 = vmin.f32 %v2366, 1.0
        %v2399 = vmin.f32 %v2367, 1.0
        %v2400 = vmin.f32 %v2368, 1.0
        %v2401 = vmin.f32 %v2369, 1.0
        %v2402 = vmin.f32 %v2370, 1.0
        %v2403 = vmin.f32 %v2371, 1.0
        %2412 = vrot.lane.b32.xlu0 %v1196, 32
        %v2413 = vpop.permute.xlu0 %2412
        %2414 = vrot.lane.b32.xlu0 %v1198, 32
        %v2415 = vpop.permute.xlu0 %2414
        %2416 = vrot.lane.b32.xlu0 %v1200, 32
        %v2417 = vpop.permute.xlu0 %2416
        %2418 = vrot.lane.b32.xlu0 %v1202, 32
        %v2419 = vpop.permute.xlu0 %2418
        %2420 = vrot.lane.b32.xlu0 %v1204, 32
        %v2421 = vpop.permute.xlu0 %2420
        %2422 = vrot.lane.b32.xlu0 %v1206, 32
        %v2423 = vpop.permute.xlu0 %2422
        %2424 = vrot.lane.b32.xlu0 %v1208, 32
        %v2425 = vpop.permute.xlu0 %2424
        %2426 = vrot.lane.b32.xlu0 %v1210, 32
        %v2427 = vpop.permute.xlu0 %2426
        %2444 = vrot.lane.b32.xlu0 %v1211, 64
        %v2445 = vpop.permute.xlu0 %2444
        %2446 = vrot.lane.b32.xlu0 %v1212, 64
        %v2447 = vpop.permute.xlu0 %2446
        %2448 = vrot.lane.b32.xlu0 %v1213, 64
        %v2449 = vpop.permute.xlu0 %2448
        %2450 = vrot.lane.b32.xlu0 %v1214, 64
        %v2451 = vpop.permute.xlu0 %2450
        %2452 = vrot.lane.b32.xlu0 %v1215, 64
        %v2453 = vpop.permute.xlu0 %2452
        %2454 = vrot.lane.b32.xlu0 %v1216, 64
        %v2455 = vpop.permute.xlu0 %2454
        %2456 = vrot.lane.b32.xlu0 %v1217, 64
        %v2457 = vpop.permute.xlu0 %2456
        %2458 = vrot.lane.b32.xlu0 %v1218, 64
        %v2459 = vpop.permute.xlu0 %2458
        %2476 = vrot.lane.b32.xlu0 %v1219, 96
        %v2477 = vpop.permute.xlu0 %2476
        %2478 = vrot.lane.b32.xlu0 %v1220, 96
        %v2479 = vpop.permute.xlu0 %2478
        %2480 = vrot.lane.b32.xlu0 %v1221, 96
        %v2481 = vpop.permute.xlu0 %2480
        %2482 = vrot.lane.b32.xlu0 %v1222, 96
        %v2483 = vpop.permute.xlu0 %2482
        %2484 = vrot.lane.b32.xlu0 %v1223, 96
        %v2485 = vpop.permute.xlu0 %2484
        %2486 = vrot.lane.b32.xlu0 %v1224, 96
        %v2487 = vpop.permute.xlu0 %2486
        %2488 = vrot.lane.b32.xlu0 %v1225, 96
        %v2489 = vpop.permute.xlu0 %2488
        %2490 = vrot.lane.b32.xlu0 %v1226, 96
        %v2491 = vpop.permute.xlu0 %2490
        %vm2500 = vcmask 261120
        %v2501 = vsel %vm2500, 1.0, %v2413
        %v2502 = vsel %vm2500, 1.0, %v2415
        %v2503 = vsel %vm2500, 1.0, %v2417
        %v2504 = vsel %vm2500, 1.0, %v2419
        %v2505 = vsel %vm2500, 1.0, %v2421
        %v2506 = vsel %vm2500, 1.0, %v2423
        %v2507 = vsel %vm2500, 1.0, %v2425
        %v2508 = vsel %vm2500, 1.0, %v2427
        %v2509 = vsel %vm361, %v2501, %v2445
        %v2510 = vsel %vm361, %v2502, %v2447
        %v2511 = vsel %vm361, %v2503, %v2449
        %v2512 = vsel %vm361, %v2504, %v2451
        %v2513 = vsel %vm361, %v2505, %v2453
        %v2514 = vsel %vm361, %v2506, %v2455
        %v2515 = vsel %vm361, %v2507, %v2457
        %v2516 = vsel %vm361, %v2508, %v2459
        %vm2517 = vcmask 785408
        %v2518 = vsel %vm2517, %v2509, %v2477
        %v2519 = vsel %vm2517, %v2510, %v2479
        %v2520 = vsel %vm2517, %v2511, %v2481
        %v2521 = vsel %vm2517, %v2512, %v2483
        %v2522 = vsel %vm2517, %v2513, %v2485
        %v2523 = vsel %vm2517, %v2514, %v2487
        %v2524 = vsel %vm2517, %v2515, %v2489
        %v2525 = vsel %vm2517, %v2516, %v2491
        %2558 = vrot.lane.b32.xlu0 %v2372, 32
        %v2559 = vpop.permute.xlu0 %2558
        %2560 = vrot.lane.b32.xlu0 %v2373, 32
        %v2561 = vpop.permute.xlu0 %2560
        %2562 = vrot.lane.b32.xlu0 %v2374, 32
        %v2563 = vpop.permute.xlu0 %2562
        %2564 = vrot.lane.b32.xlu0 %v2375, 32
        %v2565 = vpop.permute.xlu0 %2564
        %2566 = vrot.lane.b32.xlu0 %v2376, 32
        %v2567 = vpop.permute.xlu0 %2566
        %2568 = vrot.lane.b32.xlu0 %v2377, 32
        %v2569 = vpop.permute.xlu0 %2568
        %2570 = vrot.lane.b32.xlu0 %v2378, 32
        %v2571 = vpop.permute.xlu0 %2570
        %2572 = vrot.lane.b32.xlu0 %v2379, 32
        %v2573 = vpop.permute.xlu0 %2572
        %2574 = vrot.lane.b32.xlu0 %v2380, 32
        %v2575 = vpop.permute.xlu0 %2574
        %2576 = vrot.lane.b32.xlu0 %v2381, 32
        %v2577 = vpop.permute.xlu0 %2576
        %2578 = vrot.lane.b32.xlu0 %v2382, 32
        %v2579 = vpop.permute.xlu0 %2578
        %2580 = vrot.lane.b32.xlu0 %v2383, 32
        %v2581 = vpop.permute.xlu0 %2580
        %2582 = vrot.lane.b32.xlu0 %v2384, 32
        %v2583 = vpop.permute.xlu0 %2582
        %2584 = vrot.lane.b32.xlu0 %v2385, 32
        %v2585 = vpop.permute.xlu0 %2584
        %2586 = vrot.lane.b32.xlu0 %v2386, 32
        %v2587 = vpop.permute.xlu0 %2586
        %2588 = vrot.lane.b32.xlu0 %v2387, 32
        %v2589 = vpop.permute.xlu0 %2588
        %2590 = vrot.lane.b32.xlu0 %v2388, 32
        %v2591 = vpop.permute.xlu0 %2590
        %2592 = vrot.lane.b32.xlu0 %v2389, 32
        %v2593 = vpop.permute.xlu0 %2592
        %2594 = vrot.lane.b32.xlu0 %v2390, 32
        %v2595 = vpop.permute.xlu0 %2594
        %2596 = vrot.lane.b32.xlu0 %v2391, 32
        %v2597 = vpop.permute.xlu0 %2596
        %2598 = vrot.lane.b32.xlu0 %v2392, 32
        %v2599 = vpop.permute.xlu0 %2598
        %2600 = vrot.lane.b32.xlu0 %v2393, 32
        %v2601 = vpop.permute.xlu0 %2600
        %2602 = vrot.lane.b32.xlu0 %v2394, 32
        %v2603 = vpop.permute.xlu0 %2602
        %2604 = vrot.lane.b32.xlu0 %v2395, 32
        %v2605 = vpop.permute.xlu0 %2604
        %2606 = vrot.lane.b32.xlu0 %v2396, 32
        %v2607 = vpop.permute.xlu0 %2606
        %2608 = vrot.lane.b32.xlu0 %v2397, 32
        %v2609 = vpop.permute.xlu0 %2608
        %2610 = vrot.lane.b32.xlu0 %v2398, 32
        %v2611 = vpop.permute.xlu0 %2610
        %2612 = vrot.lane.b32.xlu0 %v2399, 32
        %v2613 = vpop.permute.xlu0 %2612
        %2614 = vrot.lane.b32.xlu0 %v2400, 32
        %v2615 = vpop.permute.xlu0 %2614
        %2616 = vrot.lane.b32.xlu0 %v2401, 32
        %v2617 = vpop.permute.xlu0 %2616
        %2618 = vrot.lane.b32.xlu0 %v2402, 32
        %v2619 = vpop.permute.xlu0 %2618
        %2620 = vrot.lane.b32.xlu0 %v2403, 32
        %v2621 = vpop.permute.xlu0 %2620
        %2654 = vrot.lane.b32.xlu0 %v2372, 64
        %v2655 = vpop.permute.xlu0 %2654
        %2656 = vrot.lane.b32.xlu0 %v2373, 64
        %v2657 = vpop.permute.xlu0 %2656
        %2658 = vrot.lane.b32.xlu0 %v2374, 64
        %v2659 = vpop.permute.xlu0 %2658
        %2660 = vrot.lane.b32.xlu0 %v2375, 64
        %v2661 = vpop.permute.xlu0 %2660
        %2662 = vrot.lane.b32.xlu0 %v2376, 64
        %v2663 = vpop.permute.xlu0 %2662
        %2664 = vrot.lane.b32.xlu0 %v2377, 64
        %v2665 = vpop.permute.xlu0 %2664
        %2666 = vrot.lane.b32.xlu0 %v2378, 64
        %v2667 = vpop.permute.xlu0 %2666
        %2668 = vrot.lane.b32.xlu0 %v2379, 64
        %v2669 = vpop.permute.xlu0 %2668
        %2670 = vrot.lane.b32.xlu0 %v2380, 64
        %v2671 = vpop.permute.xlu0 %2670
        %2672 = vrot.lane.b32.xlu0 %v2381, 64
        %v2673 = vpop.permute.xlu0 %2672
        %2674 = vrot.lane.b32.xlu0 %v2382, 64
        %v2675 = vpop.permute.xlu0 %2674
        %2676 = vrot.lane.b32.xlu0 %v2383, 64
        %v2677 = vpop.permute.xlu0 %2676
        %2678 = vrot.lane.b32.xlu0 %v2384, 64
        %v2679 = vpop.permute.xlu0 %2678
        %2680 = vrot.lane.b32.xlu0 %v2385, 64
        %v2681 = vpop.permute.xlu0 %2680
        %2682 = vrot.lane.b32.xlu0 %v2386, 64
        %v2683 = vpop.permute.xlu0 %2682
        %2684 = vrot.lane.b32.xlu0 %v2387, 64
        %v2685 = vpop.permute.xlu0 %2684
        %2686 = vrot.lane.b32.xlu0 %v2388, 64
        %v2687 = vpop.permute.xlu0 %2686
        %2688 = vrot.lane.b32.xlu0 %v2389, 64
        %v2689 = vpop.permute.xlu0 %2688
        %2690 = vrot.lane.b32.xlu0 %v2390, 64
        %v2691 = vpop.permute.xlu0 %2690
        %2692 = vrot.lane.b32.xlu0 %v2391, 64
        %v2693 = vpop.permute.xlu0 %2692
        %2694 = vrot.lane.b32.xlu0 %v2392, 64
        %v2695 = vpop.permute.xlu0 %2694
        %2696 = vrot.lane.b32.xlu0 %v2393, 64
        %v2697 = vpop.permute.xlu0 %2696
        %2698 = vrot.lane.b32.xlu0 %v2394, 64
        %v2699 = vpop.permute.xlu0 %2698
        %2700 = vrot.lane.b32.xlu0 %v2395, 64
        %v2701 = vpop.permute.xlu0 %2700
        %2702 = vrot.lane.b32.xlu0 %v2396, 64
        %v2703 = vpop.permute.xlu0 %2702
        %2704 = vrot.lane.b32.xlu0 %v2397, 64
        %v2705 = vpop.permute.xlu0 %2704
        %2706 = vrot.lane.b32.xlu0 %v2398, 64
        %v2707 = vpop.permute.xlu0 %2706
        %2708 = vrot.lane.b32.xlu0 %v2399, 64
        %v2709 = vpop.permute.xlu0 %2708
        %2710 = vrot.lane.b32.xlu0 %v2400, 64
        %v2711 = vpop.permute.xlu0 %2710
        %2712 = vrot.lane.b32.xlu0 %v2401, 64
        %v2713 = vpop.permute.xlu0 %2712
        %2714 = vrot.lane.b32.xlu0 %v2402, 64
        %v2715 = vpop.permute.xlu0 %2714
        %2716 = vrot.lane.b32.xlu0 %v2403, 64
        %v2717 = vpop.permute.xlu0 %2716
        %2750 = vrot.lane.b32.xlu0 %v2372, 96
        %v2751 = vpop.permute.xlu0 %2750
        %2752 = vrot.lane.b32.xlu0 %v2373, 96
        %v2753 = vpop.permute.xlu0 %2752
        %2754 = vrot.lane.b32.xlu0 %v2374, 96
        %v2755 = vpop.permute.xlu0 %2754
        %2756 = vrot.lane.b32.xlu0 %v2375, 96
        %v2757 = vpop.permute.xlu0 %2756
        %2758 = vrot.lane.b32.xlu0 %v2376, 96
        %v2759 = vpop.permute.xlu0 %2758
        %2760 = vrot.lane.b32.xlu0 %v2377, 96
        %v2761 = vpop.permute.xlu0 %2760
        %2762 = vrot.lane.b32.xlu0 %v2378, 96
        %v2763 = vpop.permute.xlu0 %2762
        %2764 = vrot.lane.b32.xlu0 %v2379, 96
        %v2765 = vpop.permute.xlu0 %2764
        %2766 = vrot.lane.b32.xlu0 %v2380, 96
        %v2767 = vpop.permute.xlu0 %2766
        %2768 = vrot.lane.b32.xlu0 %v2381, 96
        %v2769 = vpop.permute.xlu0 %2768
        %2770 = vrot.lane.b32.xlu0 %v2382, 96
        %v2771 = vpop.permute.xlu0 %2770
        %2772 = vrot.lane.b32.xlu0 %v2383, 96
        %v2773 = vpop.permute.xlu0 %2772
        %2774 = vrot.lane.b32.xlu0 %v2384, 96
        %v2775 = vpop.permute.xlu0 %2774
        %2776 = vrot.lane.b32.xlu0 %v2385, 96
        %v2777 = vpop.permute.xlu0 %2776
        %2778 = vrot.lane.b32.xlu0 %v2386, 96
        %v2779 = vpop.permute.xlu0 %2778
        %2780 = vrot.lane.b32.xlu0 %v2387, 96
        %v2781 = vpop.permute.xlu0 %2780
        %2782 = vrot.lane.b32.xlu0 %v2388, 96
        %v2783 = vpop.permute.xlu0 %2782
        %2784 = vrot.lane.b32.xlu0 %v2389, 96
        %v2785 = vpop.permute.xlu0 %2784
        %2786 = vrot.lane.b32.xlu0 %v2390, 96
        %v2787 = vpop.permute.xlu0 %2786
        %2788 = vrot.lane.b32.xlu0 %v2391, 96
        %v2789 = vpop.permute.xlu0 %2788
        %2790 = vrot.lane.b32.xlu0 %v2392, 96
        %v2791 = vpop.permute.xlu0 %2790
        %2792 = vrot.lane.b32.xlu0 %v2393, 96
        %v2793 = vpop.permute.xlu0 %2792
        %2794 = vrot.lane.b32.xlu0 %v2394, 96
        %v2795 = vpop.permute.xlu0 %2794
        %2796 = vrot.lane.b32.xlu0 %v2395, 96
        %v2797 = vpop.permute.xlu0 %2796
        %2798 = vrot.lane.b32.xlu0 %v2396, 96
        %v2799 = vpop.permute.xlu0 %2798
        %2800 = vrot.lane.b32.xlu0 %v2397, 96
        %v2801 = vpop.permute.xlu0 %2800
        %2802 = vrot.lane.b32.xlu0 %v2398, 96
        %v2803 = vpop.permute.xlu0 %2802
        %2804 = vrot.lane.b32.xlu0 %v2399, 96
        %v2805 = vpop.permute.xlu0 %2804
        %2806 = vrot.lane.b32.xlu0 %v2400, 96
        %v2807 = vpop.permute.xlu0 %2806
        %2808 = vrot.lane.b32.xlu0 %v2401, 96
        %v2809 = vpop.permute.xlu0 %2808
        %2810 = vrot.lane.b32.xlu0 %v2402, 96
        %v2811 = vpop.permute.xlu0 %2810
        %2812 = vrot.lane.b32.xlu0 %v2403, 96
        %v2813 = vpop.permute.xlu0 %2812
        %v2846 = vsel %vm2500, %v2372, %v2559
        %v2847 = vsel %vm2500, %v2373, %v2561
        %v2848 = vsel %vm2500, %v2374, %v2563
        %v2849 = vsel %vm2500, %v2375, %v2565
        %v2850 = vsel %vm2500, %v2376, %v2567
        %v2851 = vsel %vm2500, %v2377, %v2569
        %v2852 = vsel %vm2500, %v2378, %v2571
        %v2853 = vsel %vm2500, %v2379, %v2573
        %v2854 = vsel %vm2500, %v2380, %v2575
        %v2855 = vsel %vm2500, %v2381, %v2577
        %v2856 = vsel %vm2500, %v2382, %v2579
        %v2857 = vsel %vm2500, %v2383, %v2581
        %v2858 = vsel %vm2500, %v2384, %v2583
        %v2859 = vsel %vm2500, %v2385, %v2585
        %v2860 = vsel %vm2500, %v2386, %v2587
        %v2861 = vsel %vm2500, %v2387, %v2589
        %v2862 = vsel %vm2500, %v2388, %v2591
        %v2863 = vsel %vm2500, %v2389, %v2593
        %v2864 = vsel %vm2500, %v2390, %v2595
        %v2865 = vsel %vm2500, %v2391, %v2597
        %v2866 = vsel %vm2500, %v2392, %v2599
        %v2867 = vsel %vm2500, %v2393, %v2601
        %v2868 = vsel %vm2500, %v2394, %v2603
        %v2869 = vsel %vm2500, %v2395, %v2605
        %v2870 = vsel %vm2500, %v2396, %v2607
        %v2871 = vsel %vm2500, %v2397, %v2609
        %v2872 = vsel %vm2500, %v2398, %v2611
        %v2873 = vsel %vm2500, %v2399, %v2613
        %v2874 = vsel %vm2500, %v2400, %v2615
        %v2875 = vsel %vm2500, %v2401, %v2617
        %v2876 = vsel %vm2500, %v2402, %v2619
        %v2877 = vsel %vm2500, %v2403, %v2621
        %v2878 = vsel %vm361, %v2846, %v2655
        %v2879 = vsel %vm361, %v2847, %v2657
        %v2880 = vsel %vm361, %v2848, %v2659
        %v2881 = vsel %vm361, %v2849, %v2661
        %v2882 = vsel %vm361, %v2850, %v2663
        %v2883 = vsel %vm361, %v2851, %v2665
        %v2884 = vsel %vm361, %v2852, %v2667
        %v2885 = vsel %vm361, %v2853, %v2669
        %v2886 = vsel %vm361, %v2854, %v2671
        %v2887 = vsel %vm361, %v2855, %v2673
        %v2888 = vsel %vm361, %v2856, %v2675
        %v2889 = vsel %vm361, %v2857, %v2677
        %v2890 = vsel %vm361, %v2858, %v2679
        %v2891 = vsel %vm361, %v2859, %v2681
        %v2892 = vsel %vm361, %v2860, %v2683
        %v2893 = vsel %vm361, %v2861, %v2685
        %v2894 = vsel %vm361, %v2862, %v2687
        %v2895 = vsel %vm361, %v2863, %v2689
        %v2896 = vsel %vm361, %v2864, %v2691
        %v2897 = vsel %vm361, %v2865, %v2693
        %v2898 = vsel %vm361, %v2866, %v2695
        %v2899 = vsel %vm361, %v2867, %v2697
        %v2900 = vsel %vm361, %v2868, %v2699
        %v2901 = vsel %vm361, %v2869, %v2701
        %v2902 = vsel %vm361, %v2870, %v2703
        %v2903 = vsel %vm361, %v2871, %v2705
        %v2904 = vsel %vm361, %v2872, %v2707
        %v2905 = vsel %vm361, %v2873, %v2709
        %v2906 = vsel %vm361, %v2874, %v2711
        %v2907 = vsel %vm361, %v2875, %v2713
        %v2908 = vsel %vm361, %v2876, %v2715
        %v2909 = vsel %vm361, %v2877, %v2717
        %v2910 = vsel %vm2517, %v2878, %v2751
        %v2911 = vsel %vm2517, %v2879, %v2753
        %v2912 = vsel %vm2517, %v2880, %v2755
        %v2913 = vsel %vm2517, %v2881, %v2757
        %v2914 = vsel %vm2517, %v2882, %v2759
        %v2915 = vsel %vm2517, %v2883, %v2761
        %v2916 = vsel %vm2517, %v2884, %v2763
        %v2917 = vsel %vm2517, %v2885, %v2765
        %v2918 = vsel %vm2517, %v2886, %v2767
        %v2919 = vsel %vm2517, %v2887, %v2769
        %v2920 = vsel %vm2517, %v2888, %v2771
        %v2921 = vsel %vm2517, %v2889, %v2773
        %v2922 = vsel %vm2517, %v2890, %v2775
        %v2923 = vsel %vm2517, %v2891, %v2777
        %v2924 = vsel %vm2517, %v2892, %v2779
        %v2925 = vsel %vm2517, %v2893, %v2781
        %v2926 = vsel %vm2517, %v2894, %v2783
        %v2927 = vsel %vm2517, %v2895, %v2785
        %v2928 = vsel %vm2517, %v2896, %v2787
        %v2929 = vsel %vm2517, %v2897, %v2789
        %v2930 = vsel %vm2517, %v2898, %v2791
        %v2931 = vsel %vm2517, %v2899, %v2793
        %v2932 = vsel %vm2517, %v2900, %v2795
        %v2933 = vsel %vm2517, %v2901, %v2797
        %v2934 = vsel %vm2517, %v2902, %v2799
        %v2935 = vsel %vm2517, %v2903, %v2801
        %v2936 = vsel %vm2517, %v2904, %v2803
        %v2937 = vsel %vm2517, %v2905, %v2805
        %v2938 = vsel %vm2517, %v2906, %v2807
        %v2939 = vsel %vm2517, %v2907, %v2809
        %v2940 = vsel %vm2517, %v2908, %v2811
        %v2941 = vsel %vm2517, %v2909, %v2813
        %v2942 = vmul.f32 %v2910, %v2518
        %v2943 = vmul.f32 %v2911, %v2519
        %v2944 = vmul.f32 %v2912, %v2520
        %v2945 = vmul.f32 %v2913, %v2521
        %v2946 = vmul.f32 %v2914, %v2522
        %v2947 = vmul.f32 %v2915, %v2523
        %v2948 = vmul.f32 %v2916, %v2524
        %v2949 = vmul.f32 %v2917, %v2525
        %v2950 = vmul.f32 %v2918, %v2518
        %v2951 = vmul.f32 %v2919, %v2519
        %v2952 = vmul.f32 %v2920, %v2520
        %v2953 = vmul.f32 %v2921, %v2521
        %v2954 = vmul.f32 %v2922, %v2522
        %v2955 = vmul.f32 %v2923, %v2523
        %v2956 = vmul.f32 %v2924, %v2524
        %v2957 = vmul.f32 %v2925, %v2525
        %v2958 = vmul.f32 %v2926, %v2518
        %v2959 = vmul.f32 %v2927, %v2519
        %v2960 = vmul.f32 %v2928, %v2520
        %v2961 = vmul.f32 %v2929, %v2521
        %v2962 = vmul.f32 %v2930, %v2522
        %v2963 = vmul.f32 %v2931, %v2523
        %v2964 = vmul.f32 %v2932, %v2524
        %v2965 = vmul.f32 %v2933, %v2525
        %v2966 = vmul.f32 %v2934, %v2518
        %v2967 = vmul.f32 %v2935, %v2519
        %v2968 = vmul.f32 %v2936, %v2520
        %v2969 = vmul.f32 %v2937, %v2521
        %v2970 = vmul.f32 %v2938, %v2522
        %v2971 = vmul.f32 %v2939, %v2523
        %v2972 = vmul.f32 %v2940, %v2524
        %v2973 = vmul.f32 %v2941, %v2525
        %v2974 = vpack.c.bf16 %v2943, %v2942
        %v2975 = vpack.c.bf16 %v2945, %v2944
        %v2976 = vpack.c.bf16 %v2947, %v2946
        %v2977 = vpack.c.bf16 %v2949, %v2948
        %v2978 = vpack.c.bf16 %v2951, %v2950
        %v2979 = vpack.c.bf16 %v2953, %v2952
        %v2980 = vpack.c.bf16 %v2955, %v2954
        %v2981 = vpack.c.bf16 %v2957, %v2956
        %v2982 = vpack.c.bf16 %v2959, %v2958
        %v2983 = vpack.c.bf16 %v2961, %v2960
        %v2984 = vpack.c.bf16 %v2963, %v2962
        %v2985 = vpack.c.bf16 %v2965, %v2964
        %v2986 = vpack.c.bf16 %v2967, %v2966
        %v2987 = vpack.c.bf16 %v2969, %v2968
        %v2988 = vpack.c.bf16 %v2971, %v2970
        %v2989 = vpack.c.bf16 %v2973, %v2972
        %v2990 = vpack.c.bf16 0.01303409, 0.01303409
        %v2991 = vpack.c.bf16 %v937, %v936
        %v2992 = vpack.c.bf16 %v939, %v938
        %v2993 = vpack.c.bf16 %v969, %v968
        %v2994 = vpack.c.bf16 %v971, %v970
        %v2995 = vpack.c.bf16 %v1033, %v1032
        %v2996 = vpack.c.bf16 %v1035, %v1034
        %v2997 = vpack.c.bf16 %v945, %v944
        %v2998 = vpack.c.bf16 %v947, %v946
        %v2999 = vpack.c.bf16 %v977, %v976
        %v3000 = vpack.c.bf16 %v979, %v978
        %v3001 = vpack.c.bf16 %v1041, %v1040
        %v3002 = vpack.c.bf16 %v1043, %v1042
        %v3003 = vpack.c.bf16 %v953, %v952
        %v3004 = vpack.c.bf16 %v955, %v954
        %v3005 = vpack.c.bf16 %v985, %v984
        %v3006 = vpack.c.bf16 %v987, %v986
        %v3007 = vpack.c.bf16 %v1049, %v1048
        %v3008 = vpack.c.bf16 %v1051, %v1050
        %v3009 = vpack.c.bf16 %v961, %v960
        %v3010 = vpack.c.bf16 %v963, %v962
        %v3011 = vpack.c.bf16 %v993, %v992
        %v3012 = vpack.c.bf16 %v995, %v994
        %v3013 = vpack.c.bf16 %v1057, %v1056
        %v3014 = vpack.c.bf16 %v1059, %v1058
        %3015 = vmatprep.subr.bf16.mxu0 0
        %3016 = vmatpush1.bf16.msra.mxu0 %v2996
        %3017 = vmatprep.subr.bf16.mxu0 0
        %3018 = vmatpush1.bf16.msra.mxu0 %v2995
        %3019 = vmatprep.subr.bf16.mxu0 0
        %3020 = vmatpush1.bf16.msra.mxu0 %v2994
        %3021 = vmatprep.subr.bf16.mxu0 0
        %3022 = vmatpush1.bf16.msra.mxu0 %v2993
        %3023 = vmatprep.subr.bf16.mxu0 0
        %3024 = vmatpush1.bf16.msra.mxu0 %v2992
        %3025 = vmatprep.subr.bf16.mxu0 0
        %3026 = vmatpush1.bf16.msra.mxu0 %v2991
        %3027 = vmatprep.subr.bf16.mxu0 0
        %3028 = vmatpush1.bf16.msra.mxu0 %v2990
        %3029 = vmatprep.subr.bf16.mxu0 0
        %3030 = vmatpush1.bf16.msra.mxu0 %v2990
        %3031 = vmatprep.subr.bf16.mxu0 0
        %3032 = vmatpush2.bf16.msra.mxu0 0
        %3033 = vmatprep.subr.bf16.mxu0 0
        %3034 = vmatpush2.bf16.msra.mxu0 0
        %3035 = vmatprep.subr.bf16.mxu0 0
        %3036 = vmatpush2.bf16.msra.mxu0 0
        %3037 = vmatprep.subr.bf16.mxu0 0
        %3038 = vmatpush2.bf16.msra.mxu0 0
        %3039 = vmatprep.subr.bf16.mxu0 0
        %3040 = vmatpush2.bf16.msra.mxu0 0
        %3041 = vmatprep.subr.bf16.mxu0 0
        %3042 = vmatpush2.bf16.msra.mxu0 0
        %3043 = vmatprep.subr.bf16.mxu0 0
        %3044 = vmatpush2.bf16.msra.mxu0 0
        %3045 = vmatprep.subr.bf16.mxu0 0
        %3046 = vmatpush2.bf16.msra.mxu0 0
        %3047 = vmatprep.mubr.bf16.mxu0 0
        %3048 = vmatmul.mubr.bf16.gmra.mxu0 %v2974
        %v3049 = vpop.f32.mrf.mxu0
        %v3050 = vadd.f32 0.0, %v3049
        %v3051 = vpop.f32.mrf.mxu0
        %v3052 = vpop.f32.mrf.mxu0
        %v3053 = vadd.f32 0.0, %v3052
        %v3054 = vpop.f32.mrf.mxu0
        %3055 = vmatprep.mubr.bf16.mxu0 0
        %3056 = vmatmul.mubr.bf16.gmra.mxu0 %v2975
        %v3057 = vpop.f32.mrf.mxu0
        %v3058 = vadd.f32 0.0, %v3057
        %v3059 = vpop.f32.mrf.mxu0
        %v3060 = vpop.f32.mrf.mxu0
        %v3061 = vadd.f32 0.0, %v3060
        %v3062 = vpop.f32.mrf.mxu0
        %3063 = vmatprep.mubr.bf16.mxu0 0
        %3064 = vmatmul.mubr.bf16.gmra.mxu0 %v2976
        %v3065 = vpop.f32.mrf.mxu0
        %v3066 = vadd.f32 0.0, %v3065
        %v3067 = vpop.f32.mrf.mxu0
        %v3068 = vpop.f32.mrf.mxu0
        %v3069 = vadd.f32 0.0, %v3068
        %v3070 = vpop.f32.mrf.mxu0
        %3071 = vmatprep.mubr.bf16.mxu0 0
        %3072 = vmatmul.mubr.bf16.gmra.mxu0 %v2977
        %v3073 = vpop.f32.mrf.mxu0
        %v3074 = vadd.f32 0.0, %v3073
        %v3075 = vpop.f32.mrf.mxu0
        %v3076 = vpop.f32.mrf.mxu0
        %v3077 = vadd.f32 0.0, %v3076
        %v3078 = vpop.f32.mrf.mxu0
        %3079 = vdwg.mxu0
        %3080 = vmatprep.subr.bf16.mxu0 0
        %3081 = vmatpush1.bf16.msra.mxu0 %v3002
        %3082 = vmatprep.subr.bf16.mxu0 0
        %3083 = vmatpush1.bf16.msra.mxu0 %v3001
        %3084 = vmatprep.subr.bf16.mxu0 0
        %3085 = vmatpush1.bf16.msra.mxu0 %v3000
        %3086 = vmatprep.subr.bf16.mxu0 0
        %3087 = vmatpush1.bf16.msra.mxu0 %v2999
        %3088 = vmatprep.subr.bf16.mxu0 0
        %3089 = vmatpush1.bf16.msra.mxu0 %v2998
        %3090 = vmatprep.subr.bf16.mxu0 0
        %3091 = vmatpush1.bf16.msra.mxu0 %v2997
        %3092 = vmatprep.subr.bf16.mxu0 0
        %3093 = vmatpush1.bf16.msra.mxu0 %v2990
        %3094 = vmatprep.subr.bf16.mxu0 0
        %3095 = vmatpush1.bf16.msra.mxu0 %v2990
        %3096 = vmatprep.subr.bf16.mxu0 0
        %3097 = vmatpush2.bf16.msra.mxu0 0
        %3098 = vmatprep.subr.bf16.mxu0 0
        %3099 = vmatpush2.bf16.msra.mxu0 0
        %3100 = vmatprep.subr.bf16.mxu0 0
        %3101 = vmatpush2.bf16.msra.mxu0 0
        %3102 = vmatprep.subr.bf16.mxu0 0
        %3103 = vmatpush2.bf16.msra.mxu0 0
        %3104 = vmatprep.subr.bf16.mxu0 0
        %3105 = vmatpush2.bf16.msra.mxu0 0
        %3106 = vmatprep.subr.bf16.mxu0 0
        %3107 = vmatpush2.bf16.msra.mxu0 0
        %3108 = vmatprep.subr.bf16.mxu0 0
        %3109 = vmatpush2.bf16.msra.mxu0 0
        %3110 = vmatprep.subr.bf16.mxu0 0
        %3111 = vmatpush2.bf16.msra.mxu0 0
        %3112 = vmatprep.mubr.bf16.mxu0 0
        %3113 = vmatmul.mubr.bf16.gmra.mxu0 %v2978
        %v3114 = vpop.f32.mrf.mxu0
        %v3115 = vadd.f32 0.0, %v3114
        %v3116 = vpop.f32.mrf.mxu0
        %v3117 = vpop.f32.mrf.mxu0
        %v3118 = vadd.f32 0.0, %v3117
        %v3119 = vpop.f32.mrf.mxu0
        %3120 = vmatprep.mubr.bf16.mxu0 0
        %3121 = vmatmul.mubr.bf16.gmra.mxu0 %v2979
        %v3122 = vpop.f32.mrf.mxu0
        %v3123 = vadd.f32 0.0, %v3122
        %v3124 = vpop.f32.mrf.mxu0
        %v3125 = vpop.f32.mrf.mxu0
        %v3126 = vadd.f32 0.0, %v3125
        %v3127 = vpop.f32.mrf.mxu0
        %3128 = vmatprep.mubr.bf16.mxu0 0
        %3129 = vmatmul.mubr.bf16.gmra.mxu0 %v2980
        %v3130 = vpop.f32.mrf.mxu0
        %v3131 = vadd.f32 0.0, %v3130
        %v3132 = vpop.f32.mrf.mxu0
        %v3133 = vpop.f32.mrf.mxu0
        %v3134 = vadd.f32 0.0, %v3133
        %v3135 = vpop.f32.mrf.mxu0
        %3136 = vmatprep.mubr.bf16.mxu0 0
        %3137 = vmatmul.mubr.bf16.gmra.mxu0 %v2981
        %v3138 = vpop.f32.mrf.mxu0
        %v3139 = vadd.f32 0.0, %v3138
        %v3140 = vpop.f32.mrf.mxu0
        %v3141 = vpop.f32.mrf.mxu0
        %v3142 = vadd.f32 0.0, %v3141
        %v3143 = vpop.f32.mrf.mxu0
        %3144 = vdwg.mxu0
        %3145 = vmatprep.subr.bf16.mxu0 0
        %3146 = vmatpush1.bf16.msra.mxu0 %v3008
        %3147 = vmatprep.subr.bf16.mxu0 0
        %3148 = vmatpush1.bf16.msra.mxu0 %v3007
        %3149 = vmatprep.subr.bf16.mxu0 0
        %3150 = vmatpush1.bf16.msra.mxu0 %v3006
        %3151 = vmatprep.subr.bf16.mxu0 0
        %3152 = vmatpush1.bf16.msra.mxu0 %v3005
        %3153 = vmatprep.subr.bf16.mxu0 0
        %3154 = vmatpush1.bf16.msra.mxu0 %v3004
        %3155 = vmatprep.subr.bf16.mxu0 0
        %3156 = vmatpush1.bf16.msra.mxu0 %v3003
        %3157 = vmatprep.subr.bf16.mxu0 0
        %3158 = vmatpush1.bf16.msra.mxu0 %v2990
        %3159 = vmatprep.subr.bf16.mxu0 0
        %3160 = vmatpush1.bf16.msra.mxu0 %v2990
        %3161 = vmatprep.subr.bf16.mxu0 0
        %3162 = vmatpush2.bf16.msra.mxu0 0
        %3163 = vmatprep.subr.bf16.mxu0 0
        %3164 = vmatpush2.bf16.msra.mxu0 0
        %3165 = vmatprep.subr.bf16.mxu0 0
        %3166 = vmatpush2.bf16.msra.mxu0 0
        %3167 = vmatprep.subr.bf16.mxu0 0
        %3168 = vmatpush2.bf16.msra.mxu0 0
        %3169 = vmatprep.subr.bf16.mxu0 0
        %3170 = vmatpush2.bf16.msra.mxu0 0
        %3171 = vmatprep.subr.bf16.mxu0 0
        %3172 = vmatpush2.bf16.msra.mxu0 0
        %3173 = vmatprep.subr.bf16.mxu0 0
        %3174 = vmatpush2.bf16.msra.mxu0 0
        %3175 = vmatprep.subr.bf16.mxu0 0
        %3176 = vmatpush2.bf16.msra.mxu0 0
        %3177 = vmatprep.mubr.bf16.mxu0 0
        %3178 = vmatmul.mubr.bf16.gmra.mxu0 %v2982
        %v3179 = vpop.f32.mrf.mxu0
        %v3180 = vadd.f32 0.0, %v3179
        %v3181 = vpop.f32.mrf.mxu0
        %v3182 = vpop.f32.mrf.mxu0
        %v3183 = vadd.f32 0.0, %v3182
        %v3184 = vpop.f32.mrf.mxu0
        %3185 = vmatprep.mubr.bf16.mxu0 0
        %3186 = vmatmul.mubr.bf16.gmra.mxu0 %v2983
        %v3187 = vpop.f32.mrf.mxu0
        %v3188 = vadd.f32 0.0, %v3187
        %v3189 = vpop.f32.mrf.mxu0
        %v3190 = vpop.f32.mrf.mxu0
        %v3191 = vadd.f32 0.0, %v3190
        %v3192 = vpop.f32.mrf.mxu0
        %3193 = vmatprep.mubr.bf16.mxu0 0
        %3194 = vmatmul.mubr.bf16.gmra.mxu0 %v2984
        %v3195 = vpop.f32.mrf.mxu0
        %v3196 = vadd.f32 0.0, %v3195
        %v3197 = vpop.f32.mrf.mxu0
        %v3198 = vpop.f32.mrf.mxu0
        %v3199 = vadd.f32 0.0, %v3198
        %v3200 = vpop.f32.mrf.mxu0
        %3201 = vmatprep.mubr.bf16.mxu0 0
        %3202 = vmatmul.mubr.bf16.gmra.mxu0 %v2985
        %v3203 = vpop.f32.mrf.mxu0
        %v3204 = vadd.f32 0.0, %v3203
        %v3205 = vpop.f32.mrf.mxu0
        %v3206 = vpop.f32.mrf.mxu0
        %v3207 = vadd.f32 0.0, %v3206
        %v3208 = vpop.f32.mrf.mxu0
        %3209 = vdwg.mxu0
        %3210 = vmatprep.subr.bf16.mxu0 0
        %3211 = vmatpush1.bf16.msra.mxu0 %v3014
        %3212 = vmatprep.subr.bf16.mxu0 0
        %3213 = vmatpush1.bf16.msra.mxu0 %v3013
        %3214 = vmatprep.subr.bf16.mxu0 0
        %3215 = vmatpush1.bf16.msra.mxu0 %v3012
        %3216 = vmatprep.subr.bf16.mxu0 0
        %3217 = vmatpush1.bf16.msra.mxu0 %v3011
        %3218 = vmatprep.subr.bf16.mxu0 0
        %3219 = vmatpush1.bf16.msra.mxu0 %v3010
        %3220 = vmatprep.subr.bf16.mxu0 0
        %3221 = vmatpush1.bf16.msra.mxu0 %v3009
        %3222 = vmatprep.subr.bf16.mxu0 0
        %3223 = vmatpush1.bf16.msra.mxu0 %v2990
        %3224 = vmatprep.subr.bf16.mxu0 0
        %3225 = vmatpush1.bf16.msra.mxu0 %v2990
        %3226 = vmatprep.subr.bf16.mxu0 0
        %3227 = vmatpush2.bf16.msra.mxu0 0
        %3228 = vmatprep.subr.bf16.mxu0 0
        %3229 = vmatpush2.bf16.msra.mxu0 0
        %3230 = vmatprep.subr.bf16.mxu0 0
        %3231 = vmatpush2.bf16.msra.mxu0 0
        %3232 = vmatprep.subr.bf16.mxu0 0
        %3233 = vmatpush2.bf16.msra.mxu0 0
        %3234 = vmatprep.subr.bf16.mxu0 0
        %3235 = vmatpush2.bf16.msra.mxu0 0
        %3236 = vmatprep.subr.bf16.mxu0 0
        %3237 = vmatpush2.bf16.msra.mxu0 0
        %3238 = vmatprep.subr.bf16.mxu0 0
        %3239 = vmatpush2.bf16.msra.mxu0 0
        %3240 = vmatprep.subr.bf16.mxu0 0
        %3241 = vmatpush2.bf16.msra.mxu0 0
        %3242 = vmatprep.mubr.bf16.mxu0 0
        %3243 = vmatmul.mubr.bf16.gmra.mxu0 %v2986
        %v3244 = vpop.f32.mrf.mxu0
        %v3245 = vadd.f32 0.0, %v3244
        %v3246 = vpop.f32.mrf.mxu0
        %v3247 = vpop.f32.mrf.mxu0
        %v3248 = vadd.f32 0.0, %v3247
        %v3249 = vpop.f32.mrf.mxu0
        %3250 = vmatprep.mubr.bf16.mxu0 0
        %3251 = vmatmul.mubr.bf16.gmra.mxu0 %v2987
        %v3252 = vpop.f32.mrf.mxu0
        %v3253 = vadd.f32 0.0, %v3252
        %v3254 = vpop.f32.mrf.mxu0
        %v3255 = vpop.f32.mrf.mxu0
        %v3256 = vadd.f32 0.0, %v3255
        %v3257 = vpop.f32.mrf.mxu0
        %3258 = vmatprep.mubr.bf16.mxu0 0
        %3259 = vmatmul.mubr.bf16.gmra.mxu0 %v2988
        %v3260 = vpop.f32.mrf.mxu0
        %v3261 = vadd.f32 0.0, %v3260
        %v3262 = vpop.f32.mrf.mxu0
        %v3263 = vpop.f32.mrf.mxu0
        %v3264 = vadd.f32 0.0, %v3263
        %v3265 = vpop.f32.mrf.mxu0
        %3266 = vmatprep.mubr.bf16.mxu0 0
        %3267 = vmatmul.mubr.bf16.gmra.mxu0 %v2989
        %v3268 = vpop.f32.mrf.mxu0
        %v3269 = vadd.f32 0.0, %v3268
        %v3270 = vpop.f32.mrf.mxu0
        %v3271 = vpop.f32.mrf.mxu0
        %v3272 = vadd.f32 0.0, %v3271
        %v3273 = vpop.f32.mrf.mxu0
        %3274 = vdwg.mxu0
        %v3275 = vmax.f32 %v3050, -1.0
        %v3276 = vmax.f32 %v3053, -1.0
        %v3277 = vmax.f32 %v3058, -1.0
        %v3278 = vmax.f32 %v3061, -1.0
        %v3279 = vmax.f32 %v3066, -1.0
        %v3280 = vmax.f32 %v3069, -1.0
        %v3281 = vmax.f32 %v3074, -1.0
        %v3282 = vmax.f32 %v3077, -1.0
        %v3283 = vmax.f32 %v3115, -1.0
        %v3284 = vmax.f32 %v3118, -1.0
        %v3285 = vmax.f32 %v3123, -1.0
        %v3286 = vmax.f32 %v3126, -1.0
        %v3287 = vmax.f32 %v3131, -1.0
        %v3288 = vmax.f32 %v3134, -1.0
        %v3289 = vmax.f32 %v3139, -1.0
        %v3290 = vmax.f32 %v3142, -1.0
        %v3291 = vmax.f32 %v3180, -1.0
        %v3292 = vmax.f32 %v3183, -1.0
        %v3293 = vmax.f32 %v3188, -1.0
        %v3294 = vmax.f32 %v3191, -1.0
        %v3295 = vmax.f32 %v3196, -1.0
        %v3296 = vmax.f32 %v3199, -1.0
        %v3297 = vmax.f32 %v3204, -1.0
        %v3298 = vmax.f32 %v3207, -1.0
        %v3299 = vmax.f32 %v3245, -1.0
        %v3300 = vmax.f32 %v3248, -1.0
        %v3301 = vmax.f32 %v3253, -1.0
        %v3302 = vmax.f32 %v3256, -1.0
        %v3303 = vmax.f32 %v3261, -1.0
        %v3304 = vmax.f32 %v3264, -1.0
        %v3305 = vmax.f32 %v3269, -1.0
        %v3306 = vmax.f32 %v3272, -1.0
        %v3307 = vmin.f32 %v3275, 1.0
        %v3308 = vmin.f32 %v3276, 1.0
        %v3309 = vmin.f32 %v3277, 1.0
        %v3310 = vmin.f32 %v3278, 1.0
        %v3311 = vmin.f32 %v3279, 1.0
        %v3312 = vmin.f32 %v3280, 1.0
        %v3313 = vmin.f32 %v3281, 1.0
        %v3314 = vmin.f32 %v3282, 1.0
        %v3315 = vmin.f32 %v3283, 1.0
        %v3316 = vmin.f32 %v3284, 1.0
        %v3317 = vmin.f32 %v3285, 1.0
        %v3318 = vmin.f32 %v3286, 1.0
        %v3319 = vmin.f32 %v3287, 1.0
        %v3320 = vmin.f32 %v3288, 1.0
        %v3321 = vmin.f32 %v3289, 1.0
        %v3322 = vmin.f32 %v3290, 1.0
        %v3323 = vmin.f32 %v3291, 1.0
        %v3324 = vmin.f32 %v3292, 1.0
        %v3325 = vmin.f32 %v3293, 1.0
        %v3326 = vmin.f32 %v3294, 1.0
        %v3327 = vmin.f32 %v3295, 1.0
        %v3328 = vmin.f32 %v3296, 1.0
        %v3329 = vmin.f32 %v3297, 1.0
        %v3330 = vmin.f32 %v3298, 1.0
        %v3331 = vmin.f32 %v3299, 1.0
        %v3332 = vmin.f32 %v3300, 1.0
        %v3333 = vmin.f32 %v3301, 1.0
        %v3334 = vmin.f32 %v3302, 1.0
        %v3335 = vmin.f32 %v3303, 1.0
        %v3336 = vmin.f32 %v3304, 1.0
        %v3337 = vmin.f32 %v3305, 1.0
        %v3338 = vmin.f32 %v3306, 1.0
        %v3339 = vadd.f32 %v3307, 0.0
        %v3340 = vadd.f32 %v3308, 0.0
        %v3341 = vadd.f32 %v3309, 0.0
        %v3342 = vadd.f32 %v3310, 0.0
        %v3343 = vadd.f32 %v3311, 0.0
        %v3344 = vadd.f32 %v3312, 0.0
        %v3345 = vadd.f32 %v3313, 0.0
        %v3346 = vadd.f32 %v3314, 0.0
        %v3347 = vadd.f32 %v3315, 0.0
        %v3348 = vadd.f32 %v3316, 0.0
        %v3349 = vadd.f32 %v3317, 0.0
        %v3350 = vadd.f32 %v3318, 0.0
        %v3351 = vadd.f32 %v3319, 0.0
        %v3352 = vadd.f32 %v3320, 0.0
        %v3353 = vadd.f32 %v3321, 0.0
        %v3354 = vadd.f32 %v3322, 0.0
        %v3355 = vadd.f32 %v3323, 0.0
        %v3356 = vadd.f32 %v3324, 0.0
        %v3357 = vadd.f32 %v3325, 0.0
        %v3358 = vadd.f32 %v3326, 0.0
        %v3359 = vadd.f32 %v3327, 0.0
        %v3360 = vadd.f32 %v3328, 0.0
        %v3361 = vadd.f32 %v3329, 0.0
        %v3362 = vadd.f32 %v3330, 0.0
        %v3363 = vadd.f32 %v3331, 0.0
        %v3364 = vadd.f32 %v3332, 0.0
        %v3365 = vadd.f32 %v3333, 0.0
        %v3366 = vadd.f32 %v3334, 0.0
        %v3367 = vadd.f32 %v3335, 0.0
        %v3368 = vadd.f32 %v3336, 0.0
        %v3369 = vadd.f32 %v3337, 0.0
        %v3370 = vadd.f32 %v3338, 0.0
        %3371 = vrot.lane.b32.xlu0 %v1211, 32
        %v3372 = vpop.permute.xlu0 %3371
        %3373 = vrot.lane.b32.xlu0 %v1212, 32
        %v3374 = vpop.permute.xlu0 %3373
        %3375 = vrot.lane.b32.xlu0 %v1213, 32
        %v3376 = vpop.permute.xlu0 %3375
        %3377 = vrot.lane.b32.xlu0 %v1214, 32
        %v3378 = vpop.permute.xlu0 %3377
        %3379 = vrot.lane.b32.xlu0 %v1215, 32
        %v3380 = vpop.permute.xlu0 %3379
        %3381 = vrot.lane.b32.xlu0 %v1216, 32
        %v3382 = vpop.permute.xlu0 %3381
        %3383 = vrot.lane.b32.xlu0 %v1217, 32
        %v3384 = vpop.permute.xlu0 %3383
        %3385 = vrot.lane.b32.xlu0 %v1218, 32
        %v3386 = vpop.permute.xlu0 %3385
        %3395 = vrot.lane.b32.xlu0 %v1219, 64
        %v3396 = vpop.permute.xlu0 %3395
        %3397 = vrot.lane.b32.xlu0 %v1220, 64
        %v3398 = vpop.permute.xlu0 %3397
        %3399 = vrot.lane.b32.xlu0 %v1221, 64
        %v3400 = vpop.permute.xlu0 %3399
        %3401 = vrot.lane.b32.xlu0 %v1222, 64
        %v3402 = vpop.permute.xlu0 %3401
        %3403 = vrot.lane.b32.xlu0 %v1223, 64
        %v3404 = vpop.permute.xlu0 %3403
        %3405 = vrot.lane.b32.xlu0 %v1224, 64
        %v3406 = vpop.permute.xlu0 %3405
        %3407 = vrot.lane.b32.xlu0 %v1225, 64
        %v3408 = vpop.permute.xlu0 %3407
        %3409 = vrot.lane.b32.xlu0 %v1226, 64
        %v3410 = vpop.permute.xlu0 %3409
        %v3419 = vsel %vm2500, 1.0, %v1196
        %v3420 = vsel %vm2500, 1.0, %v1198
        %v3421 = vsel %vm2500, 1.0, %v1200
        %v3422 = vsel %vm2500, 1.0, %v1202
        %v3423 = vsel %vm2500, 1.0, %v1204
        %v3424 = vsel %vm2500, 1.0, %v1206
        %v3425 = vsel %vm2500, 1.0, %v1208
        %v3426 = vsel %vm2500, 1.0, %v1210
        %v3427 = vsel %vm361, %v3419, %v3372
        %v3428 = vsel %vm361, %v3420, %v3374
        %v3429 = vsel %vm361, %v3421, %v3376
        %v3430 = vsel %vm361, %v3422, %v3378
        %v3431 = vsel %vm361, %v3423, %v3380
        %v3432 = vsel %vm361, %v3424, %v3382
        %v3433 = vsel %vm361, %v3425, %v3384
        %v3434 = vsel %vm361, %v3426, %v3386
        %v3435 = vsel %vm2517, %v3427, %v3396
        %v3436 = vsel %vm2517, %v3428, %v3398
        %v3437 = vsel %vm2517, %v3429, %v3400
        %v3438 = vsel %vm2517, %v3430, %v3402
        %v3439 = vsel %vm2517, %v3431, %v3404
        %v3440 = vsel %vm2517, %v3432, %v3406
        %v3441 = vsel %vm2517, %v3433, %v3408
        %v3442 = vsel %vm2517, %v3434, %v3410
        %v3443 = vsel %vm2500, %v2751, %v2372
        %v3444 = vsel %vm2500, %v2753, %v2373
        %v3445 = vsel %vm2500, %v2755, %v2374
        %v3446 = vsel %vm2500, %v2757, %v2375
        %v3447 = vsel %vm2500, %v2759, %v2376
        %v3448 = vsel %vm2500, %v2761, %v2377
        %v3449 = vsel %vm2500, %v2763, %v2378
        %v3450 = vsel %vm2500, %v2765, %v2379
        %v3451 = vsel %vm2500, %v2767, %v2380
        %v3452 = vsel %vm2500, %v2769, %v2381
        %v3453 = vsel %vm2500, %v2771, %v2382
        %v3454 = vsel %vm2500, %v2773, %v2383
        %v3455 = vsel %vm2500, %v2775, %v2384
        %v3456 = vsel %vm2500, %v2777, %v2385
        %v3457 = vsel %vm2500, %v2779, %v2386
        %v3458 = vsel %vm2500, %v2781, %v2387
        %v3459 = vsel %vm2500, %v2783, %v2388
        %v3460 = vsel %vm2500, %v2785, %v2389
        %v3461 = vsel %vm2500, %v2787, %v2390
        %v3462 = vsel %vm2500, %v2789, %v2391
        %v3463 = vsel %vm2500, %v2791, %v2392
        %v3464 = vsel %vm2500, %v2793, %v2393
        %v3465 = vsel %vm2500, %v2795, %v2394
        %v3466 = vsel %vm2500, %v2797, %v2395
        %v3467 = vsel %vm2500, %v2799, %v2396
        %v3468 = vsel %vm2500, %v2801, %v2397
        %v3469 = vsel %vm2500, %v2803, %v2398
        %v3470 = vsel %vm2500, %v2805, %v2399
        %v3471 = vsel %vm2500, %v2807, %v2400
        %v3472 = vsel %vm2500, %v2809, %v2401
        %v3473 = vsel %vm2500, %v2811, %v2402
        %v3474 = vsel %vm2500, %v2813, %v2403
        %v3475 = vsel %vm361, %v3443, %v2559
        %v3476 = vsel %vm361, %v3444, %v2561
        %v3477 = vsel %vm361, %v3445, %v2563
        %v3478 = vsel %vm361, %v3446, %v2565
        %v3479 = vsel %vm361, %v3447, %v2567
        %v3480 = vsel %vm361, %v3448, %v2569
        %v3481 = vsel %vm361, %v3449, %v2571
        %v3482 = vsel %vm361, %v3450, %v2573
        %v3483 = vsel %vm361, %v3451, %v2575
        %v3484 = vsel %vm361, %v3452, %v2577
        %v3485 = vsel %vm361, %v3453, %v2579
        %v3486 = vsel %vm361, %v3454, %v2581
        %v3487 = vsel %vm361, %v3455, %v2583
        %v3488 = vsel %vm361, %v3456, %v2585
        %v3489 = vsel %vm361, %v3457, %v2587
        %v3490 = vsel %vm361, %v3458, %v2589
        %v3491 = vsel %vm361, %v3459, %v2591
        %v3492 = vsel %vm361, %v3460, %v2593
        %v3493 = vsel %vm361, %v3461, %v2595
        %v3494 = vsel %vm361, %v3462, %v2597
        %v3495 = vsel %vm361, %v3463, %v2599
        %v3496 = vsel %vm361, %v3464, %v2601
        %v3497 = vsel %vm361, %v3465, %v2603
        %v3498 = vsel %vm361, %v3466, %v2605
        %v3499 = vsel %vm361, %v3467, %v2607
        %v3500 = vsel %vm361, %v3468, %v2609
        %v3501 = vsel %vm361, %v3469, %v2611
        %v3502 = vsel %vm361, %v3470, %v2613
        %v3503 = vsel %vm361, %v3471, %v2615
        %v3504 = vsel %vm361, %v3472, %v2617
        %v3505 = vsel %vm361, %v3473, %v2619
        %v3506 = vsel %vm361, %v3474, %v2621
        %v3507 = vsel %vm2517, %v3475, %v2655
        %v3508 = vsel %vm2517, %v3476, %v2657
        %v3509 = vsel %vm2517, %v3477, %v2659
        %v3510 = vsel %vm2517, %v3478, %v2661
        %v3511 = vsel %vm2517, %v3479, %v2663
        %v3512 = vsel %vm2517, %v3480, %v2665
        %v3513 = vsel %vm2517, %v3481, %v2667
        %v3514 = vsel %vm2517, %v3482, %v2669
        %v3515 = vsel %vm2517, %v3483, %v2671
        %v3516 = vsel %vm2517, %v3484, %v2673
        %v3517 = vsel %vm2517, %v3485, %v2675
        %v3518 = vsel %vm2517, %v3486, %v2677
        %v3519 = vsel %vm2517, %v3487, %v2679
        %v3520 = vsel %vm2517, %v3488, %v2681
        %v3521 = vsel %vm2517, %v3489, %v2683
        %v3522 = vsel %vm2517, %v3490, %v2685
        %v3523 = vsel %vm2517, %v3491, %v2687
        %v3524 = vsel %vm2517, %v3492, %v2689
        %v3525 = vsel %vm2517, %v3493, %v2691
        %v3526 = vsel %vm2517, %v3494, %v2693
        %v3527 = vsel %vm2517, %v3495, %v2695
        %v3528 = vsel %vm2517, %v3496, %v2697
        %v3529 = vsel %vm2517, %v3497, %v2699
        %v3530 = vsel %vm2517, %v3498, %v2701
        %v3531 = vsel %vm2517, %v3499, %v2703
        %v3532 = vsel %vm2517, %v3500, %v2705
        %v3533 = vsel %vm2517, %v3501, %v2707
        %v3534 = vsel %vm2517, %v3502, %v2709
        %v3535 = vsel %vm2517, %v3503, %v2711
        %v3536 = vsel %vm2517, %v3504, %v2713
        %v3537 = vsel %vm2517, %v3505, %v2715
        %v3538 = vsel %vm2517, %v3506, %v2717
        %v3539 = vmul.f32 %v3507, %v3435
        %v3540 = vmul.f32 %v3508, %v3436
        %v3541 = vmul.f32 %v3509, %v3437
        %v3542 = vmul.f32 %v3510, %v3438
        %v3543 = vmul.f32 %v3511, %v3439
        %v3544 = vmul.f32 %v3512, %v3440
        %v3545 = vmul.f32 %v3513, %v3441
        %v3546 = vmul.f32 %v3514, %v3442
        %v3547 = vmul.f32 %v3515, %v3435
        %v3548 = vmul.f32 %v3516, %v3436
        %v3549 = vmul.f32 %v3517, %v3437
        %v3550 = vmul.f32 %v3518, %v3438
        %v3551 = vmul.f32 %v3519, %v3439
        %v3552 = vmul.f32 %v3520, %v3440
        %v3553 = vmul.f32 %v3521, %v3441
        %v3554 = vmul.f32 %v3522, %v3442
        %v3555 = vmul.f32 %v3523, %v3435
        %v3556 = vmul.f32 %v3524, %v3436
        %v3557 = vmul.f32 %v3525, %v3437
        %v3558 = vmul.f32 %v3526, %v3438
        %v3559 = vmul.f32 %v3527, %v3439
        %v3560 = vmul.f32 %v3528, %v3440
        %v3561 = vmul.f32 %v3529, %v3441
        %v3562 = vmul.f32 %v3530, %v3442
        %v3563 = vmul.f32 %v3531, %v3435
        %v3564 = vmul.f32 %v3532, %v3436
        %v3565 = vmul.f32 %v3533, %v3437
        %v3566 = vmul.f32 %v3534, %v3438
        %v3567 = vmul.f32 %v3535, %v3439
        %v3568 = vmul.f32 %v3536, %v3440
        %v3569 = vmul.f32 %v3537, %v3441
        %v3570 = vmul.f32 %v3538, %v3442
        %v3571 = vpack.c.bf16 %v3540, %v3539
        %v3572 = vpack.c.bf16 %v3542, %v3541
        %v3573 = vpack.c.bf16 %v3544, %v3543
        %v3574 = vpack.c.bf16 %v3546, %v3545
        %v3575 = vpack.c.bf16 %v3548, %v3547
        %v3576 = vpack.c.bf16 %v3550, %v3549
        %v3577 = vpack.c.bf16 %v3552, %v3551
        %v3578 = vpack.c.bf16 %v3554, %v3553
        %v3579 = vpack.c.bf16 %v3556, %v3555
        %v3580 = vpack.c.bf16 %v3558, %v3557
        %v3581 = vpack.c.bf16 %v3560, %v3559
        %v3582 = vpack.c.bf16 %v3562, %v3561
        %v3583 = vpack.c.bf16 %v3564, %v3563
        %v3584 = vpack.c.bf16 %v3566, %v3565
        %v3585 = vpack.c.bf16 %v3568, %v3567
        %v3586 = vpack.c.bf16 %v3570, %v3569
        %v3587 = vpack.c.bf16 %v941, %v940
        %v3588 = vpack.c.bf16 %v943, %v942
        %v3589 = vpack.c.bf16 %v973, %v972
        %v3590 = vpack.c.bf16 %v975, %v974
        %v3591 = vpack.c.bf16 %v1037, %v1036
        %v3592 = vpack.c.bf16 %v1039, %v1038
        %v3593 = vpack.c.bf16 %v949, %v948
        %v3594 = vpack.c.bf16 %v951, %v950
        %v3595 = vpack.c.bf16 %v981, %v980
        %v3596 = vpack.c.bf16 %v983, %v982
        %v3597 = vpack.c.bf16 %v1045, %v1044
        %v3598 = vpack.c.bf16 %v1047, %v1046
        %v3599 = vpack.c.bf16 %v957, %v956
        %v3600 = vpack.c.bf16 %v959, %v958
        %v3601 = vpack.c.bf16 %v989, %v988
        %v3602 = vpack.c.bf16 %v991, %v990
        %v3603 = vpack.c.bf16 %v1053, %v1052
        %v3604 = vpack.c.bf16 %v1055, %v1054
        %v3605 = vpack.c.bf16 %v965, %v964
        %v3606 = vpack.c.bf16 %v967, %v966
        %v3607 = vpack.c.bf16 %v997, %v996
        %v3608 = vpack.c.bf16 %v999, %v998
        %v3609 = vpack.c.bf16 %v1061, %v1060
        %v3610 = vpack.c.bf16 %v1063, %v1062
        %3611 = vmatprep.subr.bf16.mxu0 0
        %3612 = vmatpush1.bf16.msra.mxu0 %v3592
        %3613 = vmatprep.subr.bf16.mxu0 0
        %3614 = vmatpush1.bf16.msra.mxu0 %v3591
        %3615 = vmatprep.subr.bf16.mxu0 0
        %3616 = vmatpush1.bf16.msra.mxu0 %v3590
        %3617 = vmatprep.subr.bf16.mxu0 0
        %3618 = vmatpush1.bf16.msra.mxu0 %v3589
        %3619 = vmatprep.subr.bf16.mxu0 0
        %3620 = vmatpush1.bf16.msra.mxu0 %v3588
        %3621 = vmatprep.subr.bf16.mxu0 0
        %3622 = vmatpush1.bf16.msra.mxu0 %v3587
        %3623 = vmatprep.subr.bf16.mxu0 0
        %3624 = vmatpush1.bf16.msra.mxu0 %v2990
        %3625 = vmatprep.subr.bf16.mxu0 0
        %3626 = vmatpush1.bf16.msra.mxu0 %v2990
        %3627 = vmatprep.subr.bf16.mxu0 0
        %3628 = vmatpush2.bf16.msra.mxu0 0
        %3629 = vmatprep.subr.bf16.mxu0 0
        %3630 = vmatpush2.bf16.msra.mxu0 0
        %3631 = vmatprep.subr.bf16.mxu0 0
        %3632 = vmatpush2.bf16.msra.mxu0 0
        %3633 = vmatprep.subr.bf16.mxu0 0
        %3634 = vmatpush2.bf16.msra.mxu0 0
        %3635 = vmatprep.subr.bf16.mxu0 0
        %3636 = vmatpush2.bf16.msra.mxu0 0
        %3637 = vmatprep.subr.bf16.mxu0 0
        %3638 = vmatpush2.bf16.msra.mxu0 0
        %3639 = vmatprep.subr.bf16.mxu0 0
        %3640 = vmatpush2.bf16.msra.mxu0 0
        %3641 = vmatprep.subr.bf16.mxu0 0
        %3642 = vmatpush2.bf16.msra.mxu0 0
        %3643 = vmatprep.mubr.bf16.mxu0 0
        %3644 = vmatmul.mubr.bf16.gmra.mxu0 %v3571
        %v3645 = vpop.f32.mrf.mxu0
        %v3646 = vadd.f32 0.0, %v3645
        %v3647 = vpop.f32.mrf.mxu0
        %v3648 = vpop.f32.mrf.mxu0
        %v3649 = vadd.f32 0.0, %v3648
        %v3650 = vpop.f32.mrf.mxu0
        %3651 = vmatprep.mubr.bf16.mxu0 0
        %3652 = vmatmul.mubr.bf16.gmra.mxu0 %v3572
        %v3653 = vpop.f32.mrf.mxu0
        %v3654 = vadd.f32 0.0, %v3653
        %v3655 = vpop.f32.mrf.mxu0
        %v3656 = vpop.f32.mrf.mxu0
        %v3657 = vadd.f32 0.0, %v3656
        %v3658 = vpop.f32.mrf.mxu0
        %3659 = vmatprep.mubr.bf16.mxu0 0
        %3660 = vmatmul.mubr.bf16.gmra.mxu0 %v3573
        %v3661 = vpop.f32.mrf.mxu0
        %v3662 = vadd.f32 0.0, %v3661
        %v3663 = vpop.f32.mrf.mxu0
        %v3664 = vpop.f32.mrf.mxu0
        %v3665 = vadd.f32 0.0, %v3664
        %v3666 = vpop.f32.mrf.mxu0
        %3667 = vmatprep.mubr.bf16.mxu0 0
        %3668 = vmatmul.mubr.bf16.gmra.mxu0 %v3574
        %v3669 = vpop.f32.mrf.mxu0
        %v3670 = vadd.f32 0.0, %v3669
        %v3671 = vpop.f32.mrf.mxu0
        %v3672 = vpop.f32.mrf.mxu0
        %v3673 = vadd.f32 0.0, %v3672
        %v3674 = vpop.f32.mrf.mxu0
        %3675 = vdwg.mxu0
        %3676 = vmatprep.subr.bf16.mxu0 0
        %3677 = vmatpush1.bf16.msra.mxu0 %v3598
        %3678 = vmatprep.subr.bf16.mxu0 0
        %3679 = vmatpush1.bf16.msra.mxu0 %v3597
        %3680 = vmatprep.subr.bf16.mxu0 0
        %3681 = vmatpush1.bf16.msra.mxu0 %v3596
        %3682 = vmatprep.subr.bf16.mxu0 0
        %3683 = vmatpush1.bf16.msra.mxu0 %v3595
        %3684 = vmatprep.subr.bf16.mxu0 0
        %3685 = vmatpush1.bf16.msra.mxu0 %v3594
        %3686 = vmatprep.subr.bf16.mxu0 0
        %3687 = vmatpush1.bf16.msra.mxu0 %v3593
        %3688 = vmatprep.subr.bf16.mxu0 0
        %3689 = vmatpush1.bf16.msra.mxu0 %v2990
        %3690 = vmatprep.subr.bf16.mxu0 0
        %3691 = vmatpush1.bf16.msra.mxu0 %v2990
        %3692 = vmatprep.subr.bf16.mxu0 0
        %3693 = vmatpush2.bf16.msra.mxu0 0
        %3694 = vmatprep.subr.bf16.mxu0 0
        %3695 = vmatpush2.bf16.msra.mxu0 0
        %3696 = vmatprep.subr.bf16.mxu0 0
        %3697 = vmatpush2.bf16.msra.mxu0 0
        %3698 = vmatprep.subr.bf16.mxu0 0
        %3699 = vmatpush2.bf16.msra.mxu0 0
        %3700 = vmatprep.subr.bf16.mxu0 0
        %3701 = vmatpush2.bf16.msra.mxu0 0
        %3702 = vmatprep.subr.bf16.mxu0 0
        %3703 = vmatpush2.bf16.msra.mxu0 0
        %3704 = vmatprep.subr.bf16.mxu0 0
        %3705 = vmatpush2.bf16.msra.mxu0 0
        %3706 = vmatprep.subr.bf16.mxu0 0
        %3707 = vmatpush2.bf16.msra.mxu0 0
        %3708 = vmatprep.mubr.bf16.mxu0 0
        %3709 = vmatmul.mubr.bf16.gmra.mxu0 %v3575
        %v3710 = vpop.f32.mrf.mxu0
        %v3711 = vadd.f32 0.0, %v3710
        %v3712 = vpop.f32.mrf.mxu0
        %v3713 = vpop.f32.mrf.mxu0
        %v3714 = vadd.f32 0.0, %v3713
        %v3715 = vpop.f32.mrf.mxu0
        %3716 = vmatprep.mubr.bf16.mxu0 0
        %3717 = vmatmul.mubr.bf16.gmra.mxu0 %v3576
        %v3718 = vpop.f32.mrf.mxu0
        %v3719 = vadd.f32 0.0, %v3718
        %v3720 = vpop.f32.mrf.mxu0
        %v3721 = vpop.f32.mrf.mxu0
        %v3722 = vadd.f32 0.0, %v3721
        %v3723 = vpop.f32.mrf.mxu0
        %3724 = vmatprep.mubr.bf16.mxu0 0
        %3725 = vmatmul.mubr.bf16.gmra.mxu0 %v3577
        %v3726 = vpop.f32.mrf.mxu0
        %v3727 = vadd.f32 0.0, %v3726
        %v3728 = vpop.f32.mrf.mxu0
        %v3729 = vpop.f32.mrf.mxu0
        %v3730 = vadd.f32 0.0, %v3729
        %v3731 = vpop.f32.mrf.mxu0
        %3732 = vmatprep.mubr.bf16.mxu0 0
        %3733 = vmatmul.mubr.bf16.gmra.mxu0 %v3578
        %v3734 = vpop.f32.mrf.mxu0
        %v3735 = vadd.f32 0.0, %v3734
        %v3736 = vpop.f32.mrf.mxu0
        %v3737 = vpop.f32.mrf.mxu0
        %v3738 = vadd.f32 0.0, %v3737
        %v3739 = vpop.f32.mrf.mxu0
        %3740 = vdwg.mxu0
        %3741 = vmatprep.subr.bf16.mxu0 0
        %3742 = vmatpush1.bf16.msra.mxu0 %v3604
        %3743 = vmatprep.subr.bf16.mxu0 0
        %3744 = vmatpush1.bf16.msra.mxu0 %v3603
        %3745 = vmatprep.subr.bf16.mxu0 0
        %3746 = vmatpush1.bf16.msra.mxu0 %v3602
        %3747 = vmatprep.subr.bf16.mxu0 0
        %3748 = vmatpush1.bf16.msra.mxu0 %v3601
        %3749 = vmatprep.subr.bf16.mxu0 0
        %3750 = vmatpush1.bf16.msra.mxu0 %v3600
        %3751 = vmatprep.subr.bf16.mxu0 0
        %3752 = vmatpush1.bf16.msra.mxu0 %v3599
        %3753 = vmatprep.subr.bf16.mxu0 0
        %3754 = vmatpush1.bf16.msra.mxu0 %v2990
        %3755 = vmatprep.subr.bf16.mxu0 0
        %3756 = vmatpush1.bf16.msra.mxu0 %v2990
        %3757 = vmatprep.subr.bf16.mxu0 0
        %3758 = vmatpush2.bf16.msra.mxu0 0
        %3759 = vmatprep.subr.bf16.mxu0 0
        %3760 = vmatpush2.bf16.msra.mxu0 0
        %3761 = vmatprep.subr.bf16.mxu0 0
        %3762 = vmatpush2.bf16.msra.mxu0 0
        %3763 = vmatprep.subr.bf16.mxu0 0
        %3764 = vmatpush2.bf16.msra.mxu0 0
        %3765 = vmatprep.subr.bf16.mxu0 0
        %3766 = vmatpush2.bf16.msra.mxu0 0
        %3767 = vmatprep.subr.bf16.mxu0 0
        %3768 = vmatpush2.bf16.msra.mxu0 0
        %3769 = vmatprep.subr.bf16.mxu0 0
        %3770 = vmatpush2.bf16.msra.mxu0 0
        %3771 = vmatprep.subr.bf16.mxu0 0
        %3772 = vmatpush2.bf16.msra.mxu0 0
        %3773 = vmatprep.mubr.bf16.mxu0 0
        %3774 = vmatmul.mubr.bf16.gmra.mxu0 %v3579
        %v3775 = vpop.f32.mrf.mxu0
        %v3776 = vadd.f32 0.0, %v3775
        %v3777 = vpop.f32.mrf.mxu0
        %v3778 = vpop.f32.mrf.mxu0
        %v3779 = vadd.f32 0.0, %v3778
        %v3780 = vpop.f32.mrf.mxu0
        %3781 = vmatprep.mubr.bf16.mxu0 0
        %3782 = vmatmul.mubr.bf16.gmra.mxu0 %v3580
        %v3783 = vpop.f32.mrf.mxu0
        %v3784 = vadd.f32 0.0, %v3783
        %v3785 = vpop.f32.mrf.mxu0
        %v3786 = vpop.f32.mrf.mxu0
        %v3787 = vadd.f32 0.0, %v3786
        %v3788 = vpop.f32.mrf.mxu0
        %3789 = vmatprep.mubr.bf16.mxu0 0
        %3790 = vmatmul.mubr.bf16.gmra.mxu0 %v3581
        %v3791 = vpop.f32.mrf.mxu0
        %v3792 = vadd.f32 0.0, %v3791
        %v3793 = vpop.f32.mrf.mxu0
        %v3794 = vpop.f32.mrf.mxu0
        %v3795 = vadd.f32 0.0, %v3794
        %v3796 = vpop.f32.mrf.mxu0
        %3797 = vmatprep.mubr.bf16.mxu0 0
        %3798 = vmatmul.mubr.bf16.gmra.mxu0 %v3582
        %v3799 = vpop.f32.mrf.mxu0
        %v3800 = vadd.f32 0.0, %v3799
        %v3801 = vpop.f32.mrf.mxu0
        %v3802 = vpop.f32.mrf.mxu0
        %v3803 = vadd.f32 0.0, %v3802
        %v3804 = vpop.f32.mrf.mxu0
        %3805 = vdwg.mxu0
        %3806 = vmatprep.subr.bf16.mxu0 0
        %3807 = vmatpush1.bf16.msra.mxu0 %v3610
        %3808 = vmatprep.subr.bf16.mxu0 0
        %3809 = vmatpush1.bf16.msra.mxu0 %v3609
        %3810 = vmatprep.subr.bf16.mxu0 0
        %3811 = vmatpush1.bf16.msra.mxu0 %v3608
        %3812 = vmatprep.subr.bf16.mxu0 0
        %3813 = vmatpush1.bf16.msra.mxu0 %v3607
        %3814 = vmatprep.subr.bf16.mxu0 0
        %3815 = vmatpush1.bf16.msra.mxu0 %v3606
        %3816 = vmatprep.subr.bf16.mxu0 0
        %3817 = vmatpush1.bf16.msra.mxu0 %v3605
        %3818 = vmatprep.subr.bf16.mxu0 0
        %3819 = vmatpush1.bf16.msra.mxu0 %v2990
        %3820 = vmatprep.subr.bf16.mxu0 0
        %3821 = vmatpush1.bf16.msra.mxu0 %v2990
        %3822 = vmatprep.subr.bf16.mxu0 0
        %3823 = vmatpush2.bf16.msra.mxu0 0
        %3824 = vmatprep.subr.bf16.mxu0 0
        %3825 = vmatpush2.bf16.msra.mxu0 0
        %3826 = vmatprep.subr.bf16.mxu0 0
        %3827 = vmatpush2.bf16.msra.mxu0 0
        %3828 = vmatprep.subr.bf16.mxu0 0
        %3829 = vmatpush2.bf16.msra.mxu0 0
        %3830 = vmatprep.subr.bf16.mxu0 0
        %3831 = vmatpush2.bf16.msra.mxu0 0
        %3832 = vmatprep.subr.bf16.mxu0 0
        %3833 = vmatpush2.bf16.msra.mxu0 0
        %3834 = vmatprep.subr.bf16.mxu0 0
        %3835 = vmatpush2.bf16.msra.mxu0 0
        %3836 = vmatprep.subr.bf16.mxu0 0
        %3837 = vmatpush2.bf16.msra.mxu0 0
        %3838 = vmatprep.mubr.bf16.mxu0 0
        %3839 = vmatmul.mubr.bf16.gmra.mxu0 %v3583
        %v3840 = vpop.f32.mrf.mxu0
        %v3841 = vadd.f32 0.0, %v3840
        %v3842 = vpop.f32.mrf.mxu0
        %v3843 = vpop.f32.mrf.mxu0
        %v3844 = vadd.f32 0.0, %v3843
        %v3845 = vpop.f32.mrf.mxu0
        %3846 = vmatprep.mubr.bf16.mxu0 0
        %3847 = vmatmul.mubr.bf16.gmra.mxu0 %v3584
        %v3848 = vpop.f32.mrf.mxu0
        %v3849 = vadd.f32 0.0, %v3848
        %v3850 = vpop.f32.mrf.mxu0
        %v3851 = vpop.f32.mrf.mxu0
        %v3852 = vadd.f32 0.0, %v3851
        %v3853 = vpop.f32.mrf.mxu0
        %3854 = vmatprep.mubr.bf16.mxu0 0
        %3855 = vmatmul.mubr.bf16.gmra.mxu0 %v3585
        %v3856 = vpop.f32.mrf.mxu0
        %v3857 = vadd.f32 0.0, %v3856
        %v3858 = vpop.f32.mrf.mxu0
        %v3859 = vpop.f32.mrf.mxu0
        %v3860 = vadd.f32 0.0, %v3859
        %v3861 = vpop.f32.mrf.mxu0
        %3862 = vmatprep.mubr.bf16.mxu0 0
        %3863 = vmatmul.mubr.bf16.gmra.mxu0 %v3586
        %v3864 = vpop.f32.mrf.mxu0
        %v3865 = vadd.f32 0.0, %v3864
        %v3866 = vpop.f32.mrf.mxu0
        %v3867 = vpop.f32.mrf.mxu0
        %v3868 = vadd.f32 0.0, %v3867
        %v3869 = vpop.f32.mrf.mxu0
        %3870 = vdwg.mxu0
        %v3871 = vmax.f32 %v3646, -1.0
        %v3872 = vmax.f32 %v3649, -1.0
        %v3873 = vmax.f32 %v3654, -1.0
        %v3874 = vmax.f32 %v3657, -1.0
        %v3875 = vmax.f32 %v3662, -1.0
        %v3876 = vmax.f32 %v3665, -1.0
        %v3877 = vmax.f32 %v3670, -1.0
        %v3878 = vmax.f32 %v3673, -1.0
        %v3879 = vmax.f32 %v3711, -1.0
        %v3880 = vmax.f32 %v3714, -1.0
        %v3881 = vmax.f32 %v3719, -1.0
        %v3882 = vmax.f32 %v3722, -1.0
        %v3883 = vmax.f32 %v3727, -1.0
        %v3884 = vmax.f32 %v3730, -1.0
        %v3885 = vmax.f32 %v3735, -1.0
        %v3886 = vmax.f32 %v3738, -1.0
        %v3887 = vmax.f32 %v3776, -1.0
        %v3888 = vmax.f32 %v3779, -1.0
        %v3889 = vmax.f32 %v3784, -1.0
        %v3890 = vmax.f32 %v3787, -1.0
        %v3891 = vmax.f32 %v3792, -1.0
        %v3892 = vmax.f32 %v3795, -1.0
        %v3893 = vmax.f32 %v3800, -1.0
        %v3894 = vmax.f32 %v3803, -1.0
        %v3895 = vmax.f32 %v3841, -1.0
        %v3896 = vmax.f32 %v3844, -1.0
        %v3897 = vmax.f32 %v3849, -1.0
        %v3898 = vmax.f32 %v3852, -1.0
        %v3899 = vmax.f32 %v3857, -1.0
        %v3900 = vmax.f32 %v3860, -1.0
        %v3901 = vmax.f32 %v3865, -1.0
        %v3902 = vmax.f32 %v3868, -1.0
        %v3903 = vmin.f32 %v3871, 1.0
        %v3904 = vmin.f32 %v3872, 1.0
        %v3905 = vmin.f32 %v3873, 1.0
        %v3906 = vmin.f32 %v3874, 1.0
        %v3907 = vmin.f32 %v3875, 1.0
        %v3908 = vmin.f32 %v3876, 1.0
        %v3909 = vmin.f32 %v3877, 1.0
        %v3910 = vmin.f32 %v3878, 1.0
        %v3911 = vmin.f32 %v3879, 1.0
        %v3912 = vmin.f32 %v3880, 1.0
        %v3913 = vmin.f32 %v3881, 1.0
        %v3914 = vmin.f32 %v3882, 1.0
        %v3915 = vmin.f32 %v3883, 1.0
        %v3916 = vmin.f32 %v3884, 1.0
        %v3917 = vmin.f32 %v3885, 1.0
        %v3918 = vmin.f32 %v3886, 1.0
        %v3919 = vmin.f32 %v3887, 1.0
        %v3920 = vmin.f32 %v3888, 1.0
        %v3921 = vmin.f32 %v3889, 1.0
        %v3922 = vmin.f32 %v3890, 1.0
        %v3923 = vmin.f32 %v3891, 1.0
        %v3924 = vmin.f32 %v3892, 1.0
        %v3925 = vmin.f32 %v3893, 1.0
        %v3926 = vmin.f32 %v3894, 1.0
        %v3927 = vmin.f32 %v3895, 1.0
        %v3928 = vmin.f32 %v3896, 1.0
        %v3929 = vmin.f32 %v3897, 1.0
        %v3930 = vmin.f32 %v3898, 1.0
        %v3931 = vmin.f32 %v3899, 1.0
        %v3932 = vmin.f32 %v3900, 1.0
        %v3933 = vmin.f32 %v3901, 1.0
        %v3934 = vmin.f32 %v3902, 1.0
        %v3935 = vadd.f32 %v3339, %v3903
        %v3936 = vadd.f32 %v3340, %v3904
        %v3937 = vadd.f32 %v3341, %v3905
        %v3938 = vadd.f32 %v3342, %v3906
        %v3939 = vadd.f32 %v3343, %v3907
        %v3940 = vadd.f32 %v3344, %v3908
        %v3941 = vadd.f32 %v3345, %v3909
        %v3942 = vadd.f32 %v3346, %v3910
        %v3943 = vadd.f32 %v3347, %v3911
        %v3944 = vadd.f32 %v3348, %v3912
        %v3945 = vadd.f32 %v3349, %v3913
        %v3946 = vadd.f32 %v3350, %v3914
        %v3947 = vadd.f32 %v3351, %v3915
        %v3948 = vadd.f32 %v3352, %v3916
        %v3949 = vadd.f32 %v3353, %v3917
        %v3950 = vadd.f32 %v3354, %v3918
        %v3951 = vadd.f32 %v3355, %v3919
        %v3952 = vadd.f32 %v3356, %v3920
        %v3953 = vadd.f32 %v3357, %v3921
        %v3954 = vadd.f32 %v3358, %v3922
        %v3955 = vadd.f32 %v3359, %v3923
        %v3956 = vadd.f32 %v3360, %v3924
        %v3957 = vadd.f32 %v3361, %v3925
        %v3958 = vadd.f32 %v3362, %v3926
        %v3959 = vadd.f32 %v3363, %v3927
        %v3960 = vadd.f32 %v3364, %v3928
        %v3961 = vadd.f32 %v3365, %v3929
        %v3962 = vadd.f32 %v3366, %v3930
        %v3963 = vadd.f32 %v3367, %v3931
        %v3964 = vadd.f32 %v3368, %v3932
        %v3965 = vadd.f32 %v3369, %v3933
        %v3966 = vadd.f32 %v3370, %v3934
        %3975 = vrot.lane.b32.xlu0 %v3943, 16
        %v3976 = vpop.permute.xlu0 %3975
        %3977 = vrot.lane.b32.xlu0 %v3944, 16
        %v3978 = vpop.permute.xlu0 %3977
        %3979 = vrot.lane.b32.xlu0 %v3945, 16
        %v3980 = vpop.permute.xlu0 %3979
        %3981 = vrot.lane.b32.xlu0 %v3946, 16
        %v3982 = vpop.permute.xlu0 %3981
        %3983 = vrot.lane.b32.xlu0 %v3947, 16
        %v3984 = vpop.permute.xlu0 %3983
        %3985 = vrot.lane.b32.xlu0 %v3948, 16
        %v3986 = vpop.permute.xlu0 %3985
        %3987 = vrot.lane.b32.xlu0 %v3949, 16
        %v3988 = vpop.permute.xlu0 %3987
        %3989 = vrot.lane.b32.xlu0 %v3950, 16
        %v3990 = vpop.permute.xlu0 %3989
        %4007 = vrot.lane.b32.xlu0 %v3951, 32
        %v4008 = vpop.permute.xlu0 %4007
        %4009 = vrot.lane.b32.xlu0 %v3952, 32
        %v4010 = vpop.permute.xlu0 %4009
        %4011 = vrot.lane.b32.xlu0 %v3953, 32
        %v4012 = vpop.permute.xlu0 %4011
        %4013 = vrot.lane.b32.xlu0 %v3954, 32
        %v4014 = vpop.permute.xlu0 %4013
        %4015 = vrot.lane.b32.xlu0 %v3955, 32
        %v4016 = vpop.permute.xlu0 %4015
        %4017 = vrot.lane.b32.xlu0 %v3956, 32
        %v4018 = vpop.permute.xlu0 %4017
        %4019 = vrot.lane.b32.xlu0 %v3957, 32
        %v4020 = vpop.permute.xlu0 %4019
        %4021 = vrot.lane.b32.xlu0 %v3958, 32
        %v4022 = vpop.permute.xlu0 %4021
        %4039 = vrot.lane.b32.xlu0 %v3959, 48
        %v4040 = vpop.permute.xlu0 %4039
        %4041 = vrot.lane.b32.xlu0 %v3960, 48
        %v4042 = vpop.permute.xlu0 %4041
        %4043 = vrot.lane.b32.xlu0 %v3961, 48
        %v4044 = vpop.permute.xlu0 %4043
        %4045 = vrot.lane.b32.xlu0 %v3962, 48
        %v4046 = vpop.permute.xlu0 %4045
        %4047 = vrot.lane.b32.xlu0 %v3963, 48
        %v4048 = vpop.permute.xlu0 %4047
        %4049 = vrot.lane.b32.xlu0 %v3964, 48
        %v4050 = vpop.permute.xlu0 %4049
        %4051 = vrot.lane.b32.xlu0 %v3965, 48
        %v4052 = vpop.permute.xlu0 %4051
        %4053 = vrot.lane.b32.xlu0 %v3966, 48
        %v4054 = vpop.permute.xlu0 %4053
        %v4063 = vsel %vm1436, %v3935, %v3976
        %v4064 = vsel %vm1436, %v3936, %v3978
        %v4065 = vsel %vm1436, %v3937, %v3980
        %v4066 = vsel %vm1436, %v3938, %v3982
        %v4067 = vsel %vm1436, %v3939, %v3984
        %v4068 = vsel %vm1436, %v3940, %v3986
        %v4069 = vsel %vm1436, %v3941, %v3988
        %v4070 = vsel %vm1436, %v3942, %v3990
        %v4071 = vsel %vm2500, %v4063, %v4008
        %v4072 = vsel %vm2500, %v4064, %v4010
        %v4073 = vsel %vm2500, %v4065, %v4012
        %v4074 = vsel %vm2500, %v4066, %v4014
        %v4075 = vsel %vm2500, %v4067, %v4016
        %v4076 = vsel %vm2500, %v4068, %v4018
        %v4077 = vsel %vm2500, %v4069, %v4020
        %v4078 = vsel %vm2500, %v4070, %v4022
        %vm4079 = vcmask 392192
        %v4080 = vsel %vm4079, %v4071, %v4040
        %v4081 = vsel %vm4079, %v4072, %v4042
        %v4082 = vsel %vm4079, %v4073, %v4044
        %v4083 = vsel %vm4079, %v4074, %v4046
        %v4084 = vsel %vm4079, %v4075, %v4048
        %v4085 = vsel %vm4079, %v4076, %v4050
        %v4086 = vsel %vm4079, %v4077, %v4052
        %v4087 = vsel %vm4079, %v4078, %v4054
        %v4088 = vlaneseq
        %v4089 = vshrl.u32 %v4088, 7
        %v4090 = vsub.s32 6, %v4089
        %v4091 = vrot.slane %v447, %v4090
        %v4092 = vmul.f32 %v4091, %v4080
        %v4093 = vmul.f32 %v4091, %v4081
        %v4094 = vmul.f32 %v4091, %v4082
        %v4095 = vmul.f32 %v4091, %v4083
        %v4096 = vmul.f32 %v4091, %v4084
        %v4097 = vmul.f32 %v4091, %v4085
        %v4098 = vmul.f32 %v4091, %v4086
        %v4099 = vmul.f32 %v4091, %v4087
        %v4100 = vlaneseq
        %v4101 = vshrl.u32 %v4100, 7
        %v4102 = vsub.s32 7, %v4101
        %v4103 = vrot.slane %v447, %v4102
        %v4104 = vadd.f32 %v4092, %v4103
        %v4105 = vadd.f32 %v4093, %v4103
        %v4106 = vadd.f32 %v4094, %v4103
        %v4107 = vadd.f32 %v4095, %v4103
        %v4108 = vadd.f32 %v4096, %v4103
        %v4109 = vadd.f32 %v4097, %v4103
        %v4110 = vadd.f32 %v4098, %v4103
        %v4111 = vadd.f32 %v4099, %v4103
        %v4112 = vpack.c.bf16 %v4105, %v4104
        %v4113 = vpack.c.bf16 %v4107, %v4106
        %v4114 = vpack.c.bf16 %v4109, %v4108
        %v4115 = vpack.c.bf16 %v4111, %v4110
        %v4116 = vld [vmem:[#allocation8] sm:$0xff]
        %v4117 = vld [vmem:[#allocation8 + $0x8] sm:$0xff]
        %v4118 = vld [vmem:[#allocation8 + $0x10] sm:$0xff]
        %v4119 = vld [vmem:[#allocation8 + $0x18] sm:$0xff]
        %v4120 = vld [vmem:[#allocation8 + $0x20] sm:$0xff]
        %v4121 = vld [vmem:[#allocation8 + $0x28] sm:$0xff]
        %v4122 = vld [vmem:[#allocation8 + $0x30] sm:$0xff]
        %v4123 = vld [vmem:[#allocation8 + $0x38] sm:$0xff]
        %v4124 = vpack.c.bf16 %v4117, %v4116
        %v4125 = vpack.c.bf16 %v4119, %v4118
        %v4126 = vpack.c.bf16 %v4121, %v4120
        %v4127 = vpack.c.bf16 %v4123, %v4122
        %v4128 = vld [vmem:[%s5] sm:$0x1]
        %v4130 = vlaneseq
        %v4131 = vshrl.u32 %v4130, 7
        %v4132 = vsub.s32 0, %v4131
        %v4133 = vrot.slane %v4128, %v4132
        %v4136 = vsel %vm361, %v4112, 0
        %v4139 = vsel %vm361, %v4113, 0
        %v4142 = vsel %vm361, %v4114, 0
        %v4145 = vsel %vm361, %v4115, 0
        %4147 = vmatprep.subr.bf16.mxu0 0
        %4148 = vmatpush1.bf16.msra.mxu0 0
        %4149 = vmatprep.subr.bf16.mxu0 0
        %4150 = vmatpush1.bf16.msra.mxu0 0
        %4151 = vmatprep.subr.bf16.mxu0 0
        %4152 = vmatpush1.bf16.msra.mxu0 0
        %4153 = vmatprep.subr.bf16.mxu0 0
        %4154 = vmatpush1.bf16.msra.mxu0 0
        %4155 = vmatprep.subr.bf16.mxu0 0
        %4156 = vmatpush1.bf16.msra.mxu0 %v4127
        %4157 = vmatprep.subr.bf16.mxu0 0
        %4158 = vmatpush1.bf16.msra.mxu0 %v4126
        %4159 = vmatprep.subr.bf16.mxu0 0
        %4160 = vmatpush1.bf16.msra.mxu0 %v4125
        %4161 = vmatprep.subr.bf16.mxu0 0
        %4162 = vmatpush1.bf16.msra.mxu0 %v4124
        %4163 = vmatprep.subr.bf16.mxu0 0
        %4164 = vmatpush2.bf16.msra.mxu0 0
        %4165 = vmatprep.subr.bf16.mxu0 0
        %4166 = vmatpush2.bf16.msra.mxu0 0
        %4167 = vmatprep.subr.bf16.mxu0 0
        %4168 = vmatpush2.bf16.msra.mxu0 0
        %4169 = vmatprep.subr.bf16.mxu0 0
        %4170 = vmatpush2.bf16.msra.mxu0 0
        %4171 = vmatprep.subr.bf16.mxu0 0
        %4172 = vmatpush2.bf16.msra.mxu0 0
        %4173 = vmatprep.subr.bf16.mxu0 0
        %4174 = vmatpush2.bf16.msra.mxu0 0
        %4175 = vmatprep.subr.bf16.mxu0 0
        %4176 = vmatpush2.bf16.msra.mxu0 0
        %4177 = vmatprep.subr.bf16.mxu0 0
        %4178 = vmatpush2.bf16.msra.mxu0 0
        %4179 = vmatprep.mubr.bf16.mxu0 0
        %4180 = vmatmul.mubr.bf16.gmra.mxu0 %v4136
        %v4181 = vpop.f32.mrf.mxu0
        %v4182 = vadd.f32 %v4133, %v4181
        %v4183 = vpop.f32.mrf.mxu0
        %v4184 = vpop.f32.mrf.mxu0
        %v4185 = vadd.f32 %v4133, %v4184
        %v4186 = vpop.f32.mrf.mxu0
        %4187 = vmatprep.mubr.bf16.mxu0 0
        %4188 = vmatmul.mubr.bf16.gmra.mxu0 %v4139
        %v4189 = vpop.f32.mrf.mxu0
        %v4190 = vadd.f32 %v4133, %v4189
        %v4191 = vpop.f32.mrf.mxu0
        %v4192 = vpop.f32.mrf.mxu0
        %v4193 = vadd.f32 %v4133, %v4192
        %v4194 = vpop.f32.mrf.mxu0
        %4195 = vmatprep.mubr.bf16.mxu0 0
        %4196 = vmatmul.mubr.bf16.gmra.mxu0 %v4142
        %v4197 = vpop.f32.mrf.mxu0
        %v4198 = vadd.f32 %v4133, %v4197
        %v4199 = vpop.f32.mrf.mxu0
        %v4200 = vpop.f32.mrf.mxu0
        %v4201 = vadd.f32 %v4133, %v4200
        %v4202 = vpop.f32.mrf.mxu0
        %4203 = vmatprep.mubr.bf16.mxu0 0
        %4204 = vmatmul.mubr.bf16.gmra.mxu0 %v4145
        %v4205 = vpop.f32.mrf.mxu0
        %v4206 = vadd.f32 %v4133, %v4205
        %v4207 = vpop.f32.mrf.mxu0
        %v4208 = vpop.f32.mrf.mxu0
        %v4209 = vadd.f32 %v4133, %v4208
        %v4210 = vpop.f32.mrf.mxu0
        %4211 = vdwg.mxu0
        %4212 = vst.msk [vmem:[%s311] sm:$0xff] %vm361, %v4182
        %4213 = vst.msk [vmem:[%s311 + $0x8] sm:$0xff] %vm361, %v4185
        %4214 = vst.msk [vmem:[%s311 + $0x10] sm:$0xff] %vm361, %v4190
        %4215 = vst.msk [vmem:[%s311 + $0x18] sm:$0xff] %vm361, %v4193
        %4216 = vst.msk [vmem:[%s311 + $0x20] sm:$0xff] %vm361, %v4198
        %4217 = vst.msk [vmem:[%s311 + $0x28] sm:$0xff] %vm361, %v4201
        %4218 = vst.msk [vmem:[%s311 + $0x30] sm:$0xff] %vm361, %v4206
        %4219 = vst.msk [vmem:[%s311 + $0x38] sm:$0xff] %vm361, %v4209
        %s4220 = sand.u32 %s164, 1
        %s4221 = scalar_lea.sflag [#allocation4], %s4220
        %s4222 = sand.u32 %s164, 1
        %s4223 = smul.addr %s4222, 64
        %s4224 = scalar_lea.vmem [#allocation10], %s4223
        // Predicated region
        $region61: #{tpu_custom_call.1} parent=43 // pred_check
          %p4225 = pneg %p174
        $region62: #{tpu_custom_call.1} parent=43 // pred_check_branch
          %4227 = sbr.rel (%p4225) target = $region64
        $region63: #{tpu_custom_call.1} parent=43 // pred_region
          %s4229 = ssub.s32 1024, 1024
          %4230 = vsyncadd %s4221, %s4229
          %s4231 = smul.addr %s25, 8
          %s4232 = smul.addr %s4231, 128
          %s4233 = scalar_lea.hbm %s6, %s4232
          %s4234 = sshll.u32 %s4224, 4
          %s4235 = int_to_ptr.vmem [resolvable:$true] %s4234
          %4240 = dma.vmem_to_hbm [thread:$0]  %s4235, 1024, %s4233, %s4221, 128, 128, 8
        $region64: #{tpu_custom_call.1} parent=43 // pred_fallthru
          _
      $region44: #{tpu_custom_call.1} parent=5 // pred_fallthru
        _
      %p4241 = scmp.le.s32.totalorder 2, %s20
      // Predicated region
      $region65: #{tpu_custom_call.1} parent=5 // pred_check
        %p4242 = pneg %p4241
      $region66: #{tpu_custom_call.1} parent=5 // pred_check_branch
        %4244 = sbr.rel (%p4242) target = $region68
      $region67: #{tpu_custom_call.1} parent=5 // pred_region
        %s4245 = ssub.s32 %s20, 2
        // Predicated region
        $region69: #{tpu_custom_call.1} parent=67 // pred_check
          %p4246 = pneg %p180
        $region70: #{tpu_custom_call.1} parent=67 // pred_check_branch
          %4248 = sbr.rel (%p4246) target = $region72
        $region71: #{tpu_custom_call.1} parent=67 // pred_region
          %s4249 = sand.u32 %s165, 1
          %s4250 = scalar_lea.sflag [#allocation4], %s4249
          %s4251 = sand.u32 %s165, 1
          %s4252 = smul.addr %s4251, 64
          %s4253 = scalar_lea.vmem [#allocation10], %s4252
          %4254 = dma.done %s4250, 1024
        $region72: #{tpu_custom_call.1} parent=67 // pred_fallthru
          _
      $region68: #{tpu_custom_call.1} parent=5 // pred_fallthru
        _
    $region6: #{tpu_custom_call.1} parent=1 // loop_footer
      %s24 = sadd.s32 1, %s20
    $region7: #{tpu_custom_call.1} parent=1 // loop_footer_branch
      %19 = sbr.rel target = $region3
    $region8: #{tpu_custom_call.1} parent=1 // loop_exit
      _
    %4255 = vsyncpa [#allocation3], 1
    %s4256 = scalar_lea.sflag [#allocation3], 1
    %4257 = vsyncpa %s4256, 1
    %4258 = vsyncpa [#allocation6], 1
    %4259 = vsyncpa [#allocation9], 1
    %4260 = vsyncpa [#allocation4], 1
    %s4261 = scalar_lea.sflag [#allocation4], 1
    %4262 = vsyncpa %s4261, 1

</llo_original>
